<compile_context>
chip_gen: v7x
topology: tpu7x:2x2x1
jax: 0.10.0
libtpu: 0.0.40
codegen_flags: <defaults>
</compile_context>

<pallas_src>
import functools
import numpy as np
import jax
import jax.numpy as jnp
from jax import lax
from jax.experimental import pallas as pl
from jax.experimental.pallas import tpu as pltpu

EPS = 1e-5
LANE = 128
SUBLANE = 8

_HAS_BUFFERED = hasattr(pl, "Buffered")


# ----------------------------------------------------------------------------
# helpers
# ----------------------------------------------------------------------------
def _cdiv(a, b):
    return -(-a // b)


def _round_up(x, m):
    return (x + m - 1) // m * m


def _device_kind():
    try:
        return jax.devices()[0].device_kind.lower()
    except Exception:
        return ""


def _vmem_limit_bytes():
    """~80% of per-core physical VMEM (leaves headroom for compiler scratch)."""
    cap = None
    try:
        cap = getattr(pltpu.get_tpu_info(), "vmem_capacity_bytes", None)
    except Exception:
        cap = None
    if not cap:
        cap = 64 * 2**20 if "v7" in _device_kind() else 128 * 2**20
    return max(32 * 2**20, int(cap * 0.8))


@functools.lru_cache(maxsize=None)
def _compiler_params():
    return pltpu.CompilerParams(
        dimension_semantics=("parallel",),          # megacore-split the batch grid
        vmem_limit_bytes=_vmem_limit_bytes(),       # generation-appropriate budget
    )


def _pick_tm(batch, requested=None):
    cap = _round_up(max(batch, SUBLANE), SUBLANE)
    if requested is not None:
        return int(min(requested, cap))
    if "v7" in _device_kind():
        # two TensorCores share the grid: aim for >=4 steps (>=2 per core)
        tm = min(256, max(LANE, _round_up(_cdiv(cap, 4), LANE)))
    else:
        # single TensorCore: larger tiles amortize the ~0.35us/step overhead,
        # but keep a few steps so x/out DMA overlaps compute
        tm = min(512, max(LANE, _round_up(_cdiv(cap, 3), LANE)))
    return int(min(tm, cap))


def _mm(a, w):
    # Feed the MXU in the weight dtype (bf16 by default -> native MXU path on
    # every generation, half the weight DMA/VMEM); accumulate in f32.
    return jnp.dot(a.astype(w.dtype), w, preferred_element_type=jnp.float32)


def _pad_cols(a, cols):
    pad = cols - a.shape[-1]
    if pad == 0:
        return a
    return jnp.pad(a, [(0, 0)] * (a.ndim - 1) + [(0, pad)])


def _pad_mat(w, rows, cols):
    pr, pc = rows - w.shape[-2], cols - w.shape[-1]
    if pr == 0 and pc == 0:
        return w
    return jnp.pad(w, [(0, 0)] * (w.ndim - 2) + [(0, pr), (0, pc)])


def _const_spec(a, single_buffer):
    # Full-array block, constant block index -> fetched once, resident in VMEM
    # across all batch-grid steps.  single_buffer drops the (useless) second
    # pipeline buffer for these constant-index inputs.
    zeros = (0,) * a.ndim
    if single_buffer:
        return pl.BlockSpec(a.shape, lambda i: zeros, pipeline_mode=pl.Buffered(1))
    return pl.BlockSpec(a.shape, lambda i: zeros)


def _encoder_call(kernel, out_shape, grid, x_spec, out_spec, x, weights):
    # Try single-buffered resident weights first; fall back to default
    # double-buffered specs if this jax/Mosaic version rejects Buffered(1).
    modes = (True, False) if _HAS_BUFFERED else (False,)
    last_err = None
    for single_buffer in modes:
        try:
            return pl.pallas_call(
                kernel,
                out_shape=out_shape,
                grid=grid,
                in_specs=[x_spec] + [_const_spec(a, single_buffer) for a in weights],
                out_specs=out_spec,
                compiler_params=_compiler_params(),
            )(x, *weights)
        except Exception as e:                      # pragma: no cover
            last_err = e
            if not single_buffer:
                raise
    raise last_err


# ----------------------------------------------------------------------------
# residual encoder kernel:
#   h = x @ Wfc + bfc
#   for each block: h = h + ReLU(LN(h) @ W1 + b1) @ W2 + b2
#   out = LN(h)
# ----------------------------------------------------------------------------
def residual_encoder_kernel(num_blocks, inv_h,
                            x_ref, fcw_ref, fcb_ref,
                            lng_ref, lnb_ref, w1_ref, b1_ref, w2_ref, b2_ref,
                            fng_ref, fnb_ref, out_ref):
    def layernorm(h, gamma, beta):
        # Padded hidden columns of h are exactly zero (weights/biases are
        # zero-padded), so plain sums over the lane-dense width equal sums over
        # the true hidden width; dividing by the true width (inv_h) reproduces
        # torch LayerNorm.  E[h^2]-mu^2 avoids any per-call lane mask; padded
        # output columns stay zero because gamma/beta are zero-padded.
        mu = jnp.sum(h, axis=-1, keepdims=True) * inv_h
        var = jnp.sum(h * h, axis=-1, keepdims=True) * inv_h - mu * mu
        var = jnp.maximum(var, 0.0)
        return (h - mu) * lax.rsqrt(var + EPS) * gamma + beta

    h = _mm(x_ref[...], fcw_ref[...]) + fcb_ref[...]

    def block(h, i):
        xn = layernorm(h, lng_ref[i], lnb_ref[i])
        z = jnp.maximum(_mm(xn, w1_ref[i]) + b1_ref[i], 0.0)
        return h + _mm(z, w2_ref[i]) + b2_ref[i]

    if num_blocks <= 4:
        # short trip count: static unroll keeps LLO scheduling visibility
        for i in range(num_blocks):
            h = block(h, i)
    else:
        # larger trip counts: real loop bounds vreg live ranges (avoids spills)
        h = lax.fori_loop(0, num_blocks, lambda i, hh: block(hh, i), h)

    out_ref[...] = layernorm(h, fng_ref[...], fnb_ref[...]).astype(out_ref.dtype)


# ----------------------------------------------------------------------------
# mlp encoder kernel:  out = ReLU( ReLU(x @ W1 + b1) @ W2 + b2 )
# ----------------------------------------------------------------------------
def mlp_encoder_kernel(x_ref, w1_ref, b1_ref, w2_ref, b2_ref, out_ref):
    z = jnp.maximum(_mm(x_ref[...], w1_ref[...]) + b1_ref[...], 0.0)
    y = jnp.maximum(_mm(z, w2_ref[...]) + b2_ref[...], 0.0)
    out_ref[...] = y.astype(out_ref.dtype)


# ----------------------------------------------------------------------------
# wrappers
# ----------------------------------------------------------------------------
def sac_encoder_residual(x, params, num_blocks, *,
                         weight_dtype=jnp.bfloat16, out_dtype=jnp.float32,
                         tm=None):
    batch, in_dim = x.shape
    hidden = params["fcw"].shape[1]
    ff = params["w1"].shape[-1]
    h_pad = _round_up(hidden, LANE)
    ff_pad = _round_up(ff, LANE)

    tm = _pick_tm(batch, tm)
    grid = (_cdiv(batch, tm),)

    # Zero-pad hidden/ff weight dims to lane multiples (padded columns of the
    # residual stream then stay exactly zero).  Neither the batch nor the
    # input-feature dim of x is padded.
    fcw = _pad_mat(params["fcw"], in_dim, h_pad).astype(weight_dtype)
    fcb = _pad_cols(params["fcb"], h_pad)
    lng = _pad_cols(params["lng"], h_pad)
    lnb = _pad_cols(params["lnb"], h_pad)
    w1 = _pad_mat(params["w1"], h_pad, ff_pad).astype(weight_dtype)
    b1 = _pad_cols(params["b1"], ff_pad)
    w2 = _pad_mat(params["w2"], ff_pad, h_pad).astype(weight_dtype)
    b2 = _pad_cols(params["b2"], h_pad)
    fng = _pad_cols(params["fng"], h_pad)
    fnb = _pad_cols(params["fnb"], h_pad)
    weights = (fcw, fcb, lng, lnb, w1, b1, w2, b2, fng, fnb)

    out = _encoder_call(
        functools.partial(residual_encoder_kernel, num_blocks, 1.0 / hidden),
        jax.ShapeDtypeStruct((batch, h_pad), out_dtype),
        grid,
        pl.BlockSpec((tm, in_dim), lambda i: (i, 0)),   # full feature extent
        pl.BlockSpec((tm, h_pad), lambda i: (i, 0)),    # lane-dense output
        x, weights)
    return out if h_pad == hidden else out[:, :hidden]


def sac_encoder_mlp(x, params, *,
                    weight_dtype=jnp.bfloat16, out_dtype=jnp.float32, tm=None):
    batch, hidden = x.shape
    ff = params["w1"].shape[-1]
    h_pad = _round_up(hidden, LANE)
    ff_pad = _round_up(ff, LANE)

    tm = _pick_tm(batch, tm)
    grid = (_cdiv(batch, tm),)

    w1 = _pad_mat(params["w1"], hidden, ff_pad).astype(weight_dtype)
    b1 = _pad_cols(params["b1"], ff_pad)
    w2 = _pad_mat(params["w2"], ff_pad, h_pad).astype(weight_dtype)
    b2 = _pad_cols(params["b2"], h_pad)
    weights = (w1, b1, w2, b2)

    out = _encoder_call(
        mlp_encoder_kernel,
        jax.ShapeDtypeStruct((batch, h_pad), out_dtype),
        grid,
        pl.BlockSpec((tm, hidden), lambda i: (i, 0)),
        pl.BlockSpec((tm, h_pad), lambda i: (i, 0)),
        x, weights)
    return out if h_pad == hidden else out[:, :hidden]


# ----------------------------------------------------------------------------
# pure-JAX reference (mirrors the PyTorch forward)
# ----------------------------------------------------------------------------
def _layernorm_ref(x, gamma, beta):
    mu = jnp.mean(x, axis=-1, keepdims=True)
    var = jnp.mean((x - mu) ** 2, axis=-1, keepdims=True)
    return (x - mu) * lax.rsqrt(var + EPS) * gamma + beta


def residual_ref(x, p, num_blocks):
    h = x @ p["fcw"] + p["fcb"]
    for i in range(num_blocks):
        xn = _layernorm_ref(h, p["lng"][i], p["lnb"][i])
        z = jnp.maximum(xn @ p["w1"][i] + p["b1"][i], 0.0)
        h = h + z @ p["w2"][i] + p["b2"][i]
    return _layernorm_ref(h, p["fng"], p["fnb"])


def mlp_ref(x, p):
    z = jnp.maximum(x @ p["w1"] + p["b1"], 0.0)
    return jnp.maximum(z @ p["w2"] + p["b2"], 0.0)


if __name__ == "__main__":
    key = jax.random.PRNGKey(0)
    k = iter(jax.random.split(key, 32))

    # -------------------- residual branch --------------------
    # batch=200 with tm=64 exercises a multi-step pipelined batch grid
    # (grid=(4,)) with a partial last tile; real deployments use the
    # generation-chosen default tile.
    batch, input_dim, hidden_dim, num_blocks = 200, 16, 32, 2
    p_res = {
        "fcw": jax.random.normal(next(k), (input_dim, hidden_dim), jnp.float32) * 0.2,
        "fcb": jnp.zeros((1, hidden_dim), jnp.float32),
        "lng": jnp.ones((num_blocks, 1, hidden_dim), jnp.float32),
        "lnb": jnp.zeros((num_blocks, 1, hidden_dim), jnp.float32),
        "w1": jax.random.normal(next(k), (num_blocks, hidden_dim, 4 * hidden_dim),
                                jnp.float32) * np.sqrt(2.0 / hidden_dim),
        "b1": jax.random.normal(next(k), (num_blocks, 1, 4 * hidden_dim),
                                jnp.float32) * 0.05,
        "w2": jax.random.normal(next(k), (num_blocks, 4 * hidden_dim, hidden_dim),
                                jnp.float32) * np.sqrt(2.0 / (4 * hidden_dim)),
        "b2": jax.random.normal(next(k), (num_blocks, 1, hidden_dim),
                                jnp.float32) * 0.05,
        "fng": jnp.ones((1, hidden_dim), jnp.float32),
        "fnb": jnp.zeros((1, hidden_dim), jnp.float32),
    }
    x_res = jax.random.normal(next(k), (batch, input_dim), jnp.float32)
    ref_res = residual_ref(x_res, p_res, num_blocks)

    # exact-math path (f32 weights): tight tolerance
    out_f32 = jax.block_until_ready(
        sac_encoder_residual(x_res, p_res, num_blocks, tm=64,
                             weight_dtype=jnp.float32))
    np.testing.assert_allclose(np.asarray(out_f32), np.asarray(ref_res),
                               rtol=1e-4, atol=1e-4)

    # default path (bf16 MXU inputs, f32 accumulate/LN): relaxed tolerance
    out_def = jax.block_until_ready(
        sac_encoder_residual(x_res, p_res, num_blocks, tm=64))
    np.testing.assert_allclose(np.asarray(out_def), np.asarray(ref_res),
                               rtol=1e-1, atol=1e-1)

    # default-tile path (generation-chosen tm, partial last tile)
    out_auto = jax.block_until_ready(
        sac_encoder_residual(x_res, p_res, num_blocks, weight_dtype=jnp.float32))
    np.testing.assert_allclose(np.asarray(out_auto), np.asarray(ref_res),
                               rtol=1e-4, atol=1e-4)

    # -------------------- mlp branch --------------------
    batch_m = 8
    p_mlp = {
        "w1": jax.random.normal(next(k), (hidden_dim, 4 * hidden_dim), jnp.float32) * 0.1,
        "b1": jax.random.normal(next(k), (1, 4 * hidden_dim), jnp.float32) * 0.05,
        "w2": jax.random.normal(next(k), (4 * hidden_dim, hidden_dim), jnp.float32) * 0.1,
        "b2": jax.random.normal(next(k), (1, hidden_dim), jnp.float32) * 0.05,
    }
    x_mlp = jax.random.normal(next(k), (batch_m, hidden_dim), jnp.float32)
    ref_mlp = mlp_ref(x_mlp, p_mlp)

    out_mlp_f32 = jax.block_until_ready(
        sac_encoder_mlp(x_mlp, p_mlp, weight_dtype=jnp.float32))
    np.testing.assert_allclose(np.asarray(out_mlp_f32), np.asarray(ref_mlp),
                               rtol=1e-4, atol=1e-4)

    out_mlp_def = jax.block_until_ready(sac_encoder_mlp(x_mlp, p_mlp))
    np.testing.assert_allclose(np.asarray(out_mlp_def), np.asarray(ref_mlp),
                               rtol=1e-1, atol=1e-1)

    print("KERNEL_OK")
</pallas_src>

<mosaic_0001>
module attributes {stable_mosaic.version = 11 : i64} {
  func.func @residual_encoder_kernel(%arg0: i32, %arg1: memref<64x16xf32, #tpu.memory_space<vmem>>, %arg2: memref<16x128xf32, #tpu.memory_space<vmem>>, %arg3: memref<1x128xf32, #tpu.memory_space<vmem>>, %arg4: memref<2x1x128xf32, #tpu.memory_space<vmem>>, %arg5: memref<2x1x128xf32, #tpu.memory_space<vmem>>, %arg6: memref<2x128x128xf32, #tpu.memory_space<vmem>>, %arg7: memref<2x1x128xf32, #tpu.memory_space<vmem>>, %arg8: memref<2x128x128xf32, #tpu.memory_space<vmem>>, %arg9: memref<2x1x128xf32, #tpu.memory_space<vmem>>, %arg10: memref<1x128xf32, #tpu.memory_space<vmem>>, %arg11: memref<1x128xf32, #tpu.memory_space<vmem>>, %arg12: memref<64x128xf32, #tpu.memory_space<vmem>>) attributes {dimension_semantics = [#tpu.dimension_semantics<parallel>], iteration_bounds = array<i64: 4>, scalar_prefetch = 0 : i64, scratch_operands = 0 : i64, tpu.core_type = #tpu.core_type<tc>, window_params = [{transform_indices = @transform_0, window_bounds = array<i64: 64, 16>}, {pipeline_mode = #tpu.pipeline_mode<synchronous>, transform_indices = @transform_1, window_bounds = array<i64: 16, 128>}, {pipeline_mode = #tpu.pipeline_mode<synchronous>, transform_indices = @transform_2, window_bounds = array<i64: 1, 128>}, {pipeline_mode = #tpu.pipeline_mode<synchronous>, transform_indices = @transform_3, window_bounds = array<i64: 2, 1, 128>}, {pipeline_mode = #tpu.pipeline_mode<synchronous>, transform_indices = @transform_4, window_bounds = array<i64: 2, 1, 128>}, {pipeline_mode = #tpu.pipeline_mode<synchronous>, transform_indices = @transform_5, window_bounds = array<i64: 2, 128, 128>}, {pipeline_mode = #tpu.pipeline_mode<synchronous>, transform_indices = @transform_6, window_bounds = array<i64: 2, 1, 128>}, {pipeline_mode = #tpu.pipeline_mode<synchronous>, transform_indices = @transform_7, window_bounds = array<i64: 2, 128, 128>}, {pipeline_mode = #tpu.pipeline_mode<synchronous>, transform_indices = @transform_8, window_bounds = array<i64: 2, 1, 128>}, {pipeline_mode = #tpu.pipeline_mode<synchronous>, transform_indices = @transform_9, window_bounds = array<i64: 1, 128>}, {pipeline_mode = #tpu.pipeline_mode<synchronous>, transform_indices = @transform_10, window_bounds = array<i64: 1, 128>}, {transform_indices = @transform_11, window_bounds = array<i64: 64, 128>}]} {
    %c0 = arith.constant 0 : index
    %c0_0 = arith.constant 0 : index
    %0 = vector.load %arg1[%c0, %c0_0] : memref<64x16xf32, #tpu.memory_space<vmem>>, vector<64x16xf32>
    %c0_1 = arith.constant 0 : index
    %c0_2 = arith.constant 0 : index
    %1 = vector.load %arg2[%c0_1, %c0_2] : memref<16x128xf32, #tpu.memory_space<vmem>>, vector<16x128xf32>
    %cst = arith.constant dense<0.000000e+00> : vector<64x128xf32>
    %2 = tpu.matmul %0, %1, %cst {dimension_numbers = #tpu.dot_dimension_numbers<[1], [0], [0], [1], [0, 0, 1, 1], [], []>} : vector<64x16xf32>, vector<16x128xf32>, vector<64x128xf32> -> vector<64x128xf32>
    %c0_3 = arith.constant 0 : index
    %c0_4 = arith.constant 0 : index
    %3 = vector.load %arg3[%c0_3, %c0_4] : memref<1x128xf32, #tpu.memory_space<vmem>>, vector<1x128xf32>
    %4 = vector.broadcast %3 : vector<1x128xf32> to vector<64x128xf32>
    %5 = arith.addf %2, %4 : vector<64x128xf32>
    %c0_5 = arith.constant 0 : index
    %c0_6 = arith.constant 0 : index
    %c0_7 = arith.constant 0 : index
    %6 = vector.load %arg4[%c0_5, %c0_6, %c0_7] : memref<2x1x128xf32, #tpu.memory_space<vmem>>, vector<1x1x128xf32>
    %7 = vector.shape_cast %6 : vector<1x1x128xf32> to vector<1x128xf32>
    %c0_8 = arith.constant 0 : index
    %c0_9 = arith.constant 0 : index
    %c0_10 = arith.constant 0 : index
    %8 = vector.load %arg5[%c0_8, %c0_9, %c0_10] : memref<2x1x128xf32, #tpu.memory_space<vmem>>, vector<1x1x128xf32>
    %9 = vector.shape_cast %8 : vector<1x1x128xf32> to vector<1x128xf32>
    %cst_11 = arith.constant dense<0.000000e+00> : vector<64xf32>
    %10 = vector.multi_reduction <add>, %5, %cst_11 [1] : vector<64x128xf32> to vector<64xf32>
    %11 = vector.shape_cast %10 : vector<64xf32> to vector<64x1xf32>
    %cst_12 = arith.constant 3.125000e-02 : f32
    %12 = vector.broadcast %cst_12 : f32 to vector<64x1xf32>
    %13 = arith.mulf %11, %12 : vector<64x1xf32>
    %14 = arith.mulf %5, %5 : vector<64x128xf32>
    %cst_13 = arith.constant dense<0.000000e+00> : vector<64xf32>
    %15 = vector.multi_reduction <add>, %14, %cst_13 [1] : vector<64x128xf32> to vector<64xf32>
    %16 = vector.shape_cast %15 : vector<64xf32> to vector<64x1xf32>
    %cst_14 = arith.constant 3.125000e-02 : f32
    %17 = vector.broadcast %cst_14 : f32 to vector<64x1xf32>
    %18 = arith.mulf %16, %17 : vector<64x1xf32>
    %19 = arith.mulf %13, %13 : vector<64x1xf32>
    %20 = arith.subf %18, %19 : vector<64x1xf32>
    %cst_15 = arith.constant 0.000000e+00 : f32
    %21 = vector.broadcast %cst_15 : f32 to vector<64x1xf32>
    %22 = arith.maximumf %20, %21 : vector<64x1xf32>
    %23 = vector.broadcast %13 : vector<64x1xf32> to vector<64x128xf32>
    %24 = arith.subf %5, %23 : vector<64x128xf32>
    %cst_16 = arith.constant 9.99999974E-6 : f32
    %25 = vector.broadcast %cst_16 : f32 to vector<64x1xf32>
    %26 = arith.addf %22, %25 : vector<64x1xf32>
    %27 = math.rsqrt %26 : vector<64x1xf32>
    %28 = vector.broadcast %27 : vector<64x1xf32> to vector<64x128xf32>
    %29 = arith.mulf %24, %28 : vector<64x128xf32>
    %30 = vector.broadcast %7 : vector<1x128xf32> to vector<64x128xf32>
    %31 = arith.mulf %29, %30 : vector<64x128xf32>
    %32 = vector.broadcast %9 : vector<1x128xf32> to vector<64x128xf32>
    %33 = arith.addf %31, %32 : vector<64x128xf32>
    %c0_17 = arith.constant 0 : index
    %c0_18 = arith.constant 0 : index
    %c0_19 = arith.constant 0 : index
    %34 = vector.load %arg6[%c0_17, %c0_18, %c0_19] : memref<2x128x128xf32, #tpu.memory_space<vmem>>, vector<1x128x128xf32>
    %35 = vector.shape_cast %34 : vector<1x128x128xf32> to vector<128x128xf32>
    %cst_20 = arith.constant dense<0.000000e+00> : vector<64x128xf32>
    %36 = tpu.matmul %33, %35, %cst_20 {dimension_numbers = #tpu.dot_dimension_numbers<[1], [0], [0], [1], [0, 0, 1, 1], [], []>} : vector<64x128xf32>, vector<128x128xf32>, vector<64x128xf32> -> vector<64x128xf32>
    %c0_21 = arith.constant 0 : index
    %c0_22 = arith.constant 0 : index
    %c0_23 = arith.constant 0 : index
    %37 = vector.load %arg7[%c0_21, %c0_22, %c0_23] : memref<2x1x128xf32, #tpu.memory_space<vmem>>, vector<1x1x128xf32>
    %38 = vector.shape_cast %37 : vector<1x1x128xf32> to vector<1x128xf32>
    %39 = vector.broadcast %38 : vector<1x128xf32> to vector<64x128xf32>
    %40 = arith.addf %36, %39 : vector<64x128xf32>
    %cst_24 = arith.constant 0.000000e+00 : f32
    %41 = vector.broadcast %cst_24 : f32 to vector<64x128xf32>
    %42 = arith.maximumf %40, %41 : vector<64x128xf32>
    %c0_25 = arith.constant 0 : index
    %c0_26 = arith.constant 0 : index
    %c0_27 = arith.constant 0 : index
    %43 = vector.load %arg8[%c0_25, %c0_26, %c0_27] : memref<2x128x128xf32, #tpu.memory_space<vmem>>, vector<1x128x128xf32>
    %44 = vector.shape_cast %43 : vector<1x128x128xf32> to vector<128x128xf32>
    %cst_28 = arith.constant dense<0.000000e+00> : vector<64x128xf32>
    %45 = tpu.matmul %42, %44, %cst_28 {dimension_numbers = #tpu.dot_dimension_numbers<[1], [0], [0], [1], [0, 0, 1, 1], [], []>} : vector<64x128xf32>, vector<128x128xf32>, vector<64x128xf32> -> vector<64x128xf32>
    %46 = arith.addf %5, %45 : vector<64x128xf32>
    %c0_29 = arith.constant 0 : index
    %c0_30 = arith.constant 0 : index
    %c0_31 = arith.constant 0 : index
    %47 = vector.load %arg9[%c0_29, %c0_30, %c0_31] : memref<2x1x128xf32, #tpu.memory_space<vmem>>, vector<1x1x128xf32>
    %48 = vector.shape_cast %47 : vector<1x1x128xf32> to vector<1x128xf32>
    %49 = vector.broadcast %48 : vector<1x128xf32> to vector<64x128xf32>
    %50 = arith.addf %46, %49 : vector<64x128xf32>
    %c1 = arith.constant 1 : index
    %c0_32 = arith.constant 0 : index
    %c0_33 = arith.constant 0 : index
    %51 = vector.load %arg4[%c1, %c0_32, %c0_33] : memref<2x1x128xf32, #tpu.memory_space<vmem>>, vector<1x1x128xf32>
    %52 = vector.shape_cast %51 : vector<1x1x128xf32> to vector<1x128xf32>
    %c1_34 = arith.constant 1 : index
    %c0_35 = arith.constant 0 : index
    %c0_36 = arith.constant 0 : index
    %53 = vector.load %arg5[%c1_34, %c0_35, %c0_36] : memref<2x1x128xf32, #tpu.memory_space<vmem>>, vector<1x1x128xf32>
    %54 = vector.shape_cast %53 : vector<1x1x128xf32> to vector<1x128xf32>
    %cst_37 = arith.constant dense<0.000000e+00> : vector<64xf32>
    %55 = vector.multi_reduction <add>, %50, %cst_37 [1] : vector<64x128xf32> to vector<64xf32>
    %56 = vector.shape_cast %55 : vector<64xf32> to vector<64x1xf32>
    %cst_38 = arith.constant 3.125000e-02 : f32
    %57 = vector.broadcast %cst_38 : f32 to vector<64x1xf32>
    %58 = arith.mulf %56, %57 : vector<64x1xf32>
    %59 = arith.mulf %50, %50 : vector<64x128xf32>
    %cst_39 = arith.constant dense<0.000000e+00> : vector<64xf32>
    %60 = vector.multi_reduction <add>, %59, %cst_39 [1] : vector<64x128xf32> to vector<64xf32>
    %61 = vector.shape_cast %60 : vector<64xf32> to vector<64x1xf32>
    %cst_40 = arith.constant 3.125000e-02 : f32
    %62 = vector.broadcast %cst_40 : f32 to vector<64x1xf32>
    %63 = arith.mulf %61, %62 : vector<64x1xf32>
    %64 = arith.mulf %58, %58 : vector<64x1xf32>
    %65 = arith.subf %63, %64 : vector<64x1xf32>
    %cst_41 = arith.constant 0.000000e+00 : f32
    %66 = vector.broadcast %cst_41 : f32 to vector<64x1xf32>
    %67 = arith.maximumf %65, %66 : vector<64x1xf32>
    %68 = vector.broadcast %58 : vector<64x1xf32> to vector<64x128xf32>
    %69 = arith.subf %50, %68 : vector<64x128xf32>
    %cst_42 = arith.constant 9.99999974E-6 : f32
    %70 = vector.broadcast %cst_42 : f32 to vector<64x1xf32>
    %71 = arith.addf %67, %70 : vector<64x1xf32>
    %72 = math.rsqrt %71 : vector<64x1xf32>
    %73 = vector.broadcast %72 : vector<64x1xf32> to vector<64x128xf32>
    %74 = arith.mulf %69, %73 : vector<64x128xf32>
    %75 = vector.broadcast %52 : vector<1x128xf32> to vector<64x128xf32>
    %76 = arith.mulf %74, %75 : vector<64x128xf32>
    %77 = vector.broadcast %54 : vector<1x128xf32> to vector<64x128xf32>
    %78 = arith.addf %76, %77 : vector<64x128xf32>
    %c1_43 = arith.constant 1 : index
    %c0_44 = arith.constant 0 : index
    %c0_45 = arith.constant 0 : index
    %79 = vector.load %arg6[%c1_43, %c0_44, %c0_45] : memref<2x128x128xf32, #tpu.memory_space<vmem>>, vector<1x128x128xf32>
    %80 = vector.shape_cast %79 : vector<1x128x128xf32> to vector<128x128xf32>
    %cst_46 = arith.constant dense<0.000000e+00> : vector<64x128xf32>
    %81 = tpu.matmul %78, %80, %cst_46 {dimension_numbers = #tpu.dot_dimension_numbers<[1], [0], [0], [1], [0, 0, 1, 1], [], []>} : vector<64x128xf32>, vector<128x128xf32>, vector<64x128xf32> -> vector<64x128xf32>
    %c1_47 = arith.constant 1 : index
    %c0_48 = arith.constant 0 : index
    %c0_49 = arith.constant 0 : index
    %82 = vector.load %arg7[%c1_47, %c0_48, %c0_49] : memref<2x1x128xf32, #tpu.memory_space<vmem>>, vector<1x1x128xf32>
    %83 = vector.shape_cast %82 : vector<1x1x128xf32> to vector<1x128xf32>
    %84 = vector.broadcast %83 : vector<1x128xf32> to vector<64x128xf32>
    %85 = arith.addf %81, %84 : vector<64x128xf32>
    %cst_50 = arith.constant 0.000000e+00 : f32
    %86 = vector.broadcast %cst_50 : f32 to vector<64x128xf32>
    %87 = arith.maximumf %85, %86 : vector<64x128xf32>
    %c1_51 = arith.constant 1 : index
    %c0_52 = arith.constant 0 : index
    %c0_53 = arith.constant 0 : index
    %88 = vector.load %arg8[%c1_51, %c0_52, %c0_53] : memref<2x128x128xf32, #tpu.memory_space<vmem>>, vector<1x128x128xf32>
    %89 = vector.shape_cast %88 : vector<1x128x128xf32> to vector<128x128xf32>
    %cst_54 = arith.constant dense<0.000000e+00> : vector<64x128xf32>
    %90 = tpu.matmul %87, %89, %cst_54 {dimension_numbers = #tpu.dot_dimension_numbers<[1], [0], [0], [1], [0, 0, 1, 1], [], []>} : vector<64x128xf32>, vector<128x128xf32>, vector<64x128xf32> -> vector<64x128xf32>
    %91 = arith.addf %50, %90 : vector<64x128xf32>
    %c1_55 = arith.constant 1 : index
    %c0_56 = arith.constant 0 : index
    %c0_57 = arith.constant 0 : index
    %92 = vector.load %arg9[%c1_55, %c0_56, %c0_57] : memref<2x1x128xf32, #tpu.memory_space<vmem>>, vector<1x1x128xf32>
    %93 = vector.shape_cast %92 : vector<1x1x128xf32> to vector<1x128xf32>
    %94 = vector.broadcast %93 : vector<1x128xf32> to vector<64x128xf32>
    %95 = arith.addf %91, %94 : vector<64x128xf32>
    %c0_58 = arith.constant 0 : index
    %c0_59 = arith.constant 0 : index
    %96 = vector.load %arg10[%c0_58, %c0_59] : memref<1x128xf32, #tpu.memory_space<vmem>>, vector<1x128xf32>
    %c0_60 = arith.constant 0 : index
    %c0_61 = arith.constant 0 : index
    %97 = vector.load %arg11[%c0_60, %c0_61] : memref<1x128xf32, #tpu.memory_space<vmem>>, vector<1x128xf32>
    %cst_62 = arith.constant dense<0.000000e+00> : vector<64xf32>
    %98 = vector.multi_reduction <add>, %95, %cst_62 [1] : vector<64x128xf32> to vector<64xf32>
    %99 = vector.shape_cast %98 : vector<64xf32> to vector<64x1xf32>
    %cst_63 = arith.constant 3.125000e-02 : f32
    %100 = vector.broadcast %cst_63 : f32 to vector<64x1xf32>
    %101 = arith.mulf %99, %100 : vector<64x1xf32>
    %102 = arith.mulf %95, %95 : vector<64x128xf32>
    %cst_64 = arith.constant dense<0.000000e+00> : vector<64xf32>
    %103 = vector.multi_reduction <add>, %102, %cst_64 [1] : vector<64x128xf32> to vector<64xf32>
    %104 = vector.shape_cast %103 : vector<64xf32> to vector<64x1xf32>
    %cst_65 = arith.constant 3.125000e-02 : f32
    %105 = vector.broadcast %cst_65 : f32 to vector<64x1xf32>
    %106 = arith.mulf %104, %105 : vector<64x1xf32>
    %107 = arith.mulf %101, %101 : vector<64x1xf32>
    %108 = arith.subf %106, %107 : vector<64x1xf32>
    %cst_66 = arith.constant 0.000000e+00 : f32
    %109 = vector.broadcast %cst_66 : f32 to vector<64x1xf32>
    %110 = arith.maximumf %108, %109 : vector<64x1xf32>
    %111 = vector.broadcast %101 : vector<64x1xf32> to vector<64x128xf32>
    %112 = arith.subf %95, %111 : vector<64x128xf32>
    %cst_67 = arith.constant 9.99999974E-6 : f32
    %113 = vector.broadcast %cst_67 : f32 to vector<64x1xf32>
    %114 = arith.addf %110, %113 : vector<64x1xf32>
    %115 = math.rsqrt %114 : vector<64x1xf32>
    %116 = vector.broadcast %115 : vector<64x1xf32> to vector<64x128xf32>
    %117 = arith.mulf %112, %116 : vector<64x128xf32>
    %118 = vector.broadcast %96 : vector<1x128xf32> to vector<64x128xf32>
    %119 = arith.mulf %117, %118 : vector<64x128xf32>
    %120 = vector.broadcast %97 : vector<1x128xf32> to vector<64x128xf32>
    %121 = arith.addf %119, %120 : vector<64x128xf32>
    %c0_68 = arith.constant 0 : index
    %c0_69 = arith.constant 0 : index
    %122 = vector.load %arg12[%c0_68, %c0_69] : memref<64x128xf32, #tpu.memory_space<vmem>>, vector<64x128xf32>
    tpu.vector_store %arg12[%c0_68, %c0_69], %121 {strides = array<i32>} : memref<64x128xf32, #tpu.memory_space<vmem>>, vector<64x128xf32>,
    return
  }
  func.func @transform_0(%arg0: i32) -> (i32, i32) {
    %c0_i32 = arith.constant 0 : i32
    %c0_i32_0 = arith.constant 0 : i32
    return %arg0, %c0_i32 : i32, i32
  }
  func.func @transform_1(%arg0: i32) -> (i32, i32) {
    %c0_i32 = arith.constant 0 : i32
    %c0_i32_0 = arith.constant 0 : i32
    %c0_i32_1 = arith.constant 0 : i32
    return %c0_i32, %c0_i32_0 : i32, i32
  }
  func.func @transform_2(%arg0: i32) -> (i32, i32) {
    %c0_i32 = arith.constant 0 : i32
    %c0_i32_0 = arith.constant 0 : i32
    %c0_i32_1 = arith.constant 0 : i32
    return %c0_i32, %c0_i32_0 : i32, i32
  }
  func.func @transform_3(%arg0: i32) -> (i32, i32, i32) {
    %c0_i32 = arith.constant 0 : i32
    %c0_i32_0 = arith.constant 0 : i32
    %c0_i32_1 = arith.constant 0 : i32
    %c0_i32_2 = arith.constant 0 : i32
    return %c0_i32, %c0_i32_0, %c0_i32_1 : i32, i32, i32
  }
  func.func @transform_4(%arg0: i32) -> (i32, i32, i32) {
    %c0_i32 = arith.constant 0 : i32
    %c0_i32_0 = arith.constant 0 : i32
    %c0_i32_1 = arith.constant 0 : i32
    %c0_i32_2 = arith.constant 0 : i32
    return %c0_i32, %c0_i32_0, %c0_i32_1 : i32, i32, i32
  }
  func.func @transform_5(%arg0: i32) -> (i32, i32, i32) {
    %c0_i32 = arith.constant 0 : i32
    %c0_i32_0 = arith.constant 0 : i32
    %c0_i32_1 = arith.constant 0 : i32
    %c0_i32_2 = arith.constant 0 : i32
    return %c0_i32, %c0_i32_0, %c0_i32_1 : i32, i32, i32
  }
  func.func @transform_6(%arg0: i32) -> (i32, i32, i32) {
    %c0_i32 = arith.constant 0 : i32
    %c0_i32_0 = arith.constant 0 : i32
    %c0_i32_1 = arith.constant 0 : i32
    %c0_i32_2 = arith.constant 0 : i32
    return %c0_i32, %c0_i32_0, %c0_i32_1 : i32, i32, i32
  }
  func.func @transform_7(%arg0: i32) -> (i32, i32, i32) {
    %c0_i32 = arith.constant 0 : i32
    %c0_i32_0 = arith.constant 0 : i32
    %c0_i32_1 = arith.constant 0 : i32
    %c0_i32_2 = arith.constant 0 : i32
    return %c0_i32, %c0_i32_0, %c0_i32_1 : i32, i32, i32
  }
  func.func @transform_8(%arg0: i32) -> (i32, i32, i32) {
    %c0_i32 = arith.constant 0 : i32
    %c0_i32_0 = arith.constant 0 : i32
    %c0_i32_1 = arith.constant 0 : i32
    %c0_i32_2 = arith.constant 0 : i32
    return %c0_i32, %c0_i32_0, %c0_i32_1 : i32, i32, i32
  }
  func.func @transform_9(%arg0: i32) -> (i32, i32) {
    %c0_i32 = arith.constant 0 : i32
    %c0_i32_0 = arith.constant 0 : i32
    %c0_i32_1 = arith.constant 0 : i32
    return %c0_i32, %c0_i32_0 : i32, i32
  }
  func.func @transform_10(%arg0: i32) -> (i32, i32) {
    %c0_i32 = arith.constant 0 : i32
    %c0_i32_0 = arith.constant 0 : i32
    %c0_i32_1 = arith.constant 0 : i32
    return %c0_i32, %c0_i32_0 : i32, i32
  }
  func.func @transform_11(%arg0: i32) -> (i32, i32) {
    %c0_i32 = arith.constant 0 : i32
    %c0_i32_0 = arith.constant 0 : i32
    return %arg0, %c0_i32 : i32, i32
  }
}

module attributes {stable_mosaic.version = 11 : i64} {
  func.func @residual_encoder_kernel(%arg0: i32, %arg1: memref<64x16xf32, #tpu.memory_space<vmem>>, %arg2: memref<16x128xf32, #tpu.memory_space<vmem>>, %arg3: memref<1x128xf32, #tpu.memory_space<vmem>>, %arg4: memref<2x1x128xf32, #tpu.memory_space<vmem>>, %arg5: memref<2x1x128xf32, #tpu.memory_space<vmem>>, %arg6: memref<2x128x128xf32, #tpu.memory_space<vmem>>, %arg7: memref<2x1x128xf32, #tpu.memory_space<vmem>>, %arg8: memref<2x128x128xf32, #tpu.memory_space<vmem>>, %arg9: memref<2x1x128xf32, #tpu.memory_space<vmem>>, %arg10: memref<1x128xf32, #tpu.memory_space<vmem>>, %arg11: memref<1x128xf32, #tpu.memory_space<vmem>>, %arg12: memref<64x128xf32, #tpu.memory_space<vmem>>) attributes {dimension_semantics = [#tpu.dimension_semantics<parallel>], iteration_bounds = array<i64: 4>, scalar_prefetch = 0 : i64, scratch_operands = 0 : i64, tpu.core_type = #tpu.core_type<tc>, window_params = [{transform_indices = @transform_0, window_bounds = array<i64: 64, 16>}, {pipeline_mode = #tpu.pipeline_mode<synchronous>, transform_indices = @transform_1, window_bounds = array<i64: 16, 128>}, {pipeline_mode = #tpu.pipeline_mode<synchronous>, transform_indices = @transform_2, window_bounds = array<i64: 1, 128>}, {pipeline_mode = #tpu.pipeline_mode<synchronous>, transform_indices = @transform_3, window_bounds = array<i64: 2, 1, 128>}, {pipeline_mode = #tpu.pipeline_mode<synchronous>, transform_indices = @transform_4, window_bounds = array<i64: 2, 1, 128>}, {pipeline_mode = #tpu.pipeline_mode<synchronous>, transform_indices = @transform_5, window_bounds = array<i64: 2, 128, 128>}, {pipeline_mode = #tpu.pipeline_mode<synchronous>, transform_indices = @transform_6, window_bounds = array<i64: 2, 1, 128>}, {pipeline_mode = #tpu.pipeline_mode<synchronous>, transform_indices = @transform_7, window_bounds = array<i64: 2, 128, 128>}, {pipeline_mode = #tpu.pipeline_mode<synchronous>, transform_indices = @transform_8, window_bounds = array<i64: 2, 1, 128>}, {pipeline_mode = #tpu.pipeline_mode<synchronous>, transform_indices = @transform_9, window_bounds = array<i64: 1, 128>}, {pipeline_mode = #tpu.pipeline_mode<synchronous>, transform_indices = @transform_10, window_bounds = array<i64: 1, 128>}, {transform_indices = @transform_11, window_bounds = array<i64: 64, 128>}]} {
    %c0 = arith.constant 0 : index
    %c0_0 = arith.constant 0 : index
    %0 = vector.load %arg1[%c0, %c0_0] : memref<64x16xf32, #tpu.memory_space<vmem>>, vector<64x16xf32>
    %c0_1 = arith.constant 0 : index
    %c0_2 = arith.constant 0 : index
    %1 = vector.load %arg2[%c0_1, %c0_2] : memref<16x128xf32, #tpu.memory_space<vmem>>, vector<16x128xf32>
    %cst = arith.constant dense<0.000000e+00> : vector<64x128xf32>
    %2 = tpu.matmul %0, %1, %cst {dimension_numbers = #tpu.dot_dimension_numbers<[1], [0], [0], [1], [0, 0, 1, 1], [], []>} : vector<64x16xf32>, vector<16x128xf32>, vector<64x128xf32> -> vector<64x128xf32>
    %c0_3 = arith.constant 0 : index
    %c0_4 = arith.constant 0 : index
    %3 = vector.load %arg3[%c0_3, %c0_4] : memref<1x128xf32, #tpu.memory_space<vmem>>, vector<1x128xf32>
    %4 = vector.broadcast %3 : vector<1x128xf32> to vector<64x128xf32>
    %5 = arith.addf %2, %4 : vector<64x128xf32>
    %c0_5 = arith.constant 0 : index
    %c0_6 = arith.constant 0 : index
    %c0_7 = arith.constant 0 : index
    %6 = vector.load %arg4[%c0_5, %c0_6, %c0_7] : memref<2x1x128xf32, #tpu.memory_space<vmem>>, vector<1x1x128xf32>
    %7 = vector.shape_cast %6 : vector<1x1x128xf32> to vector<1x128xf32>
    %c0_8 = arith.constant 0 : index
    %c0_9 = arith.constant 0 : index
    %c0_10 = arith.constant 0 : index
    %8 = vector.load %arg5[%c0_8, %c0_9, %c0_10] : memref<2x1x128xf32, #tpu.memory_space<vmem>>, vector<1x1x128xf32>
    %9 = vector.shape_cast %8 : vector<1x1x128xf32> to vector<1x128xf32>
    %cst_11 = arith.constant dense<0.000000e+00> : vector<64xf32>
    %10 = vector.multi_reduction <add>, %5, %cst_11 [1] : vector<64x128xf32> to vector<64xf32>
    %11 = vector.shape_cast %10 : vector<64xf32> to vector<64x1xf32>
    %cst_12 = arith.constant 3.125000e-02 : f32
    %12 = vector.broadcast %cst_12 : f32 to vector<64x1xf32>
    %13 = arith.mulf %11, %12 : vector<64x1xf32>
    %14 = arith.mulf %5, %5 : vector<64x128xf32>
    %cst_13 = arith.constant dense<0.000000e+00> : vector<64xf32>
    %15 = vector.multi_reduction <add>, %14, %cst_13 [1] : vector<64x128xf32> to vector<64xf32>
    %16 = vector.shape_cast %15 : vector<64xf32> to vector<64x1xf32>
    %cst_14 = arith.constant 3.125000e-02 : f32
    %17 = vector.broadcast %cst_14 : f32 to vector<64x1xf32>
    %18 = arith.mulf %16, %17 : vector<64x1xf32>
    %19 = arith.mulf %13, %13 : vector<64x1xf32>
    %20 = arith.subf %18, %19 : vector<64x1xf32>
    %cst_15 = arith.constant 0.000000e+00 : f32
    %21 = vector.broadcast %cst_15 : f32 to vector<64x1xf32>
    %22 = arith.maximumf %20, %21 : vector<64x1xf32>
    %23 = vector.broadcast %13 : vector<64x1xf32> to vector<64x128xf32>
    %24 = arith.subf %5, %23 : vector<64x128xf32>
    %cst_16 = arith.constant 9.99999974E-6 : f32
    %25 = vector.broadcast %cst_16 : f32 to vector<64x1xf32>
    %26 = arith.addf %22, %25 : vector<64x1xf32>
    %27 = math.rsqrt %26 : vector<64x1xf32>
    %28 = vector.broadcast %27 : vector<64x1xf32> to vector<64x128xf32>
    %29 = arith.mulf %24, %28 : vector<64x128xf32>
    %30 = vector.broadcast %7 : vector<1x128xf32> to vector<64x128xf32>
    %31 = arith.mulf %29, %30 : vector<64x128xf32>
    %32 = vector.broadcast %9 : vector<1x128xf32> to vector<64x128xf32>
    %33 = arith.addf %31, %32 : vector<64x128xf32>
    %c0_17 = arith.constant 0 : index
    %c0_18 = arith.constant 0 : index
    %c0_19 = arith.constant 0 : index
    %34 = vector.load %arg6[%c0_17, %c0_18, %c0_19] : memref<2x128x128xf32, #tpu.memory_space<vmem>>, vector<1x128x128xf32>
    %35 = vector.shape_cast %34 : vector<1x128x128xf32> to vector<128x128xf32>
    %cst_20 = arith.constant dense<0.000000e+00> : vector<64x128xf32>
    %36 = tpu.matmul %33, %35, %cst_20 {dimension_numbers = #tpu.dot_dimension_numbers<[1], [0], [0], [1], [0, 0, 1, 1], [], []>} : vector<64x128xf32>, vector<128x128xf32>, vector<64x128xf32> -> vector<64x128xf32>
    %c0_21 = arith.constant 0 : index
    %c0_22 = arith.constant 0 : index
    %c0_23 = arith.constant 0 : index
    %37 = vector.load %arg7[%c0_21, %c0_22, %c0_23] : memref<2x1x128xf32, #tpu.memory_space<vmem>>, vector<1x1x128xf32>
    %38 = vector.shape_cast %37 : vector<1x1x128xf32> to vector<1x128xf32>
    %39 = vector.broadcast %38 : vector<1x128xf32> to vector<64x128xf32>
    %40 = arith.addf %36, %39 : vector<64x128xf32>
    %cst_24 = arith.constant 0.000000e+00 : f32
    %41 = vector.broadcast %cst_24 : f32 to vector<64x128xf32>
    %42 = arith.maximumf %40, %41 : vector<64x128xf32>
    %c0_25 = arith.constant 0 : index
    %c0_26 = arith.constant 0 : index
    %c0_27 = arith.constant 0 : index
    %43 = vector.load %arg8[%c0_25, %c0_26, %c0_27] : memref<2x128x128xf32, #tpu.memory_space<vmem>>, vector<1x128x128xf32>
    %44 = vector.shape_cast %43 : vector<1x128x128xf32> to vector<128x128xf32>
    %cst_28 = arith.constant dense<0.000000e+00> : vector<64x128xf32>
    %45 = tpu.matmul %42, %44, %cst_28 {dimension_numbers = #tpu.dot_dimension_numbers<[1], [0], [0], [1], [0, 0, 1, 1], [], []>} : vector<64x128xf32>, vector<128x128xf32>, vector<64x128xf32> -> vector<64x128xf32>
    %46 = arith.addf %5, %45 : vector<64x128xf32>
    %c0_29 = arith.constant 0 : index
    %c0_30 = arith.constant 0 : index
    %c0_31 = arith.constant 0 : index
    %47 = vector.load %arg9[%c0_29, %c0_30, %c0_31] : memref<2x1x128xf32, #tpu.memory_space<vmem>>, vector<1x1x128xf32>
    %48 = vector.shape_cast %47 : vector<1x1x128xf32> to vector<1x128xf32>
    %49 = vector.broadcast %48 : vector<1x128xf32> to vector<64x128xf32>
    %50 = arith.addf %46, %49 : vector<64x128xf32>
    %c1 = arith.constant 1 : index
    %c0_32 = arith.constant 0 : index
    %c0_33 = arith.constant 0 : index
    %51 = vector.load %arg4[%c1, %c0_32, %c0_33] : memref<2x1x128xf32, #tpu.memory_space<vmem>>, vector<1x1x128xf32>
    %52 = vector.shape_cast %51 : vector<1x1x128xf32> to vector<1x128xf32>
    %c1_34 = arith.constant 1 : index
    %c0_35 = arith.constant 0 : index
    %c0_36 = arith.constant 0 : index
    %53 = vector.load %arg5[%c1_34, %c0_35, %c0_36] : memref<2x1x128xf32, #tpu.memory_space<vmem>>, vector<1x1x128xf32>
    %54 = vector.shape_cast %53 : vector<1x1x128xf32> to vector<1x128xf32>
    %cst_37 = arith.constant dense<0.000000e+00> : vector<64xf32>
    %55 = vector.multi_reduction <add>, %50, %cst_37 [1] : vector<64x128xf32> to vector<64xf32>
    %56 = vector.shape_cast %55 : vector<64xf32> to vector<64x1xf32>
    %cst_38 = arith.constant 3.125000e-02 : f32
    %57 = vector.broadcast %cst_38 : f32 to vector<64x1xf32>
    %58 = arith.mulf %56, %57 : vector<64x1xf32>
    %59 = arith.mulf %50, %50 : vector<64x128xf32>
    %cst_39 = arith.constant dense<0.000000e+00> : vector<64xf32>
    %60 = vector.multi_reduction <add>, %59, %cst_39 [1] : vector<64x128xf32> to vector<64xf32>
    %61 = vector.shape_cast %60 : vector<64xf32> to vector<64x1xf32>
    %cst_40 = arith.constant 3.125000e-02 : f32
    %62 = vector.broadcast %cst_40 : f32 to vector<64x1xf32>
    %63 = arith.mulf %61, %62 : vector<64x1xf32>
    %64 = arith.mulf %58, %58 : vector<64x1xf32>
    %65 = arith.subf %63, %64 : vector<64x1xf32>
    %cst_41 = arith.constant 0.000000e+00 : f32
    %66 = vector.broadcast %cst_41 : f32 to vector<64x1xf32>
    %67 = arith.maximumf %65, %66 : vector<64x1xf32>
    %68 = vector.broadcast %58 : vector<64x1xf32> to vector<64x128xf32>
    %69 = arith.subf %50, %68 : vector<64x128xf32>
    %cst_42 = arith.constant 9.99999974E-6 : f32
    %70 = vector.broadcast %cst_42 : f32 to vector<64x1xf32>
    %71 = arith.addf %67, %70 : vector<64x1xf32>
    %72 = math.rsqrt %71 : vector<64x1xf32>
    %73 = vector.broadcast %72 : vector<64x1xf32> to vector<64x128xf32>
    %74 = arith.mulf %69, %73 : vector<64x128xf32>
    %75 = vector.broadcast %52 : vector<1x128xf32> to vector<64x128xf32>
    %76 = arith.mulf %74, %75 : vector<64x128xf32>
    %77 = vector.broadcast %54 : vector<1x128xf32> to vector<64x128xf32>
    %78 = arith.addf %76, %77 : vector<64x128xf32>
    %c1_43 = arith.constant 1 : index
    %c0_44 = arith.constant 0 : index
    %c0_45 = arith.constant 0 : index
    %79 = vector.load %arg6[%c1_43, %c0_44, %c0_45] : memref<2x128x128xf32, #tpu.memory_space<vmem>>, vector<1x128x128xf32>
    %80 = vector.shape_cast %79 : vector<1x128x128xf32> to vector<128x128xf32>
    %cst_46 = arith.constant dense<0.000000e+00> : vector<64x128xf32>
    %81 = tpu.matmul %78, %80, %cst_46 {dimension_numbers = #tpu.dot_dimension_numbers<[1], [0], [0], [1], [0, 0, 1, 1], [], []>} : vector<64x128xf32>, vector<128x128xf32>, vector<64x128xf32> -> vector<64x128xf32>
    %c1_47 = arith.constant 1 : index
    %c0_48 = arith.constant 0 : index
    %c0_49 = arith.constant 0 : index
    %82 = vector.load %arg7[%c1_47, %c0_48, %c0_49] : memref<2x1x128xf32, #tpu.memory_space<vmem>>, vector<1x1x128xf32>
    %83 = vector.shape_cast %82 : vector<1x1x128xf32> to vector<1x128xf32>
    %84 = vector.broadcast %83 : vector<1x128xf32> to vector<64x128xf32>
    %85 = arith.addf %81, %84 : vector<64x128xf32>
    %cst_50 = arith.constant 0.000000e+00 : f32
    %86 = vector.broadcast %cst_50 : f32 to vector<64x128xf32>
    %87 = arith.maximumf %85, %86 : vector<64x128xf32>
    %c1_51 = arith.constant 1 : index
    %c0_52 = arith.constant 0 : index
    %c0_53 = arith.constant 0 : index
    %88 = vector.load %arg8[%c1_51, %c0_52, %c0_53] : memref<2x128x128xf32, #tpu.memory_space<vmem>>, vector<1x128x128xf32>
    %89 = vector.shape_cast %88 : vector<1x128x128xf32> to vector<128x128xf32>
    %cst_54 = arith.constant dense<0.000000e+00> : vector<64x128xf32>
    %90 = tpu.matmul %87, %89, %cst_54 {dimension_numbers = #tpu.dot_dimension_numbers<[1], [0], [0], [1], [0, 0, 1, 1], [], []>} : vector<64x128xf32>, vector<128x128xf32>, vector<64x128xf32> -> vector<64x128xf32>
    %91 = arith.addf %50, %90 : vector<64x128xf32>
    %c1_55 = arith.constant 1 : index
    %c0_56 = arith.constant 0 : index
    %c0_57 = arith.constant 0 : index
    %92 = vector.load %arg9[%c1_55, %c0_56, %c0_57] : memref<2x1x128xf32, #tpu.memory_space<vmem>>, vector<1x1x128xf32>
    %93 = vector.shape_cast %92 : vector<1x1x128xf32> to vector<1x128xf32>
    %94 = vector.broadcast %93 : vector<1x128xf32> to vector<64x128xf32>
    %95 = arith.addf %91, %94 : vector<64x128xf32>
    %c0_58 = arith.constant 0 : index
    %c0_59 = arith.constant 0 : index
    %96 = vector.load %arg10[%c0_58, %c0_59] : memref<1x128xf32, #tpu.memory_space<vmem>>, vector<1x128xf32>
    %c0_60 = arith.constant 0 : index
    %c0_61 = arith.constant 0 : index
    %97 = vector.load %arg11[%c0_60, %c0_61] : memref<1x128xf32, #tpu.memory_space<vmem>>, vector<1x128xf32>
    %cst_62 = arith.constant dense<0.000000e+00> : vector<64xf32>
    %98 = vector.multi_reduction <add>, %95, %cst_62 [1] : vector<64x128xf32> to vector<64xf32>
    %99 = vector.shape_cast %98 : vector<64xf32> to vector<64x1xf32>
    %cst_63 = arith.constant 3.125000e-02 : f32
    %100 = vector.broadcast %cst_63 : f32 to vector<64x1xf32>
    %101 = arith.mulf %99, %100 : vector<64x1xf32>
    %102 = arith.mulf %95, %95 : vector<64x128xf32>
    %cst_64 = arith.constant dense<0.000000e+00> : vector<64xf32>
    %103 = vector.multi_reduction <add>, %102, %cst_64 [1] : vector<64x128xf32> to vector<64xf32>
    %104 = vector.shape_cast %103 : vector<64xf32> to vector<64x1xf32>
    %cst_65 = arith.constant 3.125000e-02 : f32
    %105 = vector.broadcast %cst_65 : f32 to vector<64x1xf32>
    %106 = arith.mulf %104, %105 : vector<64x1xf32>
    %107 = arith.mulf %101, %101 : vector<64x1xf32>
    %108 = arith.subf %106, %107 : vector<64x1xf32>
    %cst_66 = arith.constant 0.000000e+00 : f32
    %109 = vector.broadcast %cst_66 : f32 to vector<64x1xf32>
    %110 = arith.maximumf %108, %109 : vector<64x1xf32>
    %111 = vector.broadcast %101 : vector<64x1xf32> to vector<64x128xf32>
    %112 = arith.subf %95, %111 : vector<64x128xf32>
    %cst_67 = arith.constant 9.99999974E-6 : f32
    %113 = vector.broadcast %cst_67 : f32 to vector<64x1xf32>
    %114 = arith.addf %110, %113 : vector<64x1xf32>
    %115 = math.rsqrt %114 : vector<64x1xf32>
    %116 = vector.broadcast %115 : vector<64x1xf32> to vector<64x128xf32>
    %117 = arith.mulf %112, %116 : vector<64x128xf32>
    %118 = vector.broadcast %96 : vector<1x128xf32> to vector<64x128xf32>
    %119 = arith.mulf %117, %118 : vector<64x128xf32>
    %120 = vector.broadcast %97 : vector<1x128xf32> to vector<64x128xf32>
    %121 = arith.addf %119, %120 : vector<64x128xf32>
    %c0_68 = arith.constant 0 : index
    %c0_69 = arith.constant 0 : index
    %122 = vector.load %arg12[%c0_68, %c0_69] : memref<64x128xf32, #tpu.memory_space<vmem>>, vector<64x128xf32>
    tpu.vector_store %arg12[%c0_68, %c0_69], %121 {strides = array<i32>} : memref<64x128xf32, #tpu.memory_space<vmem>>, vector<64x128xf32>,
    return
  }
  func.func @transform_0(%arg0: i32) -> (i32, i32) {
    %c0_i32 = arith.constant 0 : i32
    %c0_i32_0 = arith.constant 0 : i32
    return %arg0, %c0_i32 : i32, i32
  }
  func.func @transform_1(%arg0: i32) -> (i32, i32) {
    %c0_i32 = arith.constant 0 : i32
    %c0_i32_0 = arith.constant 0 : i32
    %c0_i32_1 = arith.constant 0 : i32
    return %c0_i32, %c0_i32_0 : i32, i32
  }
  func.func @transform_2(%arg0: i32) -> (i32, i32) {
    %c0_i32 = arith.constant 0 : i32
    %c0_i32_0 = arith.constant 0 : i32
    %c0_i32_1 = arith.constant 0 : i32
    return %c0_i32, %c0_i32_0 : i32, i32
  }
  func.func @transform_3(%arg0: i32) -> (i32, i32, i32) {
    %c0_i32 = arith.constant 0 : i32
    %c0_i32_0 = arith.constant 0 : i32
    %c0_i32_1 = arith.constant 0 : i32
    %c0_i32_2 = arith.constant 0 : i32
    return %c0_i32, %c0_i32_0, %c0_i32_1 : i32, i32, i32
  }
  func.func @transform_4(%arg0: i32) -> (i32, i32, i32) {
    %c0_i32 = arith.constant 0 : i32
    %c0_i32_0 = arith.constant 0 : i32
    %c0_i32_1 = arith.constant 0 : i32
    %c0_i32_2 = arith.constant 0 : i32
    return %c0_i32, %c0_i32_0, %c0_i32_1 : i32, i32, i32
  }
  func.func @transform_5(%arg0: i32) -> (i32, i32, i32) {
    %c0_i32 = arith.constant 0 : i32
    %c0_i32_0 = arith.constant 0 : i32
    %c0_i32_1 = arith.constant 0 : i32
    %c0_i32_2 = arith.constant 0 : i32
    return %c0_i32, %c0_i32_0, %c0_i32_1 : i32, i32, i32
  }
  func.func @transform_6(%arg0: i32) -> (i32, i32, i32) {
    %c0_i32 = arith.constant 0 : i32
    %c0_i32_0 = arith.constant 0 : i32
    %c0_i32_1 = arith.constant 0 : i32
    %c0_i32_2 = arith.constant 0 : i32
    return %c0_i32, %c0_i32_0, %c0_i32_1 : i32, i32, i32
  }
  func.func @transform_7(%arg0: i32) -> (i32, i32, i32) {
    %c0_i32 = arith.constant 0 : i32
    %c0_i32_0 = arith.constant 0 : i32
    %c0_i32_1 = arith.constant 0 : i32
    %c0_i32_2 = arith.constant 0 : i32
    return %c0_i32, %c0_i32_0, %c0_i32_1 : i32, i32, i32
  }
  func.func @transform_8(%arg0: i32) -> (i32, i32, i32) {
    %c0_i32 = arith.constant 0 : i32
    %c0_i32_0 = arith.constant 0 : i32
    %c0_i32_1 = arith.constant 0 : i32
    %c0_i32_2 = arith.constant 0 : i32
    return %c0_i32, %c0_i32_0, %c0_i32_1 : i32, i32, i32
  }
  func.func @transform_9(%arg0: i32) -> (i32, i32) {
    %c0_i32 = arith.constant 0 : i32
    %c0_i32_0 = arith.constant 0 : i32
    %c0_i32_1 = arith.constant 0 : i32
    return %c0_i32, %c0_i32_0 : i32, i32
  }
  func.func @transform_10(%arg0: i32) -> (i32, i32) {
    %c0_i32 = arith.constant 0 : i32
    %c0_i32_0 = arith.constant 0 : i32
    %c0_i32_1 = arith.constant 0 : i32
    return %c0_i32, %c0_i32_0 : i32, i32
  }
  func.func @transform_11(%arg0: i32) -> (i32, i32) {
    %c0_i32 = arith.constant 0 : i32
    %c0_i32_0 = arith.constant 0 : i32
    return %arg0, %c0_i32 : i32, i32
  }
}

</mosaic_0001>

<llo_original>
// kernel: tpu_custom_call.1
$region0: #{tpu_custom_call.1}
  #allocation0 [shape = 'u32[]', space=smem, size = 0x4, offset = 0x4, fixed_abs, tag = 'smem constant byte address 0x4 - core index']
  #allocation1 [shape = 'u32[144,128]{1,0:T(1,128)}', space=vmem, size = 0x12000, scoped, tag = 'internal scratch']
  %s0 = inlined_call_operand.hbm [shape: f32[200,16], index: 0, kind: input, shape index: {}]
  %s1 = inlined_call_operand.hbm [shape: f32[16,128], index: 1, kind: input, shape index: {}]
  %s2 = inlined_call_operand.hbm [shape: f32[1,128], index: 2, kind: input, shape index: {}]
  %s3 = inlined_call_operand.hbm [shape: f32[2,1,128], index: 3, kind: input, shape index: {}]
  %s4 = inlined_call_operand.hbm [shape: f32[2,1,128], index: 4, kind: input, shape index: {}]
  %s5 = inlined_call_operand.hbm [shape: f32[2,128,128], index: 5, kind: input, shape index: {}]
  %s6 = inlined_call_operand.hbm [shape: f32[2,1,128], index: 6, kind: input, shape index: {}]
  %s7 = inlined_call_operand.hbm [shape: f32[2,128,128], index: 7, kind: input, shape index: {}]
  %s8 = inlined_call_operand.hbm [shape: f32[2,1,128], index: 8, kind: input, shape index: {}]
  %s9 = inlined_call_operand.hbm [shape: f32[1,128], index: 9, kind: input, shape index: {}]
  %s10 = inlined_call_operand.hbm [shape: f32[1,128], index: 10, kind: input, shape index: {}]
  %s11 = inlined_call_operand.hbm [shape: f32[200,128], index: 11, kind: output, shape index: {}]
  %s12 = sld [smem:[#allocation0]]
  $region121: #{tpu_custom_call.1} parent=0
    _
  %s14 = ssub.s32 1, %s12
  %s15 = scalar_select 0, %s14, %s12
  $region1: #{tpu_custom_call.1} parent=0
    #allocation2 [shape = 'u8[65536]{0}', space=vmem, size = 0x10000, scoped, tag = 'input window, operand 0']
    #allocation3 [shape = 's32[2]{0}', space=sflag, size = 0x8, scoped, tag = 'scoped memory for tpu_custom_call.1']
    #allocation4 [shape = 's32[2]{0}', space=sflag, size = 0x8, scoped, tag = 'scoped memory for tpu_custom_call.1']
    #allocation5 [shape = 'u8[8192]{0}', space=vmem, size = 0x2000, scoped, tag = 'input window, operand 1, single buffered']
    #allocation6 [shape = 's32[1]{0}', space=sflag, size = 0x4, scoped, tag = 'scoped memory for tpu_custom_call.1']
    #allocation7 [shape = 'u8[512]{0}', space=vmem, size = 0x400, scoped, tag = 'input window, operand 2, single buffered']
    #allocation8 [shape = 'u8[1024]{0}', space=vmem, size = 0x400, scoped, tag = 'input window, operand 3, single buffered']
    #allocation9 [shape = 's32[1]{0}', space=sflag, size = 0x4, scoped, tag = 'scoped memory for tpu_custom_call.1']
    #allocation10 [shape = 'u8[1024]{0}', space=vmem, size = 0x400, scoped, tag = 'input window, operand 4, single buffered']
    #allocation11 [shape = 'u8[131072]{0}', space=vmem, size = 0x20000, scoped, tag = 'input window, operand 5, single buffered']
    #allocation12 [shape = 's32[1]{0}', space=sflag, size = 0x4, scoped, tag = 'scoped memory for tpu_custom_call.1']
    #allocation13 [shape = 'u8[1024]{0}', space=vmem, size = 0x400, scoped, tag = 'input window, operand 6, single buffered']
    #allocation14 [shape = 'u8[131072]{0}', space=vmem, size = 0x20000, scoped, tag = 'input window, operand 7, single buffered']
    #allocation15 [shape = 's32[1]{0}', space=sflag, size = 0x4, scoped, tag = 'scoped memory for tpu_custom_call.1']
    #allocation16 [shape = 'u8[1024]{0}', space=vmem, size = 0x400, scoped, tag = 'input window, operand 8, single buffered']
    #allocation17 [shape = 'u8[512]{0}', space=vmem, size = 0x400, scoped, tag = 'input window, operand 9, single buffered']
    #allocation18 [shape = 's32[1]{0}', space=sflag, size = 0x4, scoped, tag = 'scoped memory for tpu_custom_call.1']
    #allocation19 [shape = 'u8[512]{0}', space=vmem, size = 0x400, scoped, tag = 'input window, operand 10, single buffered']
    #allocation20 [shape = 'u8[65536]{0}', space=vmem, size = 0x10000, scoped, tag = 'output window, operand 0']
    %16 = vsyncpa [#allocation3], 0
    %s17 = scalar_lea.sflag [#allocation3], 1
    %18 = vsyncpa %s17, 0
    %19 = vsyncpa [#allocation6], 0
    %20 = vsyncpa [#allocation9], 0
    %21 = vsyncpa [#allocation12], 0
    %22 = vsyncpa [#allocation15], 0
    %23 = vsyncpa [#allocation18], 0
    %24 = vsyncpa [#allocation4], 0
    %s25 = scalar_lea.sflag [#allocation4], 1
    %26 = vsyncpa %s25, 0
    loop: start=0, step=1, limit=6
    $region2: #{tpu_custom_call.1} parent=1 // loop_pre_header
      _
    $region3: #{tpu_custom_call.1} parent=1 // loop_header
      %s28 = sphi 0, %s32
      %p29 = scmp.ge.s32.totalorder %s28, 6
      %s38 = sphi 0, %s40
      %s41 = sphi 0, %s38
      %s42 = sphi 0, %s41
      %s58 = sphi 0, %s42
      %s62 = sphi 0, %s62
      %s64 = sphi 0, %s62
      %s65 = sphi 0, %s64
      %s79 = sphi 0, %s65
      %s83 = sphi 0, %s83
      %s85 = sphi 0, %s83
      %s86 = sphi 0, %s85
      %s100 = sphi 0, %s86
      %s104 = sphi 0, %s104
      %s106 = sphi 0, %s104
      %s107 = sphi 0, %s106
      %s121 = sphi 0, %s107
      %s125 = sphi 0, %s125
      %s127 = sphi 0, %s125
      %s128 = sphi 0, %s127
      %s142 = sphi 0, %s128
      %s146 = sphi 0, %s146
      %s148 = sphi 0, %s146
      %s149 = sphi 0, %s148
      %s163 = sphi 0, %s149
      %s167 = sphi 0, %s167
      %s169 = sphi 0, %s167
      %s170 = sphi 0, %s169
      %s184 = sphi 0, %s170
      %s188 = sphi 0, %s188
      %s190 = sphi 0, %s188
      %s191 = sphi 0, %s190
      %s205 = sphi 0, %s191
      %s209 = sphi 0, %s209
      %s211 = sphi 0, %s209
      %s212 = sphi 0, %s211
      %s226 = sphi 0, %s212
      %s230 = sphi 0, %s230
      %s232 = sphi 0, %s230
      %s233 = sphi 0, %s232
      %s247 = sphi 0, %s233
      %s251 = sphi 0, %s251
      %s253 = sphi 0, %s251
      %s254 = sphi 0, %s253
      %s268 = sphi 0, %s254
      %s274 = sphi 0, %s276
      %s277 = sphi 0, %s274
      %s278 = sphi 0, %s277
      %s294 = sphi 0, %s278
    $region4: #{tpu_custom_call.1} parent=1 // loop_header_branch
      %31 = sbr.rel (%p29) target = $region8
    $region5: #{tpu_custom_call.1} parent=1 // loop_body
      %s33 = ssub.s32 %s28, 1
      %s34 = ssub.s32 %s28, 2
      %s35 = sadd.s32 %s28, 1
      %s36 = ssub.s32 %s28, %s35
      %p37 = scmp.eq.s32.totalorder %s36, 0
      %s39 = sadd.s32 %s38, 1
      %s40 = scalar_select %p37, %s38, %s39
      %p43 = pneg %p37
      %p44 = scmp.eq.s32.totalorder %s28, 3
      %p45 = por %p43, %p44
      %p46 = scmp.ne.s32.totalorder %s38, %s41
      %p47 = scmp.eq.s32.totalorder %s28, 0
      %p48 = por %p46, %p47
      %p49 = scmp.ne.s32.totalorder %s38, %s41
      %p50 = scmp.eq.s32.totalorder %s33, 3
      %p51 = por %p49, %p50
      %p52 = scmp.ne.s32.totalorder %s41, %s42
      %p53 = scmp.eq.s32.totalorder %s33, 0
      %p54 = por %p52, %p53
      %p55 = scmp.ne.s32.totalorder %s41, %s42
      %p56 = scmp.eq.s32.totalorder %s34, 3
      %p57 = por %p55, %p56
      %p59 = scmp.ne.s32.totalorder %s42, %s58
      %p60 = scmp.eq.s32.totalorder %s34, 0
      %p61 = por %p59, %p60
      %s63 = sadd.s32 %s62, 1
      %p66 = scmp.eq.s32.totalorder %s28, 3
      %p67 = scmp.ne.s32.totalorder %s62, %s64
      %p68 = scmp.eq.s32.totalorder %s28, 0
      %p69 = por %p67, %p68
      %p70 = scmp.ne.s32.totalorder %s62, %s64
      %p71 = scmp.eq.s32.totalorder %s33, 3
      %p72 = por %p70, %p71
      %p73 = scmp.ne.s32.totalorder %s64, %s65
      %p74 = scmp.eq.s32.totalorder %s33, 0
      %p75 = por %p73, %p74
      %p76 = scmp.ne.s32.totalorder %s64, %s65
      %p77 = scmp.eq.s32.totalorder %s34, 3
      %p78 = por %p76, %p77
      %p80 = scmp.ne.s32.totalorder %s65, %s79
      %p81 = scmp.eq.s32.totalorder %s34, 0
      %p82 = por %p80, %p81
      %s84 = sadd.s32 %s83, 1
      %p87 = scmp.eq.s32.totalorder %s28, 3
      %p88 = scmp.ne.s32.totalorder %s83, %s85
      %p89 = scmp.eq.s32.totalorder %s28, 0
      %p90 = por %p88, %p89
      %p91 = scmp.ne.s32.totalorder %s83, %s85
      %p92 = scmp.eq.s32.totalorder %s33, 3
      %p93 = por %p91, %p92
      %p94 = scmp.ne.s32.totalorder %s85, %s86
      %p95 = scmp.eq.s32.totalorder %s33, 0
      %p96 = por %p94, %p95
      %p97 = scmp.ne.s32.totalorder %s85, %s86
      %p98 = scmp.eq.s32.totalorder %s34, 3
      %p99 = por %p97, %p98
      %p101 = scmp.ne.s32.totalorder %s86, %s100
      %p102 = scmp.eq.s32.totalorder %s34, 0
      %p103 = por %p101, %p102
      %s105 = sadd.s32 %s104, 1
      %p108 = scmp.eq.s32.totalorder %s28, 3
      %p109 = scmp.ne.s32.totalorder %s104, %s106
      %p110 = scmp.eq.s32.totalorder %s28, 0
      %p111 = por %p109, %p110
      %p112 = scmp.ne.s32.totalorder %s104, %s106
      %p113 = scmp.eq.s32.totalorder %s33, 3
      %p114 = por %p112, %p113
      %p115 = scmp.ne.s32.totalorder %s106, %s107
      %p116 = scmp.eq.s32.totalorder %s33, 0
      %p117 = por %p115, %p116
      %p118 = scmp.ne.s32.totalorder %s106, %s107
      %p119 = scmp.eq.s32.totalorder %s34, 3
      %p120 = por %p118, %p119
      %p122 = scmp.ne.s32.totalorder %s107, %s121
      %p123 = scmp.eq.s32.totalorder %s34, 0
      %p124 = por %p122, %p123
      %s126 = sadd.s32 %s125, 1
      %p129 = scmp.eq.s32.totalorder %s28, 3
      %p130 = scmp.ne.s32.totalorder %s125, %s127
      %p131 = scmp.eq.s32.totalorder %s28, 0
      %p132 = por %p130, %p131
      %p133 = scmp.ne.s32.totalorder %s125, %s127
      %p134 = scmp.eq.s32.totalorder %s33, 3
      %p135 = por %p133, %p134
      %p136 = scmp.ne.s32.totalorder %s127, %s128
      %p137 = scmp.eq.s32.totalorder %s33, 0
      %p138 = por %p136, %p137
      %p139 = scmp.ne.s32.totalorder %s127, %s128
      %p140 = scmp.eq.s32.totalorder %s34, 3
      %p141 = por %p139, %p140
      %p143 = scmp.ne.s32.totalorder %s128, %s142
      %p144 = scmp.eq.s32.totalorder %s34, 0
      %p145 = por %p143, %p144
      %s147 = sadd.s32 %s146, 1
      %p150 = scmp.eq.s32.totalorder %s28, 3
      %p151 = scmp.ne.s32.totalorder %s146, %s148
      %p152 = scmp.eq.s32.totalorder %s28, 0
      %p153 = por %p151, %p152
      %p154 = scmp.ne.s32.totalorder %s146, %s148
      %p155 = scmp.eq.s32.totalorder %s33, 3
      %p156 = por %p154, %p155
      %p157 = scmp.ne.s32.totalorder %s148, %s149
      %p158 = scmp.eq.s32.totalorder %s33, 0
      %p159 = por %p157, %p158
      %p160 = scmp.ne.s32.totalorder %s148, %s149
      %p161 = scmp.eq.s32.totalorder %s34, 3
      %p162 = por %p160, %p161
      %p164 = scmp.ne.s32.totalorder %s149, %s163
      %p165 = scmp.eq.s32.totalorder %s34, 0
      %p166 = por %p164, %p165
      %s168 = sadd.s32 %s167, 1
      %p171 = scmp.eq.s32.totalorder %s28, 3
      %p172 = scmp.ne.s32.totalorder %s167, %s169
      %p173 = scmp.eq.s32.totalorder %s28, 0
      %p174 = por %p172, %p173
      %p175 = scmp.ne.s32.totalorder %s167, %s169
      %p176 = scmp.eq.s32.totalorder %s33, 3
      %p177 = por %p175, %p176
      %p178 = scmp.ne.s32.totalorder %s169, %s170
      %p179 = scmp.eq.s32.totalorder %s33, 0
      %p180 = por %p178, %p179
      %p181 = scmp.ne.s32.totalorder %s169, %s170
      %p182 = scmp.eq.s32.totalorder %s34, 3
      %p183 = por %p181, %p182
      %p185 = scmp.ne.s32.totalorder %s170, %s184
      %p186 = scmp.eq.s32.totalorder %s34, 0
      %p187 = por %p185, %p186
      %s189 = sadd.s32 %s188, 1
      %p192 = scmp.eq.s32.totalorder %s28, 3
      %p193 = scmp.ne.s32.totalorder %s188, %s190
      %p194 = scmp.eq.s32.totalorder %s28, 0
      %p195 = por %p193, %p194
      %p196 = scmp.ne.s32.totalorder %s188, %s190
      %p197 = scmp.eq.s32.totalorder %s33, 3
      %p198 = por %p196, %p197
      %p199 = scmp.ne.s32.totalorder %s190, %s191
      %p200 = scmp.eq.s32.totalorder %s33, 0
      %p201 = por %p199, %p200
      %p202 = scmp.ne.s32.totalorder %s190, %s191
      %p203 = scmp.eq.s32.totalorder %s34, 3
      %p204 = por %p202, %p203
      %p206 = scmp.ne.s32.totalorder %s191, %s205
      %p207 = scmp.eq.s32.totalorder %s34, 0
      %p208 = por %p206, %p207
      %s210 = sadd.s32 %s209, 1
      %p213 = scmp.eq.s32.totalorder %s28, 3
      %p214 = scmp.ne.s32.totalorder %s209, %s211
      %p215 = scmp.eq.s32.totalorder %s28, 0
      %p216 = por %p214, %p215
      %p217 = scmp.ne.s32.totalorder %s209, %s211
      %p218 = scmp.eq.s32.totalorder %s33, 3
      %p219 = por %p217, %p218
      %p220 = scmp.ne.s32.totalorder %s211, %s212
      %p221 = scmp.eq.s32.totalorder %s33, 0
      %p222 = por %p220, %p221
      %p223 = scmp.ne.s32.totalorder %s211, %s212
      %p224 = scmp.eq.s32.totalorder %s34, 3
      %p225 = por %p223, %p224
      %p227 = scmp.ne.s32.totalorder %s212, %s226
      %p228 = scmp.eq.s32.totalorder %s34, 0
      %p229 = por %p227, %p228
      %s231 = sadd.s32 %s230, 1
      %p234 = scmp.eq.s32.totalorder %s28, 3
      %p235 = scmp.ne.s32.totalorder %s230, %s232
      %p236 = scmp.eq.s32.totalorder %s28, 0
      %p237 = por %p235, %p236
      %p238 = scmp.ne.s32.totalorder %s230, %s232
      %p239 = scmp.eq.s32.totalorder %s33, 3
      %p240 = por %p238, %p239
      %p241 = scmp.ne.s32.totalorder %s232, %s233
      %p242 = scmp.eq.s32.totalorder %s33, 0
      %p243 = por %p241, %p242
      %p244 = scmp.ne.s32.totalorder %s232, %s233
      %p245 = scmp.eq.s32.totalorder %s34, 3
      %p246 = por %p244, %p245
      %p248 = scmp.ne.s32.totalorder %s233, %s247
      %p249 = scmp.eq.s32.totalorder %s34, 0
      %p250 = por %p248, %p249
      %s252 = sadd.s32 %s251, 1
      %p255 = scmp.eq.s32.totalorder %s28, 3
      %p256 = scmp.ne.s32.totalorder %s251, %s253
      %p257 = scmp.eq.s32.totalorder %s28, 0
      %p258 = por %p256, %p257
      %p259 = scmp.ne.s32.totalorder %s251, %s253
      %p260 = scmp.eq.s32.totalorder %s33, 3
      %p261 = por %p259, %p260
      %p262 = scmp.ne.s32.totalorder %s253, %s254
      %p263 = scmp.eq.s32.totalorder %s33, 0
      %p264 = por %p262, %p263
      %p265 = scmp.ne.s32.totalorder %s253, %s254
      %p266 = scmp.eq.s32.totalorder %s34, 3
      %p267 = por %p265, %p266
      %p269 = scmp.ne.s32.totalorder %s254, %s268
      %p270 = scmp.eq.s32.totalorder %s34, 0
      %p271 = por %p269, %p270
      %s272 = ssub.s32 %s28, %s35
      %p273 = scmp.eq.s32.totalorder %s272, 0
      %s275 = sadd.s32 %s274, 1
      %s276 = scalar_select %p273, %s274, %s275
      %p279 = pneg %p273
      %p280 = scmp.eq.s32.totalorder %s28, 3
      %p281 = por %p279, %p280
      %p282 = scmp.ne.s32.totalorder %s274, %s277
      %p283 = scmp.eq.s32.totalorder %s28, 0
      %p284 = por %p282, %p283
      %p285 = scmp.ne.s32.totalorder %s274, %s277
      %p286 = scmp.eq.s32.totalorder %s33, 3
      %p287 = por %p285, %p286
      %p288 = scmp.ne.s32.totalorder %s277, %s278
      %p289 = scmp.eq.s32.totalorder %s33, 0
      %p290 = por %p288, %p289
      %p291 = scmp.ne.s32.totalorder %s277, %s278
      %p292 = scmp.eq.s32.totalorder %s34, 3
      %p293 = por %p291, %p292
      %p295 = scmp.ne.s32.totalorder %s278, %s294
      %p296 = scmp.eq.s32.totalorder %s34, 0
      %p297 = por %p295, %p296
      %p298 = scmp.le.s32.totalorder 1, %s28
      %p299 = scmp.lt.s32.totalorder %s28, 5
      %p300 = pnand %p298, %p299
      %p301 = pneg %p300
      // Predicated region
      $region9: #{tpu_custom_call.1} parent=5 // pred_check
        _
      $region10: #{tpu_custom_call.1} parent=5 // pred_check_branch
        %303 = sbr.rel (%p300) target = $region12
      $region11: #{tpu_custom_call.1} parent=5 // pred_region
        %s304 = ssub.s32 %s28, 1
        // Predicated region
        $region13: #{tpu_custom_call.1} parent=11 // pred_check
          %p305 = pneg %p75
        $region14: #{tpu_custom_call.1} parent=11 // pred_check_branch
          %307 = sbr.rel (%p305) target = $region16
        $region15: #{tpu_custom_call.1} parent=11 // pred_region
          %s309 = ssub.s32 256, 256
          %310 = vsyncadd [#allocation6], %s309
          %s311 = sshll.u32 [#allocation5], 4
          %s312 = int_to_ptr.vmem [resolvable:$true] %s311
          %317 = dma.hbm_to_vmem [thread:$0]  %s1, 256, %s312, [#allocation6], 128, 128, 8
        $region16: #{tpu_custom_call.1} parent=11 // pred_fallthru
          _
        // Predicated region
        $region17: #{tpu_custom_call.1} parent=11 // pred_check
          %p318 = pneg %p96
        $region18: #{tpu_custom_call.1} parent=11 // pred_check_branch
          %320 = sbr.rel (%p318) target = $region20
        $region19: #{tpu_custom_call.1} parent=11 // pred_region
          %s322 = ssub.s32 16, 16
          %323 = vsyncadd [#allocation6], %s322
          %s325 = sshll.u32 [#allocation7], 4
          %s326 = int_to_ptr.vmem [resolvable:$true] %s325
          %328 = dma.hbm_to_vmem [thread:$0]  %s2, 16, %s326, [#allocation6]
        $region20: #{tpu_custom_call.1} parent=11 // pred_fallthru
          _
        // Predicated region
        $region21: #{tpu_custom_call.1} parent=11 // pred_check
          %p329 = pneg %p117
        $region22: #{tpu_custom_call.1} parent=11 // pred_check_branch
          %331 = sbr.rel (%p329) target = $region24
        $region23: #{tpu_custom_call.1} parent=11 // pred_region
          %s333 = ssub.s32 32, 32
          %334 = vsyncadd [#allocation9], %s333
          %s335 = sshll.u32 [#allocation8], 4
          %s336 = int_to_ptr.vmem [resolvable:$true] %s335
          %341 = dma.hbm_to_vmem [thread:$0]  %s3, 32, %s336, [#allocation9], 16, 16, 1
        $region24: #{tpu_custom_call.1} parent=11 // pred_fallthru
          _
        // Predicated region
        $region25: #{tpu_custom_call.1} parent=11 // pred_check
          %p342 = pneg %p138
        $region26: #{tpu_custom_call.1} parent=11 // pred_check_branch
          %344 = sbr.rel (%p342) target = $region28
        $region27: #{tpu_custom_call.1} parent=11 // pred_region
          %s346 = ssub.s32 32, 32
          %347 = vsyncadd [#allocation9], %s346
          %s348 = sshll.u32 [#allocation10], 4
          %s349 = int_to_ptr.vmem [resolvable:$true] %s348
          %354 = dma.hbm_to_vmem [thread:$0]  %s4, 32, %s349, [#allocation9], 16, 16, 1
        $region28: #{tpu_custom_call.1} parent=11 // pred_fallthru
          _
        // Predicated region
        $region29: #{tpu_custom_call.1} parent=11 // pred_check
          %p355 = pneg %p159
        $region30: #{tpu_custom_call.1} parent=11 // pred_check_branch
          %357 = sbr.rel (%p355) target = $region32
        $region31: #{tpu_custom_call.1} parent=11 // pred_region
          %s359 = ssub.s32 4096, 4096
          %360 = vsyncadd [#allocation12], %s359
          %s361 = sshll.u32 [#allocation11], 4
          %s362 = int_to_ptr.vmem [resolvable:$true] %s361
          %367 = dma.hbm_to_vmem [thread:$0]  %s5, 4096, %s362, [#allocation12], 128, 128, 8
        $region32: #{tpu_custom_call.1} parent=11 // pred_fallthru
          _
        // Predicated region
        $region33: #{tpu_custom_call.1} parent=11 // pred_check
          %p368 = pneg %p180
        $region34: #{tpu_custom_call.1} parent=11 // pred_check_branch
          %370 = sbr.rel (%p368) target = $region36
        $region35: #{tpu_custom_call.1} parent=11 // pred_region
          %s372 = ssub.s32 32, 32
          %373 = vsyncadd [#allocation12], %s372
          %s374 = sshll.u32 [#allocation13], 4
          %s375 = int_to_ptr.vmem [resolvable:$true] %s374
          %380 = dma.hbm_to_vmem [thread:$0]  %s6, 32, %s375, [#allocation12], 16, 16, 1
        $region36: #{tpu_custom_call.1} parent=11 // pred_fallthru
          _
        // Predicated region
        $region37: #{tpu_custom_call.1} parent=11 // pred_check
          %p381 = pneg %p201
        $region38: #{tpu_custom_call.1} parent=11 // pred_check_branch
          %383 = sbr.rel (%p381) target = $region40
        $region39: #{tpu_custom_call.1} parent=11 // pred_region
          %s385 = ssub.s32 4096, 4096
          %386 = vsyncadd [#allocation15], %s385
          %s387 = sshll.u32 [#allocation14], 4
          %s388 = int_to_ptr.vmem [resolvable:$true] %s387
          %393 = dma.hbm_to_vmem [thread:$0]  %s7, 4096, %s388, [#allocation15], 128, 128, 8
        $region40: #{tpu_custom_call.1} parent=11 // pred_fallthru
          _
        // Predicated region
        $region41: #{tpu_custom_call.1} parent=11 // pred_check
          %p394 = pneg %p222
        $region42: #{tpu_custom_call.1} parent=11 // pred_check_branch
          %396 = sbr.rel (%p394) target = $region44
        $region43: #{tpu_custom_call.1} parent=11 // pred_region
          %s398 = ssub.s32 32, 32
          %399 = vsyncadd [#allocation15], %s398
          %s400 = sshll.u32 [#allocation16], 4
          %s401 = int_to_ptr.vmem [resolvable:$true] %s400
          %406 = dma.hbm_to_vmem [thread:$0]  %s8, 32, %s401, [#allocation15], 16, 16, 1
        $region44: #{tpu_custom_call.1} parent=11 // pred_fallthru
          _
        // Predicated region
        $region45: #{tpu_custom_call.1} parent=11 // pred_check
          %p407 = pneg %p243
        $region46: #{tpu_custom_call.1} parent=11 // pred_check_branch
          %409 = sbr.rel (%p407) target = $region48
        $region47: #{tpu_custom_call.1} parent=11 // pred_region
          %s411 = ssub.s32 16, 16
          %412 = vsyncadd [#allocation18], %s411
          %s414 = sshll.u32 [#allocation17], 4
          %s415 = int_to_ptr.vmem [resolvable:$true] %s414
          %417 = dma.hbm_to_vmem [thread:$0]  %s9, 16, %s415, [#allocation18]
        $region48: #{tpu_custom_call.1} parent=11 // pred_fallthru
          _
        // Predicated region
        $region49: #{tpu_custom_call.1} parent=11 // pred_check
          %p418 = pneg %p264
        $region50: #{tpu_custom_call.1} parent=11 // pred_check_branch
          %420 = sbr.rel (%p418) target = $region52
        $region51: #{tpu_custom_call.1} parent=11 // pred_region
          %s422 = ssub.s32 16, 16
          %423 = vsyncadd [#allocation18], %s422
          %s425 = sshll.u32 [#allocation19], 4
          %s426 = int_to_ptr.vmem [resolvable:$true] %s425
          %428 = dma.hbm_to_vmem [thread:$0]  %s10, 16, %s426, [#allocation18]
        $region52: #{tpu_custom_call.1} parent=11 // pred_fallthru
          _
      $region12: #{tpu_custom_call.1} parent=5 // pred_fallthru
        _
      %p429 = scmp.lt.s32.totalorder %s28, 4
      // Predicated region
      $region53: #{tpu_custom_call.1} parent=5 // pred_check
        %p430 = pneg %p429
      $region54: #{tpu_custom_call.1} parent=5 // pred_check_branch
        %432 = sbr.rel (%p430) target = $region56
      $region55: #{tpu_custom_call.1} parent=5 // pred_region
        // Predicated region
        $region57: #{tpu_custom_call.1} parent=55 // pred_check
          %p433 = pneg %p48
        $region58: #{tpu_custom_call.1} parent=55 // pred_check_branch
          %435 = sbr.rel (%p433) target = $region60
        $region59: #{tpu_custom_call.1} parent=55 // pred_region
          %s436 = sand.u32 %s38, 1
          %s437 = scalar_lea.sflag [#allocation3], %s436
          %s438 = sand.u32 %s38, 1
          %s439 = smul.addr %s438, 64
          %s440 = scalar_lea.vmem [#allocation2], %s439
          %s441 = smul.u32 8, %s28
          %s442 = ssub.s32 25, %s441
          %p443 = scmp.lt.s32.totalorder %s442, 8
          %s444 = scalar_select %p443, %s442, 8
          %s445 = smul.u32 128, %s444
          %s447 = ssub.s32 1024, %s445
          %448 = vsyncadd %s437, %s447
          %p449 = scmp.ne.s32.totalorder 0, %s445
          %s450 = smul.addr %s441, 128
          %s451 = scalar_lea.hbm %s0, %s450
          %s452 = smul.u32 8, %s444
          %s453 = sshll.u32 %s440, 4
          %s454 = int_to_ptr.vmem [resolvable:$true] %s453
          %s455 = sshll.u32 %s452, 4
          %459 = dma.hbm_to_vmem [thread:$0]  (%p449), %s451, %s455, %s454, %s437, 128, 128, 8
        $region60: #{tpu_custom_call.1} parent=55 // pred_fallthru
          _
      $region56: #{tpu_custom_call.1} parent=5 // pred_fallthru
        _
      %p460 = scmp.le.s32.totalorder 1, %s28
      %p461 = scmp.lt.s32.totalorder %s28, 5
      %p462 = pnand %p460, %p461
      %p463 = pneg %p462
      // Predicated region
      $region61: #{tpu_custom_call.1} parent=5 // pred_check
        _
      $region62: #{tpu_custom_call.1} parent=5 // pred_check_branch
        %465 = sbr.rel (%p462) target = $region64
      $region63: #{tpu_custom_call.1} parent=5 // pred_region
        %s466 = ssub.s32 %s28, 1
        %s467 = sand.u32 %s41, 1
        %s468 = scalar_lea.sflag [#allocation3], %s467
        %s469 = sand.u32 %s41, 1
        %s470 = smul.addr %s469, 64
        %s471 = scalar_lea.vmem [#allocation2], %s470
        // Predicated region
        $region65: #{tpu_custom_call.1} parent=63 // pred_check
          %p472 = pneg %p54
        $region66: #{tpu_custom_call.1} parent=63 // pred_check_branch
          %474 = sbr.rel (%p472) target = $region68
        $region67: #{tpu_custom_call.1} parent=63 // pred_region
          %475 = dma.done %s468, 1024
        $region68: #{tpu_custom_call.1} parent=63 // pred_fallthru
          _
        // Predicated region
        $region69: #{tpu_custom_call.1} parent=63 // pred_check
          %p476 = pneg %p75
        $region70: #{tpu_custom_call.1} parent=63 // pred_check_branch
          %478 = sbr.rel (%p476) target = $region72
        $region71: #{tpu_custom_call.1} parent=63 // pred_region
          %479 = dma.done [#allocation6], 256
        $region72: #{tpu_custom_call.1} parent=63 // pred_fallthru
          _
        // Predicated region
        $region73: #{tpu_custom_call.1} parent=63 // pred_check
          %p480 = pneg %p96
        $region74: #{tpu_custom_call.1} parent=63 // pred_check_branch
          %482 = sbr.rel (%p480) target = $region76
        $region75: #{tpu_custom_call.1} parent=63 // pred_region
          %483 = dma.done [#allocation6], 16
        $region76: #{tpu_custom_call.1} parent=63 // pred_fallthru
          _
        // Predicated region
        $region77: #{tpu_custom_call.1} parent=63 // pred_check
          %p484 = pneg %p117
        $region78: #{tpu_custom_call.1} parent=63 // pred_check_branch
          %486 = sbr.rel (%p484) target = $region80
        $region79: #{tpu_custom_call.1} parent=63 // pred_region
          %487 = dma.done [#allocation9], 32
        $region80: #{tpu_custom_call.1} parent=63 // pred_fallthru
          _
        // Predicated region
        $region81: #{tpu_custom_call.1} parent=63 // pred_check
          %p488 = pneg %p138
        $region82: #{tpu_custom_call.1} parent=63 // pred_check_branch
          %490 = sbr.rel (%p488) target = $region84
        $region83: #{tpu_custom_call.1} parent=63 // pred_region
          %491 = dma.done [#allocation9], 32
        $region84: #{tpu_custom_call.1} parent=63 // pred_fallthru
          _
        // Predicated region
        $region85: #{tpu_custom_call.1} parent=63 // pred_check
          %p492 = pneg %p159
        $region86: #{tpu_custom_call.1} parent=63 // pred_check_branch
          %494 = sbr.rel (%p492) target = $region88
        $region87: #{tpu_custom_call.1} parent=63 // pred_region
          %495 = dma.done [#allocation12], 4096
        $region88: #{tpu_custom_call.1} parent=63 // pred_fallthru
          _
        // Predicated region
        $region89: #{tpu_custom_call.1} parent=63 // pred_check
          %p496 = pneg %p180
        $region90: #{tpu_custom_call.1} parent=63 // pred_check_branch
          %498 = sbr.rel (%p496) target = $region92
        $region91: #{tpu_custom_call.1} parent=63 // pred_region
          %499 = dma.done [#allocation12], 32
        $region92: #{tpu_custom_call.1} parent=63 // pred_fallthru
          _
        // Predicated region
        $region93: #{tpu_custom_call.1} parent=63 // pred_check
          %p500 = pneg %p201
        $region94: #{tpu_custom_call.1} parent=63 // pred_check_branch
          %502 = sbr.rel (%p500) target = $region96
        $region95: #{tpu_custom_call.1} parent=63 // pred_region
          %503 = dma.done [#allocation15], 4096
        $region96: #{tpu_custom_call.1} parent=63 // pred_fallthru
          _
        // Predicated region
        $region97: #{tpu_custom_call.1} parent=63 // pred_check
          %p504 = pneg %p222
        $region98: #{tpu_custom_call.1} parent=63 // pred_check_branch
          %506 = sbr.rel (%p504) target = $region100
        $region99: #{tpu_custom_call.1} parent=63 // pred_region
          %507 = dma.done [#allocation15], 32
        $region100: #{tpu_custom_call.1} parent=63 // pred_fallthru
          _
        // Predicated region
        $region101: #{tpu_custom_call.1} parent=63 // pred_check
          %p508 = pneg %p243
        $region102: #{tpu_custom_call.1} parent=63 // pred_check_branch
          %510 = sbr.rel (%p508) target = $region104
        $region103: #{tpu_custom_call.1} parent=63 // pred_region
          %511 = dma.done [#allocation18], 16
        $region104: #{tpu_custom_call.1} parent=63 // pred_fallthru
          _
        // Predicated region
        $region105: #{tpu_custom_call.1} parent=63 // pred_check
          %p512 = pneg %p264
        $region106: #{tpu_custom_call.1} parent=63 // pred_check_branch
          %514 = sbr.rel (%p512) target = $region108
        $region107: #{tpu_custom_call.1} parent=63 // pred_region
          %515 = dma.done [#allocation18], 16
        $region108: #{tpu_custom_call.1} parent=63 // pred_fallthru
          _
        %s516 = sand.u32 %s41, 1
        %s517 = scalar_lea.sflag [#allocation3], %s516
        %s518 = sand.u32 %s41, 1
        %s519 = smul.addr %s518, 64
        %s520 = scalar_lea.vmem [#allocation2], %s519
        %p521 = pneg %p54
        %p522 = pneg %p51
        %p523 = pneg %p75
        %p524 = pneg %p72
        %p525 = pneg %p96
        %p526 = pneg %p93
        %p527 = pneg %p117
        %p528 = pneg %p114
        %p529 = pneg %p138
        %p530 = pneg %p135
        %p531 = pneg %p159
        %p532 = pneg %p156
        %p533 = pneg %p180
        %p534 = pneg %p177
        %p535 = pneg %p201
        %p536 = pneg %p198
        %p537 = pneg %p222
        %p538 = pneg %p219
        %p539 = pneg %p243
        %p540 = pneg %p240
        %p541 = pneg %p264
        %p542 = pneg %p261
        %p543 = pneg %p290
        %p544 = pneg %p287
        %s545 = sand.u32 %s277, 1
        %s546 = scalar_lea.sflag [#allocation4], %s545
        %s547 = sand.u32 %s277, 1
        %s548 = smul.addr %s547, 64
        %s549 = scalar_lea.vmem [#allocation20], %s548
        %s550 = smul.u32 8, %s33
        %s551 = ssub.s32 25, %s550
        %p552 = scmp.lt.s32.totalorder %s551, 8
        %s553 = scalar_select %p552, %s551, 8
        %s554 = smul.u32 128, %s553
        %s555 = smul.u32 8, %s33
        %s556 = ssub.s32 25, %s555
        %p557 = scmp.lt.s32.totalorder %s556, 8
        %s558 = scalar_select %p557, %s556, 8
        %s559 = smul.u32 128, %s558
        %v560 = vld [vmem:[%s471] sm:$0xff]
        %v561 = vld [vmem:[%s471 + $0x8] sm:$0xff]
        %v562 = vld [vmem:[%s471 + $0x10] sm:$0xff]
        %v563 = vld [vmem:[%s471 + $0x18] sm:$0xff]
        %v564 = vld [vmem:[%s471 + $0x20] sm:$0xff]
        %v565 = vld [vmem:[%s471 + $0x28] sm:$0xff]
        %v566 = vld [vmem:[%s471 + $0x30] sm:$0xff]
        %v567 = vld [vmem:[%s471 + $0x38] sm:$0xff]
        %v568 = vld [vmem:[#allocation5] sm:$0xff]
        %v569 = vld [vmem:[#allocation5 + $0x8] sm:$0xff]
        %v570 = vld [vmem:[#allocation7] sm:$0x1]
        %v572 = vlaneseq
        %v573 = vshrl.u32 %v572, 7
        %v574 = vsub.s32 0, %v573
        %v575 = vrot.slane %v570, %v574
        %vm577 = vcmask 130048
        %v579 = vsel %vm577, %v560, 0
        %v582 = vsel %vm577, %v561, 0
        %v585 = vsel %vm577, %v562, 0
        %v588 = vsel %vm577, %v563, 0
        %v591 = vsel %vm577, %v564, 0
        %v594 = vsel %vm577, %v565, 0
        %v597 = vsel %vm577, %v566, 0
        %v600 = vsel %vm577, %v567, 0
        %602 = vmatprep.subr.mxu0 0.0
        %603 = vmatpush1.msra.mxu0 %v568
        %604 = vmatprep.subr.mxu0 0.0
        %605 = vmatpush1.msra.mxu0 %v569
        %606 = vmatprep.subr.mxu0 0.0
        %607 = vmatpush1.msra.mxu0 0.0
        %608 = vmatprep.subr.mxu0 0.0
        %609 = vmatpush1.msra.mxu0 0.0
        %610 = vmatprep.subr.mxu0 0.0
        %611 = vmatpush1.msra.mxu0 0.0
        %612 = vmatprep.subr.mxu0 0.0
        %613 = vmatpush1.msra.mxu0 0.0
        %614 = vmatprep.subr.mxu0 0.0
        %615 = vmatpush1.msra.mxu0 0.0
        %616 = vmatprep.subr.mxu0 0.0
        %617 = vmatpush1.msra.mxu0 0.0
        %618 = vmatprep.subr.mxu0 0.0
        %619 = vmatpush1.msra.mxu0 0.0
        %620 = vmatprep.subr.mxu0 0.0
        %621 = vmatpush1.msra.mxu0 0.0
        %622 = vmatprep.subr.mxu0 0.0
        %623 = vmatpush1.msra.mxu0 0.0
        %624 = vmatprep.subr.mxu0 0.0
        %625 = vmatpush1.msra.mxu0 0.0
        %626 = vmatprep.subr.mxu0 0.0
        %627 = vmatpush1.msra.mxu0 0.0
        %628 = vmatprep.subr.mxu0 0.0
        %629 = vmatpush1.msra.mxu0 0.0
        %630 = vmatprep.subr.mxu0 0.0
        %631 = vmatpush1.msra.mxu0 0.0
        %632 = vmatprep.subr.mxu0 0.0
        %633 = vmatpush1.msra.mxu0 0.0
        %634 = vmatprep.subr.mxu0 0.0
        %635 = vmatpush1.msra.mxu0 0.0
        %636 = vmatprep.subr.mxu0 0.0
        %637 = vmatpush1.msra.mxu0 0.0
        %638 = vmatprep.subr.mxu0 0.0
        %639 = vmatpush1.msra.mxu0 0.0
        %640 = vmatprep.subr.mxu0 0.0
        %641 = vmatpush1.msra.mxu0 0.0
        %642 = vmatprep.subr.mxu0 0.0
        %643 = vmatpush1.msra.mxu0 0.0
        %644 = vmatprep.subr.mxu0 0.0
        %645 = vmatpush1.msra.mxu0 0.0
        %646 = vmatprep.subr.mxu0 0.0
        %647 = vmatpush1.msra.mxu0 0.0
        %648 = vmatprep.subr.mxu0 0.0
        %649 = vmatpush1.msra.mxu0 0.0
        %650 = vmatprep.subr.mxu0 0.0
        %651 = vmatpush1.msra.mxu0 0.0
        %652 = vmatprep.subr.mxu0 0.0
        %653 = vmatpush1.msra.mxu0 0.0
        %654 = vmatprep.subr.mxu0 0.0
        %655 = vmatpush1.msra.mxu0 0.0
        %656 = vmatprep.subr.mxu0 0.0
        %657 = vmatpush1.msra.mxu0 0.0
        %658 = vmatprep.subr.mxu0 0.0
        %659 = vmatpush1.msra.mxu0 0.0
        %660 = vmatprep.subr.mxu0 0.0
        %661 = vmatpush1.msra.mxu0 0.0
        %662 = vmatprep.subr.mxu0 0.0
        %663 = vmatpush1.msra.mxu0 0.0
        %664 = vmatprep.subr.mxu0 0.0
        %665 = vmatpush1.msra.mxu0 0.0
        %666 = vmatprep.mubr.f32.mxu0 0.0
        %667 = vmatmul.mubr.f32.gmra.mrb[0].mxu0 %v579
        %v668 = vpop.f32.mrb[0].mxu0
        %v669 = vadd.f32 %v575, %v668
        %v670 = vpop.f32.mrb[0].mxu0
        %671 = vmatprep.mubr.f32.mxu0 0.0
        %672 = vmatmul.mubr.f32.gmra.mrb[0].mxu0 %v582
        %v673 = vpop.f32.mrb[0].mxu0
        %v674 = vadd.f32 %v575, %v673
        %v675 = vpop.f32.mrb[0].mxu0
        %676 = vmatprep.mubr.f32.mxu0 0.0
        %677 = vmatmul.mubr.f32.gmra.mrb[0].mxu0 %v585
        %v678 = vpop.f32.mrb[0].mxu0
        %v679 = vadd.f32 %v575, %v678
        %v680 = vpop.f32.mrb[0].mxu0
        %681 = vmatprep.mubr.f32.mxu0 0.0
        %682 = vmatmul.mubr.f32.gmra.mrb[0].mxu0 %v588
        %v683 = vpop.f32.mrb[0].mxu0
        %v684 = vadd.f32 %v575, %v683
        %v685 = vpop.f32.mrb[0].mxu0
        %686 = vmatprep.mubr.f32.mxu0 0.0
        %687 = vmatmul.mubr.f32.gmra.mrb[0].mxu0 %v591
        %v688 = vpop.f32.mrb[0].mxu0
        %v689 = vadd.f32 %v575, %v688
        %v690 = vpop.f32.mrb[0].mxu0
        %691 = vmatprep.mubr.f32.mxu0 0.0
        %692 = vmatmul.mubr.f32.gmra.mrb[0].mxu0 %v594
        %v693 = vpop.f32.mrb[0].mxu0
        %v694 = vadd.f32 %v575, %v693
        %v695 = vpop.f32.mrb[0].mxu0
        %696 = vmatprep.mubr.f32.mxu0 0.0
        %697 = vmatmul.mubr.f32.gmra.mrb[0].mxu0 %v597
        %v698 = vpop.f32.mrb[0].mxu0
        %v699 = vadd.f32 %v575, %v698
        %v700 = vpop.f32.mrb[0].mxu0
        %701 = vmatprep.mubr.f32.mxu0 0.0
        %702 = vmatmul.mubr.f32.gmra.mrb[0].mxu0 %v600
        %v703 = vpop.f32.mrb[0].mxu0
        %v704 = vadd.f32 %v575, %v703
        %v705 = vpop.f32.mrb[0].mxu0
        %706 = vdwg.mxu0
        %v707 = vld [vmem:[#allocation8] sm:$0x1]
        %v708 = vld [vmem:[#allocation10] sm:$0x1]
        %709 = vadd.xlane.f32.xlu0 %v669
        %v710 = vpop.xlane.xlu0 %709
        %711 = vadd.xlane.f32.xlu0 %v674
        %v712 = vpop.xlane.xlu0 %711
        %713 = vadd.xlane.f32.xlu0 %v679
        %v714 = vpop.xlane.xlu0 %713
        %715 = vadd.xlane.f32.xlu0 %v684
        %v716 = vpop.xlane.xlu0 %715
        %717 = vadd.xlane.f32.xlu0 %v689
        %v718 = vpop.xlane.xlu0 %717
        %719 = vadd.xlane.f32.xlu0 %v694
        %v720 = vpop.xlane.xlu0 %719
        %721 = vadd.xlane.f32.xlu0 %v699
        %v722 = vpop.xlane.xlu0 %721
        %723 = vadd.xlane.f32.xlu0 %v704
        %v724 = vpop.xlane.xlu0 %723
        %v725 = vmul.f32 %v710, 0.03125
        %v726 = vmul.f32 %v712, 0.03125
        %v727 = vmul.f32 %v714, 0.03125
        %v728 = vmul.f32 %v716, 0.03125
        %v729 = vmul.f32 %v718, 0.03125
        %v730 = vmul.f32 %v720, 0.03125
        %v731 = vmul.f32 %v722, 0.03125
        %v732 = vmul.f32 %v724, 0.03125
        %v733 = vmul.f32 %v669, %v669
        %v734 = vmul.f32 %v674, %v674
        %v735 = vmul.f32 %v679, %v679
        %v736 = vmul.f32 %v684, %v684
        %v737 = vmul.f32 %v689, %v689
        %v738 = vmul.f32 %v694, %v694
        %v739 = vmul.f32 %v699, %v699
        %v740 = vmul.f32 %v704, %v704
        %741 = vadd.xlane.f32.xlu0 %v733
        %v742 = vpop.xlane.xlu0 %741
        %743 = vadd.xlane.f32.xlu0 %v734
        %v744 = vpop.xlane.xlu0 %743
        %745 = vadd.xlane.f32.xlu0 %v735
        %v746 = vpop.xlane.xlu0 %745
        %747 = vadd.xlane.f32.xlu0 %v736
        %v748 = vpop.xlane.xlu0 %747
        %749 = vadd.xlane.f32.xlu0 %v737
        %v750 = vpop.xlane.xlu0 %749
        %751 = vadd.xlane.f32.xlu0 %v738
        %v752 = vpop.xlane.xlu0 %751
        %753 = vadd.xlane.f32.xlu0 %v739
        %v754 = vpop.xlane.xlu0 %753
        %755 = vadd.xlane.f32.xlu0 %v740
        %v756 = vpop.xlane.xlu0 %755
        %v757 = vmul.f32 %v742, 0.03125
        %v758 = vmul.f32 %v744, 0.03125
        %v759 = vmul.f32 %v746, 0.03125
        %v760 = vmul.f32 %v748, 0.03125
        %v761 = vmul.f32 %v750, 0.03125
        %v762 = vmul.f32 %v752, 0.03125
        %v763 = vmul.f32 %v754, 0.03125
        %v764 = vmul.f32 %v756, 0.03125
        %v765 = vmul.f32 %v725, %v725
        %v766 = vmul.f32 %v726, %v726
        %v767 = vmul.f32 %v727, %v727
        %v768 = vmul.f32 %v728, %v728
        %v769 = vmul.f32 %v729, %v729
        %v770 = vmul.f32 %v730, %v730
        %v771 = vmul.f32 %v731, %v731
        %v772 = vmul.f32 %v732, %v732
        %v773 = vsub.f32 %v757, %v765
        %v774 = vsub.f32 %v758, %v766
        %v775 = vsub.f32 %v759, %v767
        %v776 = vsub.f32 %v760, %v768
        %v777 = vsub.f32 %v761, %v769
        %v778 = vsub.f32 %v762, %v770
        %v779 = vsub.f32 %v763, %v771
        %v780 = vsub.f32 %v764, %v772
        %v781 = vmax.f32 %v773, 0.0
        %v782 = vmax.f32 %v774, 0.0
        %v783 = vmax.f32 %v775, 0.0
        %v784 = vmax.f32 %v776, 0.0
        %v785 = vmax.f32 %v777, 0.0
        %v786 = vmax.f32 %v778, 0.0
        %v787 = vmax.f32 %v779, 0.0
        %v788 = vmax.f32 %v780, 0.0
        %v789 = vsub.f32 %v669, %v725
        %v790 = vsub.f32 %v674, %v726
        %v791 = vsub.f32 %v679, %v727
        %v792 = vsub.f32 %v684, %v728
        %v793 = vsub.f32 %v689, %v729
        %v794 = vsub.f32 %v694, %v730
        %v795 = vsub.f32 %v699, %v731
        %v796 = vsub.f32 %v704, %v732
        %v797 = vadd.f32 %v781, 1e-05
        %v798 = vadd.f32 %v782, 1e-05
        %v799 = vadd.f32 %v783, 1e-05
        %v800 = vadd.f32 %v784, 1e-05
        %v801 = vadd.f32 %v785, 1e-05
        %v802 = vadd.f32 %v786, 1e-05
        %v803 = vadd.f32 %v787, 1e-05
        %v804 = vadd.f32 %v788, 1e-05
        %v805 = vrsqrt.pop %v797
        %v806 = vrsqrt.pop %v798
        %v807 = vrsqrt.pop %v799
        %v808 = vrsqrt.pop %v800
        %v809 = vrsqrt.pop %v801
        %v810 = vrsqrt.pop %v802
        %v811 = vrsqrt.pop %v803
        %v812 = vrsqrt.pop %v804
        %v813 = vmul.f32 %v789, %v805
        %v814 = vmul.f32 %v790, %v806
        %v815 = vmul.f32 %v791, %v807
        %v816 = vmul.f32 %v792, %v808
        %v817 = vmul.f32 %v793, %v809
        %v818 = vmul.f32 %v794, %v810
        %v819 = vmul.f32 %v795, %v811
        %v820 = vmul.f32 %v796, %v812
        %v822 = vlaneseq
        %v823 = vshrl.u32 %v822, 7
        %v824 = vsub.s32 0, %v823
        %v825 = vrot.slane %v707, %v824
        %v827 = vmul.f32 %v813, %v825
        %v828 = vmul.f32 %v814, %v825
        %v829 = vmul.f32 %v815, %v825
        %v830 = vmul.f32 %v816, %v825
        %v831 = vmul.f32 %v817, %v825
        %v832 = vmul.f32 %v818, %v825
        %v833 = vmul.f32 %v819, %v825
        %v834 = vmul.f32 %v820, %v825
        %v836 = vlaneseq
        %v837 = vshrl.u32 %v836, 7
        %v838 = vsub.s32 0, %v837
        %v839 = vrot.slane %v708, %v838
        %v841 = vadd.f32 %v827, %v839
        %v842 = vadd.f32 %v828, %v839
        %v843 = vadd.f32 %v829, %v839
        %v844 = vadd.f32 %v830, %v839
        %v845 = vadd.f32 %v831, %v839
        %v846 = vadd.f32 %v832, %v839
        %v847 = vadd.f32 %v833, %v839
        %v848 = vadd.f32 %v834, %v839
        %v849 = vld [vmem:[#allocation11] sm:$0xff]
        %v850 = vld [vmem:[#allocation11 + $0x8] sm:$0xff]
        %v851 = vld [vmem:[#allocation11 + $0x10] sm:$0xff]
        %v852 = vld [vmem:[#allocation11 + $0x18] sm:$0xff]
        %v853 = vld [vmem:[#allocation11 + $0x20] sm:$0xff]
        %v854 = vld [vmem:[#allocation11 + $0x28] sm:$0xff]
        %v855 = vld [vmem:[#allocation11 + $0x30] sm:$0xff]
        %v856 = vld [vmem:[#allocation11 + $0x38] sm:$0xff]
        %v857 = vld [vmem:[#allocation11 + $0x40] sm:$0xff]
        %v858 = vld [vmem:[#allocation11 + $0x48] sm:$0xff]
        %v859 = vld [vmem:[#allocation11 + $0x50] sm:$0xff]
        %v860 = vld [vmem:[#allocation11 + $0x58] sm:$0xff]
        %v861 = vld [vmem:[#allocation11 + $0x60] sm:$0xff]
        %v862 = vld [vmem:[#allocation11 + $0x68] sm:$0xff]
        %v863 = vld [vmem:[#allocation11 + $0x70] sm:$0xff]
        %v864 = vld [vmem:[#allocation11 + $0x78] sm:$0xff]
        %v865 = vld [vmem:[#allocation13] sm:$0x1]
        %v867 = vlaneseq
        %v868 = vshrl.u32 %v867, 7
        %v869 = vsub.s32 0, %v868
        %v870 = vrot.slane %v865, %v869
        %872 = vmatprep.subr.mxu0 0.0
        %873 = vmatpush1.msra.mxu0 %v849
        %874 = vmatprep.subr.mxu0 0.0
        %875 = vmatpush1.msra.mxu0 %v850
        %876 = vmatprep.subr.mxu0 0.0
        %877 = vmatpush1.msra.mxu0 %v851
        %878 = vmatprep.subr.mxu0 0.0
        %879 = vmatpush1.msra.mxu0 %v852
        %880 = vmatprep.subr.mxu0 0.0
        %881 = vmatpush1.msra.mxu0 %v853
        %882 = vmatprep.subr.mxu0 0.0
        %883 = vmatpush1.msra.mxu0 %v854
        %884 = vmatprep.subr.mxu0 0.0
        %885 = vmatpush1.msra.mxu0 %v855
        %886 = vmatprep.subr.mxu0 0.0
        %887 = vmatpush1.msra.mxu0 %v856
        %888 = vmatprep.subr.mxu0 0.0
        %889 = vmatpush1.msra.mxu0 %v857
        %890 = vmatprep.subr.mxu0 0.0
        %891 = vmatpush1.msra.mxu0 %v858
        %892 = vmatprep.subr.mxu0 0.0
        %893 = vmatpush1.msra.mxu0 %v859
        %894 = vmatprep.subr.mxu0 0.0
        %895 = vmatpush1.msra.mxu0 %v860
        %896 = vmatprep.subr.mxu0 0.0
        %897 = vmatpush1.msra.mxu0 %v861
        %898 = vmatprep.subr.mxu0 0.0
        %899 = vmatpush1.msra.mxu0 %v862
        %900 = vmatprep.subr.mxu0 0.0
        %901 = vmatpush1.msra.mxu0 %v863
        %902 = vmatprep.subr.mxu0 0.0
        %903 = vmatpush1.msra.mxu0 %v864
        %904 = vmatprep.subr.mxu0 0.0
        %905 = vmatpush1.msra.mxu0 0.0
        %906 = vmatprep.subr.mxu0 0.0
        %907 = vmatpush1.msra.mxu0 0.0
        %908 = vmatprep.subr.mxu0 0.0
        %909 = vmatpush1.msra.mxu0 0.0
        %910 = vmatprep.subr.mxu0 0.0
        %911 = vmatpush1.msra.mxu0 0.0
        %912 = vmatprep.subr.mxu0 0.0
        %913 = vmatpush1.msra.mxu0 0.0
        %914 = vmatprep.subr.mxu0 0.0
        %915 = vmatpush1.msra.mxu0 0.0
        %916 = vmatprep.subr.mxu0 0.0
        %917 = vmatpush1.msra.mxu0 0.0
        %918 = vmatprep.subr.mxu0 0.0
        %919 = vmatpush1.msra.mxu0 0.0
        %920 = vmatprep.subr.mxu0 0.0
        %921 = vmatpush1.msra.mxu0 0.0
        %922 = vmatprep.subr.mxu0 0.0
        %923 = vmatpush1.msra.mxu0 0.0
        %924 = vmatprep.subr.mxu0 0.0
        %925 = vmatpush1.msra.mxu0 0.0
        %926 = vmatprep.subr.mxu0 0.0
        %927 = vmatpush1.msra.mxu0 0.0
        %928 = vmatprep.subr.mxu0 0.0
        %929 = vmatpush1.msra.mxu0 0.0
        %930 = vmatprep.subr.mxu0 0.0
        %931 = vmatpush1.msra.mxu0 0.0
        %932 = vmatprep.subr.mxu0 0.0
        %933 = vmatpush1.msra.mxu0 0.0
        %934 = vmatprep.subr.mxu0 0.0
        %935 = vmatpush1.msra.mxu0 0.0
        %936 = vmatprep.mubr.f32.mxu0 0.0
        %937 = vmatmul.mubr.f32.gmra.mrb[0].mxu0 %v841
        %v938 = vpop.f32.mrb[0].mxu0
        %v939 = vadd.f32 %v870, %v938
        %v940 = vpop.f32.mrb[0].mxu0
        %941 = vmatprep.mubr.f32.mxu0 0.0
        %942 = vmatmul.mubr.f32.gmra.mrb[0].mxu0 %v842
        %v943 = vpop.f32.mrb[0].mxu0
        %v944 = vadd.f32 %v870, %v943
        %v945 = vpop.f32.mrb[0].mxu0
        %946 = vmatprep.mubr.f32.mxu0 0.0
        %947 = vmatmul.mubr.f32.gmra.mrb[0].mxu0 %v843
        %v948 = vpop.f32.mrb[0].mxu0
        %v949 = vadd.f32 %v870, %v948
        %v950 = vpop.f32.mrb[0].mxu0
        %951 = vmatprep.mubr.f32.mxu0 0.0
        %952 = vmatmul.mubr.f32.gmra.mrb[0].mxu0 %v844
        %v953 = vpop.f32.mrb[0].mxu0
        %v954 = vadd.f32 %v870, %v953
        %v955 = vpop.f32.mrb[0].mxu0
        %956 = vmatprep.mubr.f32.mxu0 0.0
        %957 = vmatmul.mubr.f32.gmra.mrb[0].mxu0 %v845
        %v958 = vpop.f32.mrb[0].mxu0
        %v959 = vadd.f32 %v870, %v958
        %v960 = vpop.f32.mrb[0].mxu0
        %961 = vmatprep.mubr.f32.mxu0 0.0
        %962 = vmatmul.mubr.f32.gmra.mrb[0].mxu0 %v846
        %v963 = vpop.f32.mrb[0].mxu0
        %v964 = vadd.f32 %v870, %v963
        %v965 = vpop.f32.mrb[0].mxu0
        %966 = vmatprep.mubr.f32.mxu0 0.0
        %967 = vmatmul.mubr.f32.gmra.mrb[0].mxu0 %v847
        %v968 = vpop.f32.mrb[0].mxu0
        %v969 = vadd.f32 %v870, %v968
        %v970 = vpop.f32.mrb[0].mxu0
        %971 = vmatprep.mubr.f32.mxu0 0.0
        %972 = vmatmul.mubr.f32.gmra.mrb[0].mxu0 %v848
        %v973 = vpop.f32.mrb[0].mxu0
        %v974 = vadd.f32 %v870, %v973
        %v975 = vpop.f32.mrb[0].mxu0
        %976 = vdwg.mxu0
        %v977 = vmax.f32 %v939, 0.0
        %v978 = vmax.f32 %v944, 0.0
        %v979 = vmax.f32 %v949, 0.0
        %v980 = vmax.f32 %v954, 0.0
        %v981 = vmax.f32 %v959, 0.0
        %v982 = vmax.f32 %v964, 0.0
        %v983 = vmax.f32 %v969, 0.0
        %v984 = vmax.f32 %v974, 0.0
        %v985 = vld [vmem:[#allocation14] sm:$0xff]
        %v986 = vld [vmem:[#allocation14 + $0x8] sm:$0xff]
        %v987 = vld [vmem:[#allocation14 + $0x10] sm:$0xff]
        %v988 = vld [vmem:[#allocation14 + $0x18] sm:$0xff]
        %v989 = vld [vmem:[#allocation14 + $0x20] sm:$0xff]
        %v990 = vld [vmem:[#allocation14 + $0x28] sm:$0xff]
        %v991 = vld [vmem:[#allocation14 + $0x30] sm:$0xff]
        %v992 = vld [vmem:[#allocation14 + $0x38] sm:$0xff]
        %v993 = vld [vmem:[#allocation14 + $0x40] sm:$0xff]
        %v994 = vld [vmem:[#allocation14 + $0x48] sm:$0xff]
        %v995 = vld [vmem:[#allocation14 + $0x50] sm:$0xff]
        %v996 = vld [vmem:[#allocation14 + $0x58] sm:$0xff]
        %v997 = vld [vmem:[#allocation14 + $0x60] sm:$0xff]
        %v998 = vld [vmem:[#allocation14 + $0x68] sm:$0xff]
        %v999 = vld [vmem:[#allocation14 + $0x70] sm:$0xff]
        %v1000 = vld [vmem:[#allocation14 + $0x78] sm:$0xff]
        %1001 = vmatprep.subr.mxu0 0.0
        %1002 = vmatpush1.msra.mxu0 %v985
        %1003 = vmatprep.subr.mxu0 0.0
        %1004 = vmatpush1.msra.mxu0 %v986
        %1005 = vmatprep.subr.mxu0 0.0
        %1006 = vmatpush1.msra.mxu0 %v987
        %1007 = vmatprep.subr.mxu0 0.0
        %1008 = vmatpush1.msra.mxu0 %v988
        %1009 = vmatprep.subr.mxu0 0.0
        %1010 = vmatpush1.msra.mxu0 %v989
        %1011 = vmatprep.subr.mxu0 0.0
        %1012 = vmatpush1.msra.mxu0 %v990
        %1013 = vmatprep.subr.mxu0 0.0
        %1014 = vmatpush1.msra.mxu0 %v991
        %1015 = vmatprep.subr.mxu0 0.0
        %1016 = vmatpush1.msra.mxu0 %v992
        %1017 = vmatprep.subr.mxu0 0.0
        %1018 = vmatpush1.msra.mxu0 %v993
        %1019 = vmatprep.subr.mxu0 0.0
        %1020 = vmatpush1.msra.mxu0 %v994
        %1021 = vmatprep.subr.mxu0 0.0
        %1022 = vmatpush1.msra.mxu0 %v995
        %1023 = vmatprep.subr.mxu0 0.0
        %1024 = vmatpush1.msra.mxu0 %v996
        %1025 = vmatprep.subr.mxu0 0.0
        %1026 = vmatpush1.msra.mxu0 %v997
        %1027 = vmatprep.subr.mxu0 0.0
        %1028 = vmatpush1.msra.mxu0 %v998
        %1029 = vmatprep.subr.mxu0 0.0
        %1030 = vmatpush1.msra.mxu0 %v999
        %1031 = vmatprep.subr.mxu0 0.0
        %1032 = vmatpush1.msra.mxu0 %v1000
        %1033 = vmatprep.subr.mxu0 0.0
        %1034 = vmatpush1.msra.mxu0 0.0
        %1035 = vmatprep.subr.mxu0 0.0
        %1036 = vmatpush1.msra.mxu0 0.0
        %1037 = vmatprep.subr.mxu0 0.0
        %1038 = vmatpush1.msra.mxu0 0.0
        %1039 = vmatprep.subr.mxu0 0.0
        %1040 = vmatpush1.msra.mxu0 0.0
        %1041 = vmatprep.subr.mxu0 0.0
        %1042 = vmatpush1.msra.mxu0 0.0
        %1043 = vmatprep.subr.mxu0 0.0
        %1044 = vmatpush1.msra.mxu0 0.0
        %1045 = vmatprep.subr.mxu0 0.0
        %1046 = vmatpush1.msra.mxu0 0.0
        %1047 = vmatprep.subr.mxu0 0.0
        %1048 = vmatpush1.msra.mxu0 0.0
        %1049 = vmatprep.subr.mxu0 0.0
        %1050 = vmatpush1.msra.mxu0 0.0
        %1051 = vmatprep.subr.mxu0 0.0
        %1052 = vmatpush1.msra.mxu0 0.0
        %1053 = vmatprep.subr.mxu0 0.0
        %1054 = vmatpush1.msra.mxu0 0.0
        %1055 = vmatprep.subr.mxu0 0.0
        %1056 = vmatpush1.msra.mxu0 0.0
        %1057 = vmatprep.subr.mxu0 0.0
        %1058 = vmatpush1.msra.mxu0 0.0
        %1059 = vmatprep.subr.mxu0 0.0
        %1060 = vmatpush1.msra.mxu0 0.0
        %1061 = vmatprep.subr.mxu0 0.0
        %1062 = vmatpush1.msra.mxu0 0.0
        %1063 = vmatprep.subr.mxu0 0.0
        %1064 = vmatpush1.msra.mxu0 0.0
        %1065 = vmatprep.mubr.f32.mxu0 0.0
        %1066 = vmatmul.mubr.f32.gmra.mrb[0].mxu0 %v977
        %v1067 = vpop.f32.mrb[0].mxu0
        %v1068 = vadd.f32 0.0, %v1067
        %v1069 = vpop.f32.mrb[0].mxu0
        %1070 = vmatprep.mubr.f32.mxu0 0.0
        %1071 = vmatmul.mubr.f32.gmra.mrb[0].mxu0 %v978
        %v1072 = vpop.f32.mrb[0].mxu0
        %v1073 = vadd.f32 0.0, %v1072
        %v1074 = vpop.f32.mrb[0].mxu0
        %1075 = vmatprep.mubr.f32.mxu0 0.0
        %1076 = vmatmul.mubr.f32.gmra.mrb[0].mxu0 %v979
        %v1077 = vpop.f32.mrb[0].mxu0
        %v1078 = vadd.f32 0.0, %v1077
        %v1079 = vpop.f32.mrb[0].mxu0
        %1080 = vmatprep.mubr.f32.mxu0 0.0
        %1081 = vmatmul.mubr.f32.gmra.mrb[0].mxu0 %v980
        %v1082 = vpop.f32.mrb[0].mxu0
        %v1083 = vadd.f32 0.0, %v1082
        %v1084 = vpop.f32.mrb[0].mxu0
        %1085 = vmatprep.mubr.f32.mxu0 0.0
        %1086 = vmatmul.mubr.f32.gmra.mrb[0].mxu0 %v981
        %v1087 = vpop.f32.mrb[0].mxu0
        %v1088 = vadd.f32 0.0, %v1087
        %v1089 = vpop.f32.mrb[0].mxu0
        %1090 = vmatprep.mubr.f32.mxu0 0.0
        %1091 = vmatmul.mubr.f32.gmra.mrb[0].mxu0 %v982
        %v1092 = vpop.f32.mrb[0].mxu0
        %v1093 = vadd.f32 0.0, %v1092
        %v1094 = vpop.f32.mrb[0].mxu0
        %1095 = vmatprep.mubr.f32.mxu0 0.0
        %1096 = vmatmul.mubr.f32.gmra.mrb[0].mxu0 %v983
        %v1097 = vpop.f32.mrb[0].mxu0
        %v1098 = vadd.f32 0.0, %v1097
        %v1099 = vpop.f32.mrb[0].mxu0
        %1100 = vmatprep.mubr.f32.mxu0 0.0
        %1101 = vmatmul.mubr.f32.gmra.mrb[0].mxu0 %v984
        %v1102 = vpop.f32.mrb[0].mxu0
        %v1103 = vadd.f32 0.0, %v1102
        %v1104 = vpop.f32.mrb[0].mxu0
        %1105 = vdwg.mxu0
        %v1106 = vadd.f32 %v669, %v1068
        %v1107 = vadd.f32 %v674, %v1073
        %v1108 = vadd.f32 %v679, %v1078
        %v1109 = vadd.f32 %v684, %v1083
        %v1110 = vadd.f32 %v689, %v1088
        %v1111 = vadd.f32 %v694, %v1093
        %v1112 = vadd.f32 %v699, %v1098
        %v1113 = vadd.f32 %v704, %v1103
        %v1114 = vld [vmem:[#allocation16] sm:$0x1]
        %v1116 = vlaneseq
        %v1117 = vshrl.u32 %v1116, 7
        %v1118 = vsub.s32 0, %v1117
        %v1119 = vrot.slane %v1114, %v1118
        %v1121 = vadd.f32 %v1106, %v1119
        %v1122 = vadd.f32 %v1107, %v1119
        %v1123 = vadd.f32 %v1108, %v1119
        %v1124 = vadd.f32 %v1109, %v1119
        %v1125 = vadd.f32 %v1110, %v1119
        %v1126 = vadd.f32 %v1111, %v1119
        %v1127 = vadd.f32 %v1112, %v1119
        %v1128 = vadd.f32 %v1113, %v1119
        %s1129 = scalar_lea.vmem [#allocation8], 1
        %v1130 = vld [vmem:[%s1129] sm:$0x1]
        %s1131 = scalar_lea.vmem [#allocation10], 1
        %v1132 = vld [vmem:[%s1131] sm:$0x1]
        %1133 = vadd.xlane.f32.xlu0 %v1121
        %v1134 = vpop.xlane.xlu0 %1133
        %1135 = vadd.xlane.f32.xlu0 %v1122
        %v1136 = vpop.xlane.xlu0 %1135
        %1137 = vadd.xlane.f32.xlu0 %v1123
        %v1138 = vpop.xlane.xlu0 %1137
        %1139 = vadd.xlane.f32.xlu0 %v1124
        %v1140 = vpop.xlane.xlu0 %1139
        %1141 = vadd.xlane.f32.xlu0 %v1125
        %v1142 = vpop.xlane.xlu0 %1141
        %1143 = vadd.xlane.f32.xlu0 %v1126
        %v1144 = vpop.xlane.xlu0 %1143
        %1145 = vadd.xlane.f32.xlu0 %v1127
        %v1146 = vpop.xlane.xlu0 %1145
        %1147 = vadd.xlane.f32.xlu0 %v1128
        %v1148 = vpop.xlane.xlu0 %1147
        %v1149 = vmul.f32 %v1134, 0.03125
        %v1150 = vmul.f32 %v1136, 0.03125
        %v1151 = vmul.f32 %v1138, 0.03125
        %v1152 = vmul.f32 %v1140, 0.03125
        %v1153 = vmul.f32 %v1142, 0.03125
        %v1154 = vmul.f32 %v1144, 0.03125
        %v1155 = vmul.f32 %v1146, 0.03125
        %v1156 = vmul.f32 %v1148, 0.03125
        %v1157 = vmul.f32 %v1121, %v1121
        %v1158 = vmul.f32 %v1122, %v1122
        %v1159 = vmul.f32 %v1123, %v1123
        %v1160 = vmul.f32 %v1124, %v1124
        %v1161 = vmul.f32 %v1125, %v1125
        %v1162 = vmul.f32 %v1126, %v1126
        %v1163 = vmul.f32 %v1127, %v1127
        %v1164 = vmul.f32 %v1128, %v1128
        %1165 = vadd.xlane.f32.xlu0 %v1157
        %v1166 = vpop.xlane.xlu0 %1165
        %1167 = vadd.xlane.f32.xlu0 %v1158
        %v1168 = vpop.xlane.xlu0 %1167
        %1169 = vadd.xlane.f32.xlu0 %v1159
        %v1170 = vpop.xlane.xlu0 %1169
        %1171 = vadd.xlane.f32.xlu0 %v1160
        %v1172 = vpop.xlane.xlu0 %1171
        %1173 = vadd.xlane.f32.xlu0 %v1161
        %v1174 = vpop.xlane.xlu0 %1173
        %1175 = vadd.xlane.f32.xlu0 %v1162
        %v1176 = vpop.xlane.xlu0 %1175
        %1177 = vadd.xlane.f32.xlu0 %v1163
        %v1178 = vpop.xlane.xlu0 %1177
        %1179 = vadd.xlane.f32.xlu0 %v1164
        %v1180 = vpop.xlane.xlu0 %1179
        %v1181 = vmul.f32 %v1166, 0.03125
        %v1182 = vmul.f32 %v1168, 0.03125
        %v1183 = vmul.f32 %v1170, 0.03125
        %v1184 = vmul.f32 %v1172, 0.03125
        %v1185 = vmul.f32 %v1174, 0.03125
        %v1186 = vmul.f32 %v1176, 0.03125
        %v1187 = vmul.f32 %v1178, 0.03125
        %v1188 = vmul.f32 %v1180, 0.03125
        %v1189 = vmul.f32 %v1149, %v1149
        %v1190 = vmul.f32 %v1150, %v1150
        %v1191 = vmul.f32 %v1151, %v1151
        %v1192 = vmul.f32 %v1152, %v1152
        %v1193 = vmul.f32 %v1153, %v1153
        %v1194 = vmul.f32 %v1154, %v1154
        %v1195 = vmul.f32 %v1155, %v1155
        %v1196 = vmul.f32 %v1156, %v1156
        %v1197 = vsub.f32 %v1181, %v1189
        %v1198 = vsub.f32 %v1182, %v1190
        %v1199 = vsub.f32 %v1183, %v1191
        %v1200 = vsub.f32 %v1184, %v1192
        %v1201 = vsub.f32 %v1185, %v1193
        %v1202 = vsub.f32 %v1186, %v1194
        %v1203 = vsub.f32 %v1187, %v1195
        %v1204 = vsub.f32 %v1188, %v1196
        %v1205 = vmax.f32 %v1197, 0.0
        %v1206 = vmax.f32 %v1198, 0.0
        %v1207 = vmax.f32 %v1199, 0.0
        %v1208 = vmax.f32 %v1200, 0.0
        %v1209 = vmax.f32 %v1201, 0.0
        %v1210 = vmax.f32 %v1202, 0.0
        %v1211 = vmax.f32 %v1203, 0.0
        %v1212 = vmax.f32 %v1204, 0.0
        %v1213 = vsub.f32 %v1121, %v1149
        %v1214 = vsub.f32 %v1122, %v1150
        %v1215 = vsub.f32 %v1123, %v1151
        %v1216 = vsub.f32 %v1124, %v1152
        %v1217 = vsub.f32 %v1125, %v1153
        %v1218 = vsub.f32 %v1126, %v1154
        %v1219 = vsub.f32 %v1127, %v1155
        %v1220 = vsub.f32 %v1128, %v1156
        %v1221 = vadd.f32 %v1205, 1e-05
        %v1222 = vadd.f32 %v1206, 1e-05
        %v1223 = vadd.f32 %v1207, 1e-05
        %v1224 = vadd.f32 %v1208, 1e-05
        %v1225 = vadd.f32 %v1209, 1e-05
        %v1226 = vadd.f32 %v1210, 1e-05
        %v1227 = vadd.f32 %v1211, 1e-05
        %v1228 = vadd.f32 %v1212, 1e-05
        %v1229 = vrsqrt.pop %v1221
        %v1230 = vrsqrt.pop %v1222
        %v1231 = vrsqrt.pop %v1223
        %v1232 = vrsqrt.pop %v1224
        %v1233 = vrsqrt.pop %v1225
        %v1234 = vrsqrt.pop %v1226
        %v1235 = vrsqrt.pop %v1227
        %v1236 = vrsqrt.pop %v1228
        %v1237 = vmul.f32 %v1213, %v1229
        %v1238 = vmul.f32 %v1214, %v1230
        %v1239 = vmul.f32 %v1215, %v1231
        %v1240 = vmul.f32 %v1216, %v1232
        %v1241 = vmul.f32 %v1217, %v1233
        %v1242 = vmul.f32 %v1218, %v1234
        %v1243 = vmul.f32 %v1219, %v1235
        %v1244 = vmul.f32 %v1220, %v1236
        %v1246 = vlaneseq
        %v1247 = vshrl.u32 %v1246, 7
        %v1248 = vsub.s32 0, %v1247
        %v1249 = vrot.slane %v1130, %v1248
        %v1251 = vmul.f32 %v1237, %v1249
        %v1252 = vmul.f32 %v1238, %v1249
        %v1253 = vmul.f32 %v1239, %v1249
        %v1254 = vmul.f32 %v1240, %v1249
        %v1255 = vmul.f32 %v1241, %v1249
        %v1256 = vmul.f32 %v1242, %v1249
        %v1257 = vmul.f32 %v1243, %v1249
        %v1258 = vmul.f32 %v1244, %v1249
        %v1260 = vlaneseq
        %v1261 = vshrl.u32 %v1260, 7
        %v1262 = vsub.s32 0, %v1261
        %v1263 = vrot.slane %v1132, %v1262
        %v1265 = vadd.f32 %v1251, %v1263
        %v1266 = vadd.f32 %v1252, %v1263
        %v1267 = vadd.f32 %v1253, %v1263
        %v1268 = vadd.f32 %v1254, %v1263
        %v1269 = vadd.f32 %v1255, %v1263
        %v1270 = vadd.f32 %v1256, %v1263
        %v1271 = vadd.f32 %v1257, %v1263
        %v1272 = vadd.f32 %v1258, %v1263
        %s1273 = scalar_lea.vmem [#allocation11], 128
        %v1274 = vld [vmem:[%s1273] sm:$0xff]
        %v1275 = vld [vmem:[%s1273 + $0x8] sm:$0xff]
        %v1276 = vld [vmem:[%s1273 + $0x10] sm:$0xff]
        %v1277 = vld [vmem:[%s1273 + $0x18] sm:$0xff]
        %v1278 = vld [vmem:[%s1273 + $0x20] sm:$0xff]
        %v1279 = vld [vmem:[%s1273 + $0x28] sm:$0xff]
        %v1280 = vld [vmem:[%s1273 + $0x30] sm:$0xff]
        %v1281 = vld [vmem:[%s1273 + $0x38] sm:$0xff]
        %v1282 = vld [vmem:[%s1273 + $0x40] sm:$0xff]
        %v1283 = vld [vmem:[%s1273 + $0x48] sm:$0xff]
        %v1284 = vld [vmem:[%s1273 + $0x50] sm:$0xff]
        %v1285 = vld [vmem:[%s1273 + $0x58] sm:$0xff]
        %v1286 = vld [vmem:[%s1273 + $0x60] sm:$0xff]
        %v1287 = vld [vmem:[%s1273 + $0x68] sm:$0xff]
        %v1288 = vld [vmem:[%s1273 + $0x70] sm:$0xff]
        %v1289 = vld [vmem:[%s1273 + $0x78] sm:$0xff]
        %s1290 = scalar_lea.vmem [#allocation13], 1
        %v1291 = vld [vmem:[%s1290] sm:$0x1]
        %v1293 = vlaneseq
        %v1294 = vshrl.u32 %v1293, 7
        %v1295 = vsub.s32 0, %v1294
        %v1296 = vrot.slane %v1291, %v1295
        %1298 = vmatprep.subr.mxu0 0.0
        %1299 = vmatpush1.msra.mxu0 %v1274
        %1300 = vmatprep.subr.mxu0 0.0
        %1301 = vmatpush1.msra.mxu0 %v1275
        %1302 = vmatprep.subr.mxu0 0.0
        %1303 = vmatpush1.msra.mxu0 %v1276
        %1304 = vmatprep.subr.mxu0 0.0
        %1305 = vmatpush1.msra.mxu0 %v1277
        %1306 = vmatprep.subr.mxu0 0.0
        %1307 = vmatpush1.msra.mxu0 %v1278
        %1308 = vmatprep.subr.mxu0 0.0
        %1309 = vmatpush1.msra.mxu0 %v1279
        %1310 = vmatprep.subr.mxu0 0.0
        %1311 = vmatpush1.msra.mxu0 %v1280
        %1312 = vmatprep.subr.mxu0 0.0
        %1313 = vmatpush1.msra.mxu0 %v1281
        %1314 = vmatprep.subr.mxu0 0.0
        %1315 = vmatpush1.msra.mxu0 %v1282
        %1316 = vmatprep.subr.mxu0 0.0
        %1317 = vmatpush1.msra.mxu0 %v1283
        %1318 = vmatprep.subr.mxu0 0.0
        %1319 = vmatpush1.msra.mxu0 %v1284
        %1320 = vmatprep.subr.mxu0 0.0
        %1321 = vmatpush1.msra.mxu0 %v1285
        %1322 = vmatprep.subr.mxu0 0.0
        %1323 = vmatpush1.msra.mxu0 %v1286
        %1324 = vmatprep.subr.mxu0 0.0
        %1325 = vmatpush1.msra.mxu0 %v1287
        %1326 = vmatprep.subr.mxu0 0.0
        %1327 = vmatpush1.msra.mxu0 %v1288
        %1328 = vmatprep.subr.mxu0 0.0
        %1329 = vmatpush1.msra.mxu0 %v1289
        %1330 = vmatprep.subr.mxu0 0.0
        %1331 = vmatpush1.msra.mxu0 0.0
        %1332 = vmatprep.subr.mxu0 0.0
        %1333 = vmatpush1.msra.mxu0 0.0
        %1334 = vmatprep.subr.mxu0 0.0
        %1335 = vmatpush1.msra.mxu0 0.0
        %1336 = vmatprep.subr.mxu0 0.0
        %1337 = vmatpush1.msra.mxu0 0.0
        %1338 = vmatprep.subr.mxu0 0.0
        %1339 = vmatpush1.msra.mxu0 0.0
        %1340 = vmatprep.subr.mxu0 0.0
        %1341 = vmatpush1.msra.mxu0 0.0
        %1342 = vmatprep.subr.mxu0 0.0
        %1343 = vmatpush1.msra.mxu0 0.0
        %1344 = vmatprep.subr.mxu0 0.0
        %1345 = vmatpush1.msra.mxu0 0.0
        %1346 = vmatprep.subr.mxu0 0.0
        %1347 = vmatpush1.msra.mxu0 0.0
        %1348 = vmatprep.subr.mxu0 0.0
        %1349 = vmatpush1.msra.mxu0 0.0
        %1350 = vmatprep.subr.mxu0 0.0
        %1351 = vmatpush1.msra.mxu0 0.0
        %1352 = vmatprep.subr.mxu0 0.0
        %1353 = vmatpush1.msra.mxu0 0.0
        %1354 = vmatprep.subr.mxu0 0.0
        %1355 = vmatpush1.msra.mxu0 0.0
        %1356 = vmatprep.subr.mxu0 0.0
        %1357 = vmatpush1.msra.mxu0 0.0
        %1358 = vmatprep.subr.mxu0 0.0
        %1359 = vmatpush1.msra.mxu0 0.0
        %1360 = vmatprep.subr.mxu0 0.0
        %1361 = vmatpush1.msra.mxu0 0.0
        %1362 = vmatprep.mubr.f32.mxu0 0.0
        %1363 = vmatmul.mubr.f32.gmra.mrb[0].mxu0 %v1265
        %v1364 = vpop.f32.mrb[0].mxu0
        %v1365 = vadd.f32 %v1296, %v1364
        %v1366 = vpop.f32.mrb[0].mxu0
        %1367 = vmatprep.mubr.f32.mxu0 0.0
        %1368 = vmatmul.mubr.f32.gmra.mrb[0].mxu0 %v1266
        %v1369 = vpop.f32.mrb[0].mxu0
        %v1370 = vadd.f32 %v1296, %v1369
        %v1371 = vpop.f32.mrb[0].mxu0
        %1372 = vmatprep.mubr.f32.mxu0 0.0
        %1373 = vmatmul.mubr.f32.gmra.mrb[0].mxu0 %v1267
        %v1374 = vpop.f32.mrb[0].mxu0
        %v1375 = vadd.f32 %v1296, %v1374
        %v1376 = vpop.f32.mrb[0].mxu0
        %1377 = vmatprep.mubr.f32.mxu0 0.0
        %1378 = vmatmul.mubr.f32.gmra.mrb[0].mxu0 %v1268
        %v1379 = vpop.f32.mrb[0].mxu0
        %v1380 = vadd.f32 %v1296, %v1379
        %v1381 = vpop.f32.mrb[0].mxu0
        %1382 = vmatprep.mubr.f32.mxu0 0.0
        %1383 = vmatmul.mubr.f32.gmra.mrb[0].mxu0 %v1269
        %v1384 = vpop.f32.mrb[0].mxu0
        %v1385 = vadd.f32 %v1296, %v1384
        %v1386 = vpop.f32.mrb[0].mxu0
        %1387 = vmatprep.mubr.f32.mxu0 0.0
        %1388 = vmatmul.mubr.f32.gmra.mrb[0].mxu0 %v1270
        %v1389 = vpop.f32.mrb[0].mxu0
        %v1390 = vadd.f32 %v1296, %v1389
        %v1391 = vpop.f32.mrb[0].mxu0
        %1392 = vmatprep.mubr.f32.mxu0 0.0
        %1393 = vmatmul.mubr.f32.gmra.mrb[0].mxu0 %v1271
        %v1394 = vpop.f32.mrb[0].mxu0
        %v1395 = vadd.f32 %v1296, %v1394
        %v1396 = vpop.f32.mrb[0].mxu0
        %1397 = vmatprep.mubr.f32.mxu0 0.0
        %1398 = vmatmul.mubr.f32.gmra.mrb[0].mxu0 %v1272
        %v1399 = vpop.f32.mrb[0].mxu0
        %v1400 = vadd.f32 %v1296, %v1399
        %v1401 = vpop.f32.mrb[0].mxu0
        %1402 = vdwg.mxu0
        %v1403 = vmax.f32 %v1365, 0.0
        %v1404 = vmax.f32 %v1370, 0.0
        %v1405 = vmax.f32 %v1375, 0.0
        %v1406 = vmax.f32 %v1380, 0.0
        %v1407 = vmax.f32 %v1385, 0.0
        %v1408 = vmax.f32 %v1390, 0.0
        %v1409 = vmax.f32 %v1395, 0.0
        %v1410 = vmax.f32 %v1400, 0.0
        %s1411 = scalar_lea.vmem [#allocation14], 128
        %v1412 = vld [vmem:[%s1411] sm:$0xff]
        %v1413 = vld [vmem:[%s1411 + $0x8] sm:$0xff]
        %v1414 = vld [vmem:[%s1411 + $0x10] sm:$0xff]
        %v1415 = vld [vmem:[%s1411 + $0x18] sm:$0xff]
        %v1416 = vld [vmem:[%s1411 + $0x20] sm:$0xff]
        %v1417 = vld [vmem:[%s1411 + $0x28] sm:$0xff]
        %v1418 = vld [vmem:[%s1411 + $0x30] sm:$0xff]
        %v1419 = vld [vmem:[%s1411 + $0x38] sm:$0xff]
        %v1420 = vld [vmem:[%s1411 + $0x40] sm:$0xff]
        %v1421 = vld [vmem:[%s1411 + $0x48] sm:$0xff]
        %v1422 = vld [vmem:[%s1411 + $0x50] sm:$0xff]
        %v1423 = vld [vmem:[%s1411 + $0x58] sm:$0xff]
        %v1424 = vld [vmem:[%s1411 + $0x60] sm:$0xff]
        %v1425 = vld [vmem:[%s1411 + $0x68] sm:$0xff]
        %v1426 = vld [vmem:[%s1411 + $0x70] sm:$0xff]
        %v1427 = vld [vmem:[%s1411 + $0x78] sm:$0xff]
        %1428 = vmatprep.subr.mxu0 0.0
        %1429 = vmatpush1.msra.mxu0 %v1412
        %1430 = vmatprep.subr.mxu0 0.0
        %1431 = vmatpush1.msra.mxu0 %v1413
        %1432 = vmatprep.subr.mxu0 0.0
        %1433 = vmatpush1.msra.mxu0 %v1414
        %1434 = vmatprep.subr.mxu0 0.0
        %1435 = vmatpush1.msra.mxu0 %v1415
        %1436 = vmatprep.subr.mxu0 0.0
        %1437 = vmatpush1.msra.mxu0 %v1416
        %1438 = vmatprep.subr.mxu0 0.0
        %1439 = vmatpush1.msra.mxu0 %v1417
        %1440 = vmatprep.subr.mxu0 0.0
        %1441 = vmatpush1.msra.mxu0 %v1418
        %1442 = vmatprep.subr.mxu0 0.0
        %1443 = vmatpush1.msra.mxu0 %v1419
        %1444 = vmatprep.subr.mxu0 0.0
        %1445 = vmatpush1.msra.mxu0 %v1420
        %1446 = vmatprep.subr.mxu0 0.0
        %1447 = vmatpush1.msra.mxu0 %v1421
        %1448 = vmatprep.subr.mxu0 0.0
        %1449 = vmatpush1.msra.mxu0 %v1422
        %1450 = vmatprep.subr.mxu0 0.0
        %1451 = vmatpush1.msra.mxu0 %v1423
        %1452 = vmatprep.subr.mxu0 0.0
        %1453 = vmatpush1.msra.mxu0 %v1424
        %1454 = vmatprep.subr.mxu0 0.0
        %1455 = vmatpush1.msra.mxu0 %v1425
        %1456 = vmatprep.subr.mxu0 0.0
        %1457 = vmatpush1.msra.mxu0 %v1426
        %1458 = vmatprep.subr.mxu0 0.0
        %1459 = vmatpush1.msra.mxu0 %v1427
        %1460 = vmatprep.subr.mxu0 0.0
        %1461 = vmatpush1.msra.mxu0 0.0
        %1462 = vmatprep.subr.mxu0 0.0
        %1463 = vmatpush1.msra.mxu0 0.0
        %1464 = vmatprep.subr.mxu0 0.0
        %1465 = vmatpush1.msra.mxu0 0.0
        %1466 = vmatprep.subr.mxu0 0.0
        %1467 = vmatpush1.msra.mxu0 0.0
        %1468 = vmatprep.subr.mxu0 0.0
        %1469 = vmatpush1.msra.mxu0 0.0
        %1470 = vmatprep.subr.mxu0 0.0
        %1471 = vmatpush1.msra.mxu0 0.0
        %1472 = vmatprep.subr.mxu0 0.0
        %1473 = vmatpush1.msra.mxu0 0.0
        %1474 = vmatprep.subr.mxu0 0.0
        %1475 = vmatpush1.msra.mxu0 0.0
        %1476 = vmatprep.subr.mxu0 0.0
        %1477 = vmatpush1.msra.mxu0 0.0
        %1478 = vmatprep.subr.mxu0 0.0
        %1479 = vmatpush1.msra.mxu0 0.0
        %1480 = vmatprep.subr.mxu0 0.0
        %1481 = vmatpush1.msra.mxu0 0.0
        %1482 = vmatprep.subr.mxu0 0.0
        %1483 = vmatpush1.msra.mxu0 0.0
        %1484 = vmatprep.subr.mxu0 0.0
        %1485 = vmatpush1.msra.mxu0 0.0
        %1486 = vmatprep.subr.mxu0 0.0
        %1487 = vmatpush1.msra.mxu0 0.0
        %1488 = vmatprep.subr.mxu0 0.0
        %1489 = vmatpush1.msra.mxu0 0.0
        %1490 = vmatprep.subr.mxu0 0.0
        %1491 = vmatpush1.msra.mxu0 0.0
        %1492 = vmatprep.mubr.f32.mxu0 0.0
        %1493 = vmatmul.mubr.f32.gmra.mrb[0].mxu0 %v1403
        %v1494 = vpop.f32.mrb[0].mxu0
        %v1495 = vadd.f32 0.0, %v1494
        %v1496 = vpop.f32.mrb[0].mxu0
        %1497 = vmatprep.mubr.f32.mxu0 0.0
        %1498 = vmatmul.mubr.f32.gmra.mrb[0].mxu0 %v1404
        %v1499 = vpop.f32.mrb[0].mxu0
        %v1500 = vadd.f32 0.0, %v1499
        %v1501 = vpop.f32.mrb[0].mxu0
        %1502 = vmatprep.mubr.f32.mxu0 0.0
        %1503 = vmatmul.mubr.f32.gmra.mrb[0].mxu0 %v1405
        %v1504 = vpop.f32.mrb[0].mxu0
        %v1505 = vadd.f32 0.0, %v1504
        %v1506 = vpop.f32.mrb[0].mxu0
        %1507 = vmatprep.mubr.f32.mxu0 0.0
        %1508 = vmatmul.mubr.f32.gmra.mrb[0].mxu0 %v1406
        %v1509 = vpop.f32.mrb[0].mxu0
        %v1510 = vadd.f32 0.0, %v1509
        %v1511 = vpop.f32.mrb[0].mxu0
        %1512 = vmatprep.mubr.f32.mxu0 0.0
        %1513 = vmatmul.mubr.f32.gmra.mrb[0].mxu0 %v1407
        %v1514 = vpop.f32.mrb[0].mxu0
        %v1515 = vadd.f32 0.0, %v1514
        %v1516 = vpop.f32.mrb[0].mxu0
        %1517 = vmatprep.mubr.f32.mxu0 0.0
        %1518 = vmatmul.mubr.f32.gmra.mrb[0].mxu0 %v1408
        %v1519 = vpop.f32.mrb[0].mxu0
        %v1520 = vadd.f32 0.0, %v1519
        %v1521 = vpop.f32.mrb[0].mxu0
        %1522 = vmatprep.mubr.f32.mxu0 0.0
        %1523 = vmatmul.mubr.f32.gmra.mrb[0].mxu0 %v1409
        %v1524 = vpop.f32.mrb[0].mxu0
        %v1525 = vadd.f32 0.0, %v1524
        %v1526 = vpop.f32.mrb[0].mxu0
        %1527 = vmatprep.mubr.f32.mxu0 0.0
        %1528 = vmatmul.mubr.f32.gmra.mrb[0].mxu0 %v1410
        %v1529 = vpop.f32.mrb[0].mxu0
        %v1530 = vadd.f32 0.0, %v1529
        %v1531 = vpop.f32.mrb[0].mxu0
        %1532 = vdwg.mxu0
        %v1533 = vadd.f32 %v1121, %v1495
        %v1534 = vadd.f32 %v1122, %v1500
        %v1535 = vadd.f32 %v1123, %v1505
        %v1536 = vadd.f32 %v1124, %v1510
        %v1537 = vadd.f32 %v1125, %v1515
        %v1538 = vadd.f32 %v1126, %v1520
        %v1539 = vadd.f32 %v1127, %v1525
        %v1540 = vadd.f32 %v1128, %v1530
        %s1541 = scalar_lea.vmem [#allocation16], 1
        %v1542 = vld [vmem:[%s1541] sm:$0x1]
        %v1544 = vlaneseq
        %v1545 = vshrl.u32 %v1544, 7
        %v1546 = vsub.s32 0, %v1545
        %v1547 = vrot.slane %v1542, %v1546
        %v1549 = vadd.f32 %v1533, %v1547
        %v1550 = vadd.f32 %v1534, %v1547
        %v1551 = vadd.f32 %v1535, %v1547
        %v1552 = vadd.f32 %v1536, %v1547
        %v1553 = vadd.f32 %v1537, %v1547
        %v1554 = vadd.f32 %v1538, %v1547
        %v1555 = vadd.f32 %v1539, %v1547
        %v1556 = vadd.f32 %v1540, %v1547
        %v1557 = vld [vmem:[#allocation17] sm:$0x1]
        %v1558 = vld [vmem:[#allocation19] sm:$0x1]
        %1559 = vadd.xlane.f32.xlu0 %v1549
        %v1560 = vpop.xlane.xlu0 %1559
        %1561 = vadd.xlane.f32.xlu0 %v1550
        %v1562 = vpop.xlane.xlu0 %1561
        %1563 = vadd.xlane.f32.xlu0 %v1551
        %v1564 = vpop.xlane.xlu0 %1563
        %1565 = vadd.xlane.f32.xlu0 %v1552
        %v1566 = vpop.xlane.xlu0 %1565
        %1567 = vadd.xlane.f32.xlu0 %v1553
        %v1568 = vpop.xlane.xlu0 %1567
        %1569 = vadd.xlane.f32.xlu0 %v1554
        %v1570 = vpop.xlane.xlu0 %1569
        %1571 = vadd.xlane.f32.xlu0 %v1555
        %v1572 = vpop.xlane.xlu0 %1571
        %1573 = vadd.xlane.f32.xlu0 %v1556
        %v1574 = vpop.xlane.xlu0 %1573
        %v1575 = vmul.f32 %v1560, 0.03125
        %v1576 = vmul.f32 %v1562, 0.03125
        %v1577 = vmul.f32 %v1564, 0.03125
        %v1578 = vmul.f32 %v1566, 0.03125
        %v1579 = vmul.f32 %v1568, 0.03125
        %v1580 = vmul.f32 %v1570, 0.03125
        %v1581 = vmul.f32 %v1572, 0.03125
        %v1582 = vmul.f32 %v1574, 0.03125
        %v1583 = vmul.f32 %v1549, %v1549
        %v1584 = vmul.f32 %v1550, %v1550
        %v1585 = vmul.f32 %v1551, %v1551
        %v1586 = vmul.f32 %v1552, %v1552
        %v1587 = vmul.f32 %v1553, %v1553
        %v1588 = vmul.f32 %v1554, %v1554
        %v1589 = vmul.f32 %v1555, %v1555
        %v1590 = vmul.f32 %v1556, %v1556
        %1591 = vadd.xlane.f32.xlu0 %v1583
        %v1592 = vpop.xlane.xlu0 %1591
        %1593 = vadd.xlane.f32.xlu0 %v1584
        %v1594 = vpop.xlane.xlu0 %1593
        %1595 = vadd.xlane.f32.xlu0 %v1585
        %v1596 = vpop.xlane.xlu0 %1595
        %1597 = vadd.xlane.f32.xlu0 %v1586
        %v1598 = vpop.xlane.xlu0 %1597
        %1599 = vadd.xlane.f32.xlu0 %v1587
        %v1600 = vpop.xlane.xlu0 %1599
        %1601 = vadd.xlane.f32.xlu0 %v1588
        %v1602 = vpop.xlane.xlu0 %1601
        %1603 = vadd.xlane.f32.xlu0 %v1589
        %v1604 = vpop.xlane.xlu0 %1603
        %1605 = vadd.xlane.f32.xlu0 %v1590
        %v1606 = vpop.xlane.xlu0 %1605
        %v1607 = vmul.f32 %v1592, 0.03125
        %v1608 = vmul.f32 %v1594, 0.03125
        %v1609 = vmul.f32 %v1596, 0.03125
        %v1610 = vmul.f32 %v1598, 0.03125
        %v1611 = vmul.f32 %v1600, 0.03125
        %v1612 = vmul.f32 %v1602, 0.03125
        %v1613 = vmul.f32 %v1604, 0.03125
        %v1614 = vmul.f32 %v1606, 0.03125
        %v1615 = vmul.f32 %v1575, %v1575
        %v1616 = vmul.f32 %v1576, %v1576
        %v1617 = vmul.f32 %v1577, %v1577
        %v1618 = vmul.f32 %v1578, %v1578
        %v1619 = vmul.f32 %v1579, %v1579
        %v1620 = vmul.f32 %v1580, %v1580
        %v1621 = vmul.f32 %v1581, %v1581
        %v1622 = vmul.f32 %v1582, %v1582
        %v1623 = vsub.f32 %v1607, %v1615
        %v1624 = vsub.f32 %v1608, %v1616
        %v1625 = vsub.f32 %v1609, %v1617
        %v1626 = vsub.f32 %v1610, %v1618
        %v1627 = vsub.f32 %v1611, %v1619
        %v1628 = vsub.f32 %v1612, %v1620
        %v1629 = vsub.f32 %v1613, %v1621
        %v1630 = vsub.f32 %v1614, %v1622
        %v1631 = vmax.f32 %v1623, 0.0
        %v1632 = vmax.f32 %v1624, 0.0
        %v1633 = vmax.f32 %v1625, 0.0
        %v1634 = vmax.f32 %v1626, 0.0
        %v1635 = vmax.f32 %v1627, 0.0
        %v1636 = vmax.f32 %v1628, 0.0
        %v1637 = vmax.f32 %v1629, 0.0
        %v1638 = vmax.f32 %v1630, 0.0
        %v1639 = vsub.f32 %v1549, %v1575
        %v1640 = vsub.f32 %v1550, %v1576
        %v1641 = vsub.f32 %v1551, %v1577
        %v1642 = vsub.f32 %v1552, %v1578
        %v1643 = vsub.f32 %v1553, %v1579
        %v1644 = vsub.f32 %v1554, %v1580
        %v1645 = vsub.f32 %v1555, %v1581
        %v1646 = vsub.f32 %v1556, %v1582
        %v1647 = vadd.f32 %v1631, 1e-05
        %v1648 = vadd.f32 %v1632, 1e-05
        %v1649 = vadd.f32 %v1633, 1e-05
        %v1650 = vadd.f32 %v1634, 1e-05
        %v1651 = vadd.f32 %v1635, 1e-05
        %v1652 = vadd.f32 %v1636, 1e-05
        %v1653 = vadd.f32 %v1637, 1e-05
        %v1654 = vadd.f32 %v1638, 1e-05
        %v1655 = vrsqrt.pop %v1647
        %v1656 = vrsqrt.pop %v1648
        %v1657 = vrsqrt.pop %v1649
        %v1658 = vrsqrt.pop %v1650
        %v1659 = vrsqrt.pop %v1651
        %v1660 = vrsqrt.pop %v1652
        %v1661 = vrsqrt.pop %v1653
        %v1662 = vrsqrt.pop %v1654
        %v1663 = vmul.f32 %v1639, %v1655
        %v1664 = vmul.f32 %v1640, %v1656
        %v1665 = vmul.f32 %v1641, %v1657
        %v1666 = vmul.f32 %v1642, %v1658
        %v1667 = vmul.f32 %v1643, %v1659
        %v1668 = vmul.f32 %v1644, %v1660
        %v1669 = vmul.f32 %v1645, %v1661
        %v1670 = vmul.f32 %v1646, %v1662
        %v1672 = vlaneseq
        %v1673 = vshrl.u32 %v1672, 7
        %v1674 = vsub.s32 0, %v1673
        %v1675 = vrot.slane %v1557, %v1674
        %v1677 = vmul.f32 %v1663, %v1675
        %v1678 = vmul.f32 %v1664, %v1675
        %v1679 = vmul.f32 %v1665, %v1675
        %v1680 = vmul.f32 %v1666, %v1675
        %v1681 = vmul.f32 %v1667, %v1675
        %v1682 = vmul.f32 %v1668, %v1675
        %v1683 = vmul.f32 %v1669, %v1675
        %v1684 = vmul.f32 %v1670, %v1675
        %v1686 = vlaneseq
        %v1687 = vshrl.u32 %v1686, 7
        %v1688 = vsub.s32 0, %v1687
        %v1689 = vrot.slane %v1558, %v1688
        %v1691 = vadd.f32 %v1677, %v1689
        %v1692 = vadd.f32 %v1678, %v1689
        %v1693 = vadd.f32 %v1679, %v1689
        %v1694 = vadd.f32 %v1680, %v1689
        %v1695 = vadd.f32 %v1681, %v1689
        %v1696 = vadd.f32 %v1682, %v1689
        %v1697 = vadd.f32 %v1683, %v1689
        %v1698 = vadd.f32 %v1684, %v1689
        %1699 = vst [vmem:[%s549] sm:$0xff] %v1691
        %1700 = vst [vmem:[%s549 + $0x8] sm:$0xff] %v1692
        %1701 = vst [vmem:[%s549 + $0x10] sm:$0xff] %v1693
        %1702 = vst [vmem:[%s549 + $0x18] sm:$0xff] %v1694
        %1703 = vst [vmem:[%s549 + $0x20] sm:$0xff] %v1695
        %1704 = vst [vmem:[%s549 + $0x28] sm:$0xff] %v1696
        %1705 = vst [vmem:[%s549 + $0x30] sm:$0xff] %v1697
        %1706 = vst [vmem:[%s549 + $0x38] sm:$0xff] %v1698
        %s1707 = sand.u32 %s277, 1
        %s1708 = scalar_lea.sflag [#allocation4], %s1707
        %s1709 = sand.u32 %s277, 1
        %s1710 = smul.addr %s1709, 64
        %s1711 = scalar_lea.vmem [#allocation20], %s1710
        // Predicated region
        $region109: #{tpu_custom_call.1} parent=63 // pred_check
          %p1712 = pneg %p287
        $region110: #{tpu_custom_call.1} parent=63 // pred_check_branch
          %1714 = sbr.rel (%p1712) target = $region112
        $region111: #{tpu_custom_call.1} parent=63 // pred_region
          %s1715 = smul.u32 8, %s33
          %s1716 = ssub.s32 25, %s1715
          %p1717 = scmp.lt.s32.totalorder %s1716, 8
          %s1718 = scalar_select %p1717, %s1716, 8
          %s1719 = smul.u32 128, %s1718
          %s1721 = ssub.s32 1024, %s1719
          %1722 = vsyncadd %s1708, %s1721
          %p1723 = scmp.ne.s32.totalorder 0, %s1719
          %s1724 = smul.addr %s1715, 128
          %s1725 = scalar_lea.hbm %s11, %s1724
          %s1726 = smul.u32 8, %s1718
          %s1727 = sshll.u32 %s1711, 4
          %s1728 = int_to_ptr.vmem [resolvable:$true] %s1727
          %s1729 = sshll.u32 %s1726, 4
          %1733 = dma.vmem_to_hbm [thread:$0]  (%p1723), %s1728, %s1729, %s1725, %s1708, 128, 128, 8
        $region112: #{tpu_custom_call.1} parent=63 // pred_fallthru
          _
      $region64: #{tpu_custom_call.1} parent=5 // pred_fallthru
        _
      %p1734 = scmp.le.s32.totalorder 2, %s28
      // Predicated region
      $region113: #{tpu_custom_call.1} parent=5 // pred_check
        %p1735 = pneg %p1734
      $region114: #{tpu_custom_call.1} parent=5 // pred_check_branch
        %1737 = sbr.rel (%p1735) target = $region116
      $region115: #{tpu_custom_call.1} parent=5 // pred_region
        %s1738 = ssub.s32 %s28, 2
        // Predicated region
        $region117: #{tpu_custom_call.1} parent=115 // pred_check
          %p1739 = pneg %p293
        $region118: #{tpu_custom_call.1} parent=115 // pred_check_branch
          %1741 = sbr.rel (%p1739) target = $region120
        $region119: #{tpu_custom_call.1} parent=115 // pred_region
          %s1742 = sand.u32 %s278, 1
          %s1743 = scalar_lea.sflag [#allocation4], %s1742
          %s1744 = sand.u32 %s278, 1
          %s1745 = smul.addr %s1744, 64
          %s1746 = scalar_lea.vmem [#allocation20], %s1745
          %1747 = dma.done %s1743, 1024
        $region120: #{tpu_custom_call.1} parent=115 // pred_fallthru
          _
      $region116: #{tpu_custom_call.1} parent=5 // pred_fallthru
        _
    $region6: #{tpu_custom_call.1} parent=1 // loop_footer
      %s32 = sadd.s32 1, %s28
    $region7: #{tpu_custom_call.1} parent=1 // loop_footer_branch
      %27 = sbr.rel target = $region3
    $region8: #{tpu_custom_call.1} parent=1 // loop_exit
      _
    %1748 = vsyncpa [#allocation3], 1
    %s1749 = scalar_lea.sflag [#allocation3], 1
    %1750 = vsyncpa %s1749, 1
    %1751 = vsyncpa [#allocation6], 1
    %1752 = vsyncpa [#allocation9], 1
    %1753 = vsyncpa [#allocation12], 1
    %1754 = vsyncpa [#allocation15], 1
    %1755 = vsyncpa [#allocation18], 1
    %1756 = vsyncpa [#allocation4], 1
    %s1757 = scalar_lea.sflag [#allocation4], 1
    %1758 = vsyncpa %s1757, 1

// kernel: tpu_custom_call.1
$region0: #{tpu_custom_call.1}
  #allocation0 [shape = 'u32[]', space=smem, size = 0x4, offset = 0x4, fixed_abs, tag = 'smem constant byte address 0x4 - core index']
  #allocation1 [shape = 'u32[144,128]{1,0:T(1,128)}', space=vmem, size = 0x12000, scoped, tag = 'internal scratch']
  %s0 = inlined_call_operand.hbm [shape: f32[200,16], index: 0, kind: input, shape index: {}]
  %s1 = inlined_call_operand.hbm [shape: f32[16,128], index: 1, kind: input, shape index: {}]
  %s2 = inlined_call_operand.hbm [shape: f32[1,128], index: 2, kind: input, shape index: {}]
  %s3 = inlined_call_operand.hbm [shape: f32[2,1,128], index: 3, kind: input, shape index: {}]
  %s4 = inlined_call_operand.hbm [shape: f32[2,1,128], index: 4, kind: input, shape index: {}]
  %s5 = inlined_call_operand.hbm [shape: f32[2,128,128], index: 5, kind: input, shape index: {}]
  %s6 = inlined_call_operand.hbm [shape: f32[2,1,128], index: 6, kind: input, shape index: {}]
  %s7 = inlined_call_operand.hbm [shape: f32[2,128,128], index: 7, kind: input, shape index: {}]
  %s8 = inlined_call_operand.hbm [shape: f32[2,1,128], index: 8, kind: input, shape index: {}]
  %s9 = inlined_call_operand.hbm [shape: f32[1,128], index: 9, kind: input, shape index: {}]
  %s10 = inlined_call_operand.hbm [shape: f32[1,128], index: 10, kind: input, shape index: {}]
  %s11 = inlined_call_operand.hbm [shape: f32[200,128], index: 11, kind: output, shape index: {}]
  %s12 = sld [smem:[#allocation0]]
  $region121: #{tpu_custom_call.1} parent=0
    _
  %s14 = ssub.s32 1, %s12
  %s15 = scalar_select 0, %s14, %s12
  $region1: #{tpu_custom_call.1} parent=0
    #allocation2 [shape = 'u8[65536]{0}', space=vmem, size = 0x10000, scoped, tag = 'input window, operand 0']
    #allocation3 [shape = 's32[2]{0}', space=sflag, size = 0x8, scoped, tag = 'scoped memory for tpu_custom_call.1']
    #allocation4 [shape = 's32[2]{0}', space=sflag, size = 0x8, scoped, tag = 'scoped memory for tpu_custom_call.1']
    #allocation5 [shape = 'u8[8192]{0}', space=vmem, size = 0x2000, scoped, tag = 'input window, operand 1, single buffered']
    #allocation6 [shape = 's32[1]{0}', space=sflag, size = 0x4, scoped, tag = 'scoped memory for tpu_custom_call.1']
    #allocation7 [shape = 'u8[512]{0}', space=vmem, size = 0x400, scoped, tag = 'input window, operand 2, single buffered']
    #allocation8 [shape = 'u8[1024]{0}', space=vmem, size = 0x400, scoped, tag = 'input window, operand 3, single buffered']
    #allocation9 [shape = 's32[1]{0}', space=sflag, size = 0x4, scoped, tag = 'scoped memory for tpu_custom_call.1']
    #allocation10 [shape = 'u8[1024]{0}', space=vmem, size = 0x400, scoped, tag = 'input window, operand 4, single buffered']
    #allocation11 [shape = 'u8[131072]{0}', space=vmem, size = 0x20000, scoped, tag = 'input window, operand 5, single buffered']
    #allocation12 [shape = 's32[1]{0}', space=sflag, size = 0x4, scoped, tag = 'scoped memory for tpu_custom_call.1']
    #allocation13 [shape = 'u8[1024]{0}', space=vmem, size = 0x400, scoped, tag = 'input window, operand 6, single buffered']
    #allocation14 [shape = 'u8[131072]{0}', space=vmem, size = 0x20000, scoped, tag = 'input window, operand 7, single buffered']
    #allocation15 [shape = 's32[1]{0}', space=sflag, size = 0x4, scoped, tag = 'scoped memory for tpu_custom_call.1']
    #allocation16 [shape = 'u8[1024]{0}', space=vmem, size = 0x400, scoped, tag = 'input window, operand 8, single buffered']
    #allocation17 [shape = 'u8[512]{0}', space=vmem, size = 0x400, scoped, tag = 'input window, operand 9, single buffered']
    #allocation18 [shape = 's32[1]{0}', space=sflag, size = 0x4, scoped, tag = 'scoped memory for tpu_custom_call.1']
    #allocation19 [shape = 'u8[512]{0}', space=vmem, size = 0x400, scoped, tag = 'input window, operand 10, single buffered']
    #allocation20 [shape = 'u8[65536]{0}', space=vmem, size = 0x10000, scoped, tag = 'output window, operand 0']
    %16 = vsyncpa [#allocation3], 0
    %s17 = scalar_lea.sflag [#allocation3], 1
    %18 = vsyncpa %s17, 0
    %19 = vsyncpa [#allocation6], 0
    %20 = vsyncpa [#allocation9], 0
    %21 = vsyncpa [#allocation12], 0
    %22 = vsyncpa [#allocation15], 0
    %23 = vsyncpa [#allocation18], 0
    %24 = vsyncpa [#allocation4], 0
    %s25 = scalar_lea.sflag [#allocation4], 1
    %26 = vsyncpa %s25, 0
    loop: start=0, step=1, limit=6
    $region2: #{tpu_custom_call.1} parent=1 // loop_pre_header
      _
    $region3: #{tpu_custom_call.1} parent=1 // loop_header
      %s28 = sphi 0, %s32
      %p29 = scmp.ge.s32.totalorder %s28, 6
      %s38 = sphi 0, %s40
      %s41 = sphi 0, %s38
      %s42 = sphi 0, %s41
      %s58 = sphi 0, %s42
      %s62 = sphi 0, %s62
      %s64 = sphi 0, %s62
      %s65 = sphi 0, %s64
      %s79 = sphi 0, %s65
      %s83 = sphi 0, %s83
      %s85 = sphi 0, %s83
      %s86 = sphi 0, %s85
      %s100 = sphi 0, %s86
      %s104 = sphi 0, %s104
      %s106 = sphi 0, %s104
      %s107 = sphi 0, %s106
      %s121 = sphi 0, %s107
      %s125 = sphi 0, %s125
      %s127 = sphi 0, %s125
      %s128 = sphi 0, %s127
      %s142 = sphi 0, %s128
      %s146 = sphi 0, %s146
      %s148 = sphi 0, %s146
      %s149 = sphi 0, %s148
      %s163 = sphi 0, %s149
      %s167 = sphi 0, %s167
      %s169 = sphi 0, %s167
      %s170 = sphi 0, %s169
      %s184 = sphi 0, %s170
      %s188 = sphi 0, %s188
      %s190 = sphi 0, %s188
      %s191 = sphi 0, %s190
      %s205 = sphi 0, %s191
      %s209 = sphi 0, %s209
      %s211 = sphi 0, %s209
      %s212 = sphi 0, %s211
      %s226 = sphi 0, %s212
      %s230 = sphi 0, %s230
      %s232 = sphi 0, %s230
      %s233 = sphi 0, %s232
      %s247 = sphi 0, %s233
      %s251 = sphi 0, %s251
      %s253 = sphi 0, %s251
      %s254 = sphi 0, %s253
      %s268 = sphi 0, %s254
      %s274 = sphi 0, %s276
      %s277 = sphi 0, %s274
      %s278 = sphi 0, %s277
      %s294 = sphi 0, %s278
    $region4: #{tpu_custom_call.1} parent=1 // loop_header_branch
      %31 = sbr.rel (%p29) target = $region8
    $region5: #{tpu_custom_call.1} parent=1 // loop_body
      %s33 = ssub.s32 %s28, 1
      %s34 = ssub.s32 %s28, 2
      %s35 = sadd.s32 %s28, 1
      %s36 = ssub.s32 %s28, %s35
      %p37 = scmp.eq.s32.totalorder %s36, 0
      %s39 = sadd.s32 %s38, 1
      %s40 = scalar_select %p37, %s38, %s39
      %p43 = pneg %p37
      %p44 = scmp.eq.s32.totalorder %s28, 3
      %p45 = por %p43, %p44
      %p46 = scmp.ne.s32.totalorder %s38, %s41
      %p47 = scmp.eq.s32.totalorder %s28, 0
      %p48 = por %p46, %p47
      %p49 = scmp.ne.s32.totalorder %s38, %s41
      %p50 = scmp.eq.s32.totalorder %s33, 3
      %p51 = por %p49, %p50
      %p52 = scmp.ne.s32.totalorder %s41, %s42
      %p53 = scmp.eq.s32.totalorder %s33, 0
      %p54 = por %p52, %p53
      %p55 = scmp.ne.s32.totalorder %s41, %s42
      %p56 = scmp.eq.s32.totalorder %s34, 3
      %p57 = por %p55, %p56
      %p59 = scmp.ne.s32.totalorder %s42, %s58
      %p60 = scmp.eq.s32.totalorder %s34, 0
      %p61 = por %p59, %p60
      %s63 = sadd.s32 %s62, 1
      %p66 = scmp.eq.s32.totalorder %s28, 3
      %p67 = scmp.ne.s32.totalorder %s62, %s64
      %p68 = scmp.eq.s32.totalorder %s28, 0
      %p69 = por %p67, %p68
      %p70 = scmp.ne.s32.totalorder %s62, %s64
      %p71 = scmp.eq.s32.totalorder %s33, 3
      %p72 = por %p70, %p71
      %p73 = scmp.ne.s32.totalorder %s64, %s65
      %p74 = scmp.eq.s32.totalorder %s33, 0
      %p75 = por %p73, %p74
      %p76 = scmp.ne.s32.totalorder %s64, %s65
      %p77 = scmp.eq.s32.totalorder %s34, 3
      %p78 = por %p76, %p77
      %p80 = scmp.ne.s32.totalorder %s65, %s79
      %p81 = scmp.eq.s32.totalorder %s34, 0
      %p82 = por %p80, %p81
      %s84 = sadd.s32 %s83, 1
      %p87 = scmp.eq.s32.totalorder %s28, 3
      %p88 = scmp.ne.s32.totalorder %s83, %s85
      %p89 = scmp.eq.s32.totalorder %s28, 0
      %p90 = por %p88, %p89
      %p91 = scmp.ne.s32.totalorder %s83, %s85
      %p92 = scmp.eq.s32.totalorder %s33, 3
      %p93 = por %p91, %p92
      %p94 = scmp.ne.s32.totalorder %s85, %s86
      %p95 = scmp.eq.s32.totalorder %s33, 0
      %p96 = por %p94, %p95
      %p97 = scmp.ne.s32.totalorder %s85, %s86
      %p98 = scmp.eq.s32.totalorder %s34, 3
      %p99 = por %p97, %p98
      %p101 = scmp.ne.s32.totalorder %s86, %s100
      %p102 = scmp.eq.s32.totalorder %s34, 0
      %p103 = por %p101, %p102
      %s105 = sadd.s32 %s104, 1
      %p108 = scmp.eq.s32.totalorder %s28, 3
      %p109 = scmp.ne.s32.totalorder %s104, %s106
      %p110 = scmp.eq.s32.totalorder %s28, 0
      %p111 = por %p109, %p110
      %p112 = scmp.ne.s32.totalorder %s104, %s106
      %p113 = scmp.eq.s32.totalorder %s33, 3
      %p114 = por %p112, %p113
      %p115 = scmp.ne.s32.totalorder %s106, %s107
      %p116 = scmp.eq.s32.totalorder %s33, 0
      %p117 = por %p115, %p116
      %p118 = scmp.ne.s32.totalorder %s106, %s107
      %p119 = scmp.eq.s32.totalorder %s34, 3
      %p120 = por %p118, %p119
      %p122 = scmp.ne.s32.totalorder %s107, %s121
      %p123 = scmp.eq.s32.totalorder %s34, 0
      %p124 = por %p122, %p123
      %s126 = sadd.s32 %s125, 1
      %p129 = scmp.eq.s32.totalorder %s28, 3
      %p130 = scmp.ne.s32.totalorder %s125, %s127
      %p131 = scmp.eq.s32.totalorder %s28, 0
      %p132 = por %p130, %p131
      %p133 = scmp.ne.s32.totalorder %s125, %s127
      %p134 = scmp.eq.s32.totalorder %s33, 3
      %p135 = por %p133, %p134
      %p136 = scmp.ne.s32.totalorder %s127, %s128
      %p137 = scmp.eq.s32.totalorder %s33, 0
      %p138 = por %p136, %p137
      %p139 = scmp.ne.s32.totalorder %s127, %s128
      %p140 = scmp.eq.s32.totalorder %s34, 3
      %p141 = por %p139, %p140
      %p143 = scmp.ne.s32.totalorder %s128, %s142
      %p144 = scmp.eq.s32.totalorder %s34, 0
      %p145 = por %p143, %p144
      %s147 = sadd.s32 %s146, 1
      %p150 = scmp.eq.s32.totalorder %s28, 3
      %p151 = scmp.ne.s32.totalorder %s146, %s148
      %p152 = scmp.eq.s32.totalorder %s28, 0
      %p153 = por %p151, %p152
      %p154 = scmp.ne.s32.totalorder %s146, %s148
      %p155 = scmp.eq.s32.totalorder %s33, 3
      %p156 = por %p154, %p155
      %p157 = scmp.ne.s32.totalorder %s148, %s149
      %p158 = scmp.eq.s32.totalorder %s33, 0
      %p159 = por %p157, %p158
      %p160 = scmp.ne.s32.totalorder %s148, %s149
      %p161 = scmp.eq.s32.totalorder %s34, 3
      %p162 = por %p160, %p161
      %p164 = scmp.ne.s32.totalorder %s149, %s163
      %p165 = scmp.eq.s32.totalorder %s34, 0
      %p166 = por %p164, %p165
      %s168 = sadd.s32 %s167, 1
      %p171 = scmp.eq.s32.totalorder %s28, 3
      %p172 = scmp.ne.s32.totalorder %s167, %s169
      %p173 = scmp.eq.s32.totalorder %s28, 0
      %p174 = por %p172, %p173
      %p175 = scmp.ne.s32.totalorder %s167, %s169
      %p176 = scmp.eq.s32.totalorder %s33, 3
      %p177 = por %p175, %p176
      %p178 = scmp.ne.s32.totalorder %s169, %s170
      %p179 = scmp.eq.s32.totalorder %s33, 0
      %p180 = por %p178, %p179
      %p181 = scmp.ne.s32.totalorder %s169, %s170
      %p182 = scmp.eq.s32.totalorder %s34, 3
      %p183 = por %p181, %p182
      %p185 = scmp.ne.s32.totalorder %s170, %s184
      %p186 = scmp.eq.s32.totalorder %s34, 0
      %p187 = por %p185, %p186
      %s189 = sadd.s32 %s188, 1
      %p192 = scmp.eq.s32.totalorder %s28, 3
      %p193 = scmp.ne.s32.totalorder %s188, %s190
      %p194 = scmp.eq.s32.totalorder %s28, 0
      %p195 = por %p193, %p194
      %p196 = scmp.ne.s32.totalorder %s188, %s190
      %p197 = scmp.eq.s32.totalorder %s33, 3
      %p198 = por %p196, %p197
      %p199 = scmp.ne.s32.totalorder %s190, %s191
      %p200 = scmp.eq.s32.totalorder %s33, 0
      %p201 = por %p199, %p200
      %p202 = scmp.ne.s32.totalorder %s190, %s191
      %p203 = scmp.eq.s32.totalorder %s34, 3
      %p204 = por %p202, %p203
      %p206 = scmp.ne.s32.totalorder %s191, %s205
      %p207 = scmp.eq.s32.totalorder %s34, 0
      %p208 = por %p206, %p207
      %s210 = sadd.s32 %s209, 1
      %p213 = scmp.eq.s32.totalorder %s28, 3
      %p214 = scmp.ne.s32.totalorder %s209, %s211
      %p215 = scmp.eq.s32.totalorder %s28, 0
      %p216 = por %p214, %p215
      %p217 = scmp.ne.s32.totalorder %s209, %s211
      %p218 = scmp.eq.s32.totalorder %s33, 3
      %p219 = por %p217, %p218
      %p220 = scmp.ne.s32.totalorder %s211, %s212
      %p221 = scmp.eq.s32.totalorder %s33, 0
      %p222 = por %p220, %p221
      %p223 = scmp.ne.s32.totalorder %s211, %s212
      %p224 = scmp.eq.s32.totalorder %s34, 3
      %p225 = por %p223, %p224
      %p227 = scmp.ne.s32.totalorder %s212, %s226
      %p228 = scmp.eq.s32.totalorder %s34, 0
      %p229 = por %p227, %p228
      %s231 = sadd.s32 %s230, 1
      %p234 = scmp.eq.s32.totalorder %s28, 3
      %p235 = scmp.ne.s32.totalorder %s230, %s232
      %p236 = scmp.eq.s32.totalorder %s28, 0
      %p237 = por %p235, %p236
      %p238 = scmp.ne.s32.totalorder %s230, %s232
      %p239 = scmp.eq.s32.totalorder %s33, 3
      %p240 = por %p238, %p239
      %p241 = scmp.ne.s32.totalorder %s232, %s233
      %p242 = scmp.eq.s32.totalorder %s33, 0
      %p243 = por %p241, %p242
      %p244 = scmp.ne.s32.totalorder %s232, %s233
      %p245 = scmp.eq.s32.totalorder %s34, 3
      %p246 = por %p244, %p245
      %p248 = scmp.ne.s32.totalorder %s233, %s247
      %p249 = scmp.eq.s32.totalorder %s34, 0
      %p250 = por %p248, %p249
      %s252 = sadd.s32 %s251, 1
      %p255 = scmp.eq.s32.totalorder %s28, 3
      %p256 = scmp.ne.s32.totalorder %s251, %s253
      %p257 = scmp.eq.s32.totalorder %s28, 0
      %p258 = por %p256, %p257
      %p259 = scmp.ne.s32.totalorder %s251, %s253
      %p260 = scmp.eq.s32.totalorder %s33, 3
      %p261 = por %p259, %p260
      %p262 = scmp.ne.s32.totalorder %s253, %s254
      %p263 = scmp.eq.s32.totalorder %s33, 0
      %p264 = por %p262, %p263
      %p265 = scmp.ne.s32.totalorder %s253, %s254
      %p266 = scmp.eq.s32.totalorder %s34, 3
      %p267 = por %p265, %p266
      %p269 = scmp.ne.s32.totalorder %s254, %s268
      %p270 = scmp.eq.s32.totalorder %s34, 0
      %p271 = por %p269, %p270
      %s272 = ssub.s32 %s28, %s35
      %p273 = scmp.eq.s32.totalorder %s272, 0
      %s275 = sadd.s32 %s274, 1
      %s276 = scalar_select %p273, %s274, %s275
      %p279 = pneg %p273
      %p280 = scmp.eq.s32.totalorder %s28, 3
      %p281 = por %p279, %p280
      %p282 = scmp.ne.s32.totalorder %s274, %s277
      %p283 = scmp.eq.s32.totalorder %s28, 0
      %p284 = por %p282, %p283
      %p285 = scmp.ne.s32.totalorder %s274, %s277
      %p286 = scmp.eq.s32.totalorder %s33, 3
      %p287 = por %p285, %p286
      %p288 = scmp.ne.s32.totalorder %s277, %s278
      %p289 = scmp.eq.s32.totalorder %s33, 0
      %p290 = por %p288, %p289
      %p291 = scmp.ne.s32.totalorder %s277, %s278
      %p292 = scmp.eq.s32.totalorder %s34, 3
      %p293 = por %p291, %p292
      %p295 = scmp.ne.s32.totalorder %s278, %s294
      %p296 = scmp.eq.s32.totalorder %s34, 0
      %p297 = por %p295, %p296
      %p298 = scmp.le.s32.totalorder 1, %s28
      %p299 = scmp.lt.s32.totalorder %s28, 5
      %p300 = pnand %p298, %p299
      %p301 = pneg %p300
      // Predicated region
      $region9: #{tpu_custom_call.1} parent=5 // pred_check
        _
      $region10: #{tpu_custom_call.1} parent=5 // pred_check_branch
        %303 = sbr.rel (%p300) target = $region12
      $region11: #{tpu_custom_call.1} parent=5 // pred_region
        %s304 = ssub.s32 %s28, 1
        // Predicated region
        $region13: #{tpu_custom_call.1} parent=11 // pred_check
          %p305 = pneg %p75
        $region14: #{tpu_custom_call.1} parent=11 // pred_check_branch
          %307 = sbr.rel (%p305) target = $region16
        $region15: #{tpu_custom_call.1} parent=11 // pred_region
          %s309 = ssub.s32 256, 256
          %310 = vsyncadd [#allocation6], %s309
          %s311 = sshll.u32 [#allocation5], 4
          %s312 = int_to_ptr.vmem [resolvable:$true] %s311
          %317 = dma.hbm_to_vmem [thread:$0]  %s1, 256, %s312, [#allocation6], 128, 128, 8
        $region16: #{tpu_custom_call.1} parent=11 // pred_fallthru
          _
        // Predicated region
        $region17: #{tpu_custom_call.1} parent=11 // pred_check
          %p318 = pneg %p96
        $region18: #{tpu_custom_call.1} parent=11 // pred_check_branch
          %320 = sbr.rel (%p318) target = $region20
        $region19: #{tpu_custom_call.1} parent=11 // pred_region
          %s322 = ssub.s32 16, 16
          %323 = vsyncadd [#allocation6], %s322
          %s325 = sshll.u32 [#allocation7], 4
          %s326 = int_to_ptr.vmem [resolvable:$true] %s325
          %328 = dma.hbm_to_vmem [thread:$0]  %s2, 16, %s326, [#allocation6]
        $region20: #{tpu_custom_call.1} parent=11 // pred_fallthru
          _
        // Predicated region
        $region21: #{tpu_custom_call.1} parent=11 // pred_check
          %p329 = pneg %p117
        $region22: #{tpu_custom_call.1} parent=11 // pred_check_branch
          %331 = sbr.rel (%p329) target = $region24
        $region23: #{tpu_custom_call.1} parent=11 // pred_region
          %s333 = ssub.s32 32, 32
          %334 = vsyncadd [#allocation9], %s333
          %s335 = sshll.u32 [#allocation8], 4
          %s336 = int_to_ptr.vmem [resolvable:$true] %s335
          %341 = dma.hbm_to_vmem [thread:$0]  %s3, 32, %s336, [#allocation9], 16, 16, 1
        $region24: #{tpu_custom_call.1} parent=11 // pred_fallthru
          _
        // Predicated region
        $region25: #{tpu_custom_call.1} parent=11 // pred_check
          %p342 = pneg %p138
        $region26: #{tpu_custom_call.1} parent=11 // pred_check_branch
          %344 = sbr.rel (%p342) target = $region28
        $region27: #{tpu_custom_call.1} parent=11 // pred_region
          %s346 = ssub.s32 32, 32
          %347 = vsyncadd [#allocation9], %s346
          %s348 = sshll.u32 [#allocation10], 4
          %s349 = int_to_ptr.vmem [resolvable:$true] %s348
          %354 = dma.hbm_to_vmem [thread:$0]  %s4, 32, %s349, [#allocation9], 16, 16, 1
        $region28: #{tpu_custom_call.1} parent=11 // pred_fallthru
          _
        // Predicated region
        $region29: #{tpu_custom_call.1} parent=11 // pred_check
          %p355 = pneg %p159
        $region30: #{tpu_custom_call.1} parent=11 // pred_check_branch
          %357 = sbr.rel (%p355) target = $region32
        $region31: #{tpu_custom_call.1} parent=11 // pred_region
          %s359 = ssub.s32 4096, 4096
          %360 = vsyncadd [#allocation12], %s359
          %s361 = sshll.u32 [#allocation11], 4
          %s362 = int_to_ptr.vmem [resolvable:$true] %s361
          %367 = dma.hbm_to_vmem [thread:$0]  %s5, 4096, %s362, [#allocation12], 128, 128, 8
        $region32: #{tpu_custom_call.1} parent=11 // pred_fallthru
          _
        // Predicated region
        $region33: #{tpu_custom_call.1} parent=11 // pred_check
          %p368 = pneg %p180
        $region34: #{tpu_custom_call.1} parent=11 // pred_check_branch
          %370 = sbr.rel (%p368) target = $region36
        $region35: #{tpu_custom_call.1} parent=11 // pred_region
          %s372 = ssub.s32 32, 32
          %373 = vsyncadd [#allocation12], %s372
          %s374 = sshll.u32 [#allocation13], 4
          %s375 = int_to_ptr.vmem [resolvable:$true] %s374
          %380 = dma.hbm_to_vmem [thread:$0]  %s6, 32, %s375, [#allocation12], 16, 16, 1
        $region36: #{tpu_custom_call.1} parent=11 // pred_fallthru
          _
        // Predicated region
        $region37: #{tpu_custom_call.1} parent=11 // pred_check
          %p381 = pneg %p201
        $region38: #{tpu_custom_call.1} parent=11 // pred_check_branch
          %383 = sbr.rel (%p381) target = $region40
        $region39: #{tpu_custom_call.1} parent=11 // pred_region
          %s385 = ssub.s32 4096, 4096
          %386 = vsyncadd [#allocation15], %s385
          %s387 = sshll.u32 [#allocation14], 4
          %s388 = int_to_ptr.vmem [resolvable:$true] %s387
          %393 = dma.hbm_to_vmem [thread:$0]  %s7, 4096, %s388, [#allocation15], 128, 128, 8
        $region40: #{tpu_custom_call.1} parent=11 // pred_fallthru
          _
        // Predicated region
        $region41: #{tpu_custom_call.1} parent=11 // pred_check
          %p394 = pneg %p222
        $region42: #{tpu_custom_call.1} parent=11 // pred_check_branch
          %396 = sbr.rel (%p394) target = $region44
        $region43: #{tpu_custom_call.1} parent=11 // pred_region
          %s398 = ssub.s32 32, 32
          %399 = vsyncadd [#allocation15], %s398
          %s400 = sshll.u32 [#allocation16], 4
          %s401 = int_to_ptr.vmem [resolvable:$true] %s400
          %406 = dma.hbm_to_vmem [thread:$0]  %s8, 32, %s401, [#allocation15], 16, 16, 1
        $region44: #{tpu_custom_call.1} parent=11 // pred_fallthru
          _
        // Predicated region
        $region45: #{tpu_custom_call.1} parent=11 // pred_check
          %p407 = pneg %p243
        $region46: #{tpu_custom_call.1} parent=11 // pred_check_branch
          %409 = sbr.rel (%p407) target = $region48
        $region47: #{tpu_custom_call.1} parent=11 // pred_region
          %s411 = ssub.s32 16, 16
          %412 = vsyncadd [#allocation18], %s411
          %s414 = sshll.u32 [#allocation17], 4
          %s415 = int_to_ptr.vmem [resolvable:$true] %s414
          %417 = dma.hbm_to_vmem [thread:$0]  %s9, 16, %s415, [#allocation18]
        $region48: #{tpu_custom_call.1} parent=11 // pred_fallthru
          _
        // Predicated region
        $region49: #{tpu_custom_call.1} parent=11 // pred_check
          %p418 = pneg %p264
        $region50: #{tpu_custom_call.1} parent=11 // pred_check_branch
          %420 = sbr.rel (%p418) target = $region52
        $region51: #{tpu_custom_call.1} parent=11 // pred_region
          %s422 = ssub.s32 16, 16
          %423 = vsyncadd [#allocation18], %s422
          %s425 = sshll.u32 [#allocation19], 4
          %s426 = int_to_ptr.vmem [resolvable:$true] %s425
          %428 = dma.hbm_to_vmem [thread:$0]  %s10, 16, %s426, [#allocation18]
        $region52: #{tpu_custom_call.1} parent=11 // pred_fallthru
          _
      $region12: #{tpu_custom_call.1} parent=5 // pred_fallthru
        _
      %p429 = scmp.lt.s32.totalorder %s28, 4
      // Predicated region
      $region53: #{tpu_custom_call.1} parent=5 // pred_check
        %p430 = pneg %p429
      $region54: #{tpu_custom_call.1} parent=5 // pred_check_branch
        %432 = sbr.rel (%p430) target = $region56
      $region55: #{tpu_custom_call.1} parent=5 // pred_region
        // Predicated region
        $region57: #{tpu_custom_call.1} parent=55 // pred_check
          %p433 = pneg %p48
        $region58: #{tpu_custom_call.1} parent=55 // pred_check_branch
          %435 = sbr.rel (%p433) target = $region60
        $region59: #{tpu_custom_call.1} parent=55 // pred_region
          %s436 = sand.u32 %s38, 1
          %s437 = scalar_lea.sflag [#allocation3], %s436
          %s438 = sand.u32 %s38, 1
          %s439 = smul.addr %s438, 64
          %s440 = scalar_lea.vmem [#allocation2], %s439
          %s441 = smul.u32 8, %s28
          %s442 = ssub.s32 25, %s441
          %p443 = scmp.lt.s32.totalorder %s442, 8
          %s444 = scalar_select %p443, %s442, 8
          %s445 = smul.u32 128, %s444
          %s447 = ssub.s32 1024, %s445
          %448 = vsyncadd %s437, %s447
          %p449 = scmp.ne.s32.totalorder 0, %s445
          %s450 = smul.addr %s441, 128
          %s451 = scalar_lea.hbm %s0, %s450
          %s452 = smul.u32 8, %s444
          %s453 = sshll.u32 %s440, 4
          %s454 = int_to_ptr.vmem [resolvable:$true] %s453
          %s455 = sshll.u32 %s452, 4
          %459 = dma.hbm_to_vmem [thread:$0]  (%p449), %s451, %s455, %s454, %s437, 128, 128, 8
        $region60: #{tpu_custom_call.1} parent=55 // pred_fallthru
          _
      $region56: #{tpu_custom_call.1} parent=5 // pred_fallthru
        _
      %p460 = scmp.le.s32.totalorder 1, %s28
      %p461 = scmp.lt.s32.totalorder %s28, 5
      %p462 = pnand %p460, %p461
      %p463 = pneg %p462
      // Predicated region
      $region61: #{tpu_custom_call.1} parent=5 // pred_check
        _
      $region62: #{tpu_custom_call.1} parent=5 // pred_check_branch
        %465 = sbr.rel (%p462) target = $region64
      $region63: #{tpu_custom_call.1} parent=5 // pred_region
        %s466 = ssub.s32 %s28, 1
        %s467 = sand.u32 %s41, 1
        %s468 = scalar_lea.sflag [#allocation3], %s467
        %s469 = sand.u32 %s41, 1
        %s470 = smul.addr %s469, 64
        %s471 = scalar_lea.vmem [#allocation2], %s470
        // Predicated region
        $region65: #{tpu_custom_call.1} parent=63 // pred_check
          %p472 = pneg %p54
        $region66: #{tpu_custom_call.1} parent=63 // pred_check_branch
          %474 = sbr.rel (%p472) target = $region68
        $region67: #{tpu_custom_call.1} parent=63 // pred_region
          %475 = dma.done %s468, 1024
        $region68: #{tpu_custom_call.1} parent=63 // pred_fallthru
          _
        // Predicated region
        $region69: #{tpu_custom_call.1} parent=63 // pred_check
          %p476 = pneg %p75
        $region70: #{tpu_custom_call.1} parent=63 // pred_check_branch
          %478 = sbr.rel (%p476) target = $region72
        $region71: #{tpu_custom_call.1} parent=63 // pred_region
          %479 = dma.done [#allocation6], 256
        $region72: #{tpu_custom_call.1} parent=63 // pred_fallthru
          _
        // Predicated region
        $region73: #{tpu_custom_call.1} parent=63 // pred_check
          %p480 = pneg %p96
        $region74: #{tpu_custom_call.1} parent=63 // pred_check_branch
          %482 = sbr.rel (%p480) target = $region76
        $region75: #{tpu_custom_call.1} parent=63 // pred_region
          %483 = dma.done [#allocation6], 16
        $region76: #{tpu_custom_call.1} parent=63 // pred_fallthru
          _
        // Predicated region
        $region77: #{tpu_custom_call.1} parent=63 // pred_check
          %p484 = pneg %p117
        $region78: #{tpu_custom_call.1} parent=63 // pred_check_branch
          %486 = sbr.rel (%p484) target = $region80
        $region79: #{tpu_custom_call.1} parent=63 // pred_region
          %487 = dma.done [#allocation9], 32
        $region80: #{tpu_custom_call.1} parent=63 // pred_fallthru
          _
        // Predicated region
        $region81: #{tpu_custom_call.1} parent=63 // pred_check
          %p488 = pneg %p138
        $region82: #{tpu_custom_call.1} parent=63 // pred_check_branch
          %490 = sbr.rel (%p488) target = $region84
        $region83: #{tpu_custom_call.1} parent=63 // pred_region
          %491 = dma.done [#allocation9], 32
        $region84: #{tpu_custom_call.1} parent=63 // pred_fallthru
          _
        // Predicated region
        $region85: #{tpu_custom_call.1} parent=63 // pred_check
          %p492 = pneg %p159
        $region86: #{tpu_custom_call.1} parent=63 // pred_check_branch
          %494 = sbr.rel (%p492) target = $region88
        $region87: #{tpu_custom_call.1} parent=63 // pred_region
          %495 = dma.done [#allocation12], 4096
        $region88: #{tpu_custom_call.1} parent=63 // pred_fallthru
          _
        // Predicated region
        $region89: #{tpu_custom_call.1} parent=63 // pred_check
          %p496 = pneg %p180
        $region90: #{tpu_custom_call.1} parent=63 // pred_check_branch
          %498 = sbr.rel (%p496) target = $region92
        $region91: #{tpu_custom_call.1} parent=63 // pred_region
          %499 = dma.done [#allocation12], 32
        $region92: #{tpu_custom_call.1} parent=63 // pred_fallthru
          _
        // Predicated region
        $region93: #{tpu_custom_call.1} parent=63 // pred_check
          %p500 = pneg %p201
        $region94: #{tpu_custom_call.1} parent=63 // pred_check_branch
          %502 = sbr.rel (%p500) target = $region96
        $region95: #{tpu_custom_call.1} parent=63 // pred_region
          %503 = dma.done [#allocation15], 4096
        $region96: #{tpu_custom_call.1} parent=63 // pred_fallthru
          _
        // Predicated region
        $region97: #{tpu_custom_call.1} parent=63 // pred_check
          %p504 = pneg %p222
        $region98: #{tpu_custom_call.1} parent=63 // pred_check_branch
          %506 = sbr.rel (%p504) target = $region100
        $region99: #{tpu_custom_call.1} parent=63 // pred_region
          %507 = dma.done [#allocation15], 32
        $region100: #{tpu_custom_call.1} parent=63 // pred_fallthru
          _
        // Predicated region
        $region101: #{tpu_custom_call.1} parent=63 // pred_check
          %p508 = pneg %p243
        $region102: #{tpu_custom_call.1} parent=63 // pred_check_branch
          %510 = sbr.rel (%p508) target = $region104
        $region103: #{tpu_custom_call.1} parent=63 // pred_region
          %511 = dma.done [#allocation18], 16
        $region104: #{tpu_custom_call.1} parent=63 // pred_fallthru
          _
        // Predicated region
        $region105: #{tpu_custom_call.1} parent=63 // pred_check
          %p512 = pneg %p264
        $region106: #{tpu_custom_call.1} parent=63 // pred_check_branch
          %514 = sbr.rel (%p512) target = $region108
        $region107: #{tpu_custom_call.1} parent=63 // pred_region
          %515 = dma.done [#allocation18], 16
        $region108: #{tpu_custom_call.1} parent=63 // pred_fallthru
          _
        %s516 = sand.u32 %s41, 1
        %s517 = scalar_lea.sflag [#allocation3], %s516
        %s518 = sand.u32 %s41, 1
        %s519 = smul.addr %s518, 64
        %s520 = scalar_lea.vmem [#allocation2], %s519
        %p521 = pneg %p54
        %p522 = pneg %p51
        %p523 = pneg %p75
        %p524 = pneg %p72
        %p525 = pneg %p96
        %p526 = pneg %p93
        %p527 = pneg %p117
        %p528 = pneg %p114
        %p529 = pneg %p138
        %p530 = pneg %p135
        %p531 = pneg %p159
        %p532 = pneg %p156
        %p533 = pneg %p180
        %p534 = pneg %p177
        %p535 = pneg %p201
        %p536 = pneg %p198
        %p537 = pneg %p222
        %p538 = pneg %p219
        %p539 = pneg %p243
        %p540 = pneg %p240
        %p541 = pneg %p264
        %p542 = pneg %p261
        %p543 = pneg %p290
        %p544 = pneg %p287
        %s545 = sand.u32 %s277, 1
        %s546 = scalar_lea.sflag [#allocation4], %s545
        %s547 = sand.u32 %s277, 1
        %s548 = smul.addr %s547, 64
        %s549 = scalar_lea.vmem [#allocation20], %s548
        %s550 = smul.u32 8, %s33
        %s551 = ssub.s32 25, %s550
        %p552 = scmp.lt.s32.totalorder %s551, 8
        %s553 = scalar_select %p552, %s551, 8
        %s554 = smul.u32 128, %s553
        %s555 = smul.u32 8, %s33
        %s556 = ssub.s32 25, %s555
        %p557 = scmp.lt.s32.totalorder %s556, 8
        %s558 = scalar_select %p557, %s556, 8
        %s559 = smul.u32 128, %s558
        %v560 = vld [vmem:[%s471] sm:$0xff]
        %v561 = vld [vmem:[%s471 + $0x8] sm:$0xff]
        %v562 = vld [vmem:[%s471 + $0x10] sm:$0xff]
        %v563 = vld [vmem:[%s471 + $0x18] sm:$0xff]
        %v564 = vld [vmem:[%s471 + $0x20] sm:$0xff]
        %v565 = vld [vmem:[%s471 + $0x28] sm:$0xff]
        %v566 = vld [vmem:[%s471 + $0x30] sm:$0xff]
        %v567 = vld [vmem:[%s471 + $0x38] sm:$0xff]
        %v568 = vld [vmem:[#allocation5] sm:$0xff]
        %v569 = vld [vmem:[#allocation5 + $0x8] sm:$0xff]
        %v570 = vld [vmem:[#allocation7] sm:$0x1]
        %v572 = vlaneseq
        %v573 = vshrl.u32 %v572, 7
        %v574 = vsub.s32 0, %v573
        %v575 = vrot.slane %v570, %v574
        %vm577 = vcmask 130048
        %v579 = vsel %vm577, %v560, 0
        %v582 = vsel %vm577, %v561, 0
        %v585 = vsel %vm577, %v562, 0
        %v588 = vsel %vm577, %v563, 0
        %v591 = vsel %vm577, %v564, 0
        %v594 = vsel %vm577, %v565, 0
        %v597 = vsel %vm577, %v566, 0
        %v600 = vsel %vm577, %v567, 0
        %602 = vmatprep.subr.mxu0 0.0
        %603 = vmatpush1.msra.mxu0 %v568
        %604 = vmatprep.subr.mxu0 0.0
        %605 = vmatpush1.msra.mxu0 %v569
        %606 = vmatprep.subr.mxu0 0.0
        %607 = vmatpush1.msra.mxu0 0.0
        %608 = vmatprep.subr.mxu0 0.0
        %609 = vmatpush1.msra.mxu0 0.0
        %610 = vmatprep.subr.mxu0 0.0
        %611 = vmatpush1.msra.mxu0 0.0
        %612 = vmatprep.subr.mxu0 0.0
        %613 = vmatpush1.msra.mxu0 0.0
        %614 = vmatprep.subr.mxu0 0.0
        %615 = vmatpush1.msra.mxu0 0.0
        %616 = vmatprep.subr.mxu0 0.0
        %617 = vmatpush1.msra.mxu0 0.0
        %618 = vmatprep.subr.mxu0 0.0
        %619 = vmatpush1.msra.mxu0 0.0
        %620 = vmatprep.subr.mxu0 0.0
        %621 = vmatpush1.msra.mxu0 0.0
        %622 = vmatprep.subr.mxu0 0.0
        %623 = vmatpush1.msra.mxu0 0.0
        %624 = vmatprep.subr.mxu0 0.0
        %625 = vmatpush1.msra.mxu0 0.0
        %626 = vmatprep.subr.mxu0 0.0
        %627 = vmatpush1.msra.mxu0 0.0
        %628 = vmatprep.subr.mxu0 0.0
        %629 = vmatpush1.msra.mxu0 0.0
        %630 = vmatprep.subr.mxu0 0.0
        %631 = vmatpush1.msra.mxu0 0.0
        %632 = vmatprep.subr.mxu0 0.0
        %633 = vmatpush1.msra.mxu0 0.0
        %634 = vmatprep.subr.mxu0 0.0
        %635 = vmatpush1.msra.mxu0 0.0
        %636 = vmatprep.subr.mxu0 0.0
        %637 = vmatpush1.msra.mxu0 0.0
        %638 = vmatprep.subr.mxu0 0.0
        %639 = vmatpush1.msra.mxu0 0.0
        %640 = vmatprep.subr.mxu0 0.0
        %641 = vmatpush1.msra.mxu0 0.0
        %642 = vmatprep.subr.mxu0 0.0
        %643 = vmatpush1.msra.mxu0 0.0
        %644 = vmatprep.subr.mxu0 0.0
        %645 = vmatpush1.msra.mxu0 0.0
        %646 = vmatprep.subr.mxu0 0.0
        %647 = vmatpush1.msra.mxu0 0.0
        %648 = vmatprep.subr.mxu0 0.0
        %649 = vmatpush1.msra.mxu0 0.0
        %650 = vmatprep.subr.mxu0 0.0
        %651 = vmatpush1.msra.mxu0 0.0
        %652 = vmatprep.subr.mxu0 0.0
        %653 = vmatpush1.msra.mxu0 0.0
        %654 = vmatprep.subr.mxu0 0.0
        %655 = vmatpush1.msra.mxu0 0.0
        %656 = vmatprep.subr.mxu0 0.0
        %657 = vmatpush1.msra.mxu0 0.0
        %658 = vmatprep.subr.mxu0 0.0
        %659 = vmatpush1.msra.mxu0 0.0
        %660 = vmatprep.subr.mxu0 0.0
        %661 = vmatpush1.msra.mxu0 0.0
        %662 = vmatprep.subr.mxu0 0.0
        %663 = vmatpush1.msra.mxu0 0.0
        %664 = vmatprep.subr.mxu0 0.0
        %665 = vmatpush1.msra.mxu0 0.0
        %666 = vmatprep.mubr.f32.mxu0 0.0
        %667 = vmatmul.mubr.f32.gmra.mrb[0].mxu0 %v579
        %v668 = vpop.f32.mrb[0].mxu0
        %v669 = vadd.f32 %v575, %v668
        %v670 = vpop.f32.mrb[0].mxu0
        %671 = vmatprep.mubr.f32.mxu0 0.0
        %672 = vmatmul.mubr.f32.gmra.mrb[0].mxu0 %v582
        %v673 = vpop.f32.mrb[0].mxu0
        %v674 = vadd.f32 %v575, %v673
        %v675 = vpop.f32.mrb[0].mxu0
        %676 = vmatprep.mubr.f32.mxu0 0.0
        %677 = vmatmul.mubr.f32.gmra.mrb[0].mxu0 %v585
        %v678 = vpop.f32.mrb[0].mxu0
        %v679 = vadd.f32 %v575, %v678
        %v680 = vpop.f32.mrb[0].mxu0
        %681 = vmatprep.mubr.f32.mxu0 0.0
        %682 = vmatmul.mubr.f32.gmra.mrb[0].mxu0 %v588
        %v683 = vpop.f32.mrb[0].mxu0
        %v684 = vadd.f32 %v575, %v683
        %v685 = vpop.f32.mrb[0].mxu0
        %686 = vmatprep.mubr.f32.mxu0 0.0
        %687 = vmatmul.mubr.f32.gmra.mrb[0].mxu0 %v591
        %v688 = vpop.f32.mrb[0].mxu0
        %v689 = vadd.f32 %v575, %v688
        %v690 = vpop.f32.mrb[0].mxu0
        %691 = vmatprep.mubr.f32.mxu0 0.0
        %692 = vmatmul.mubr.f32.gmra.mrb[0].mxu0 %v594
        %v693 = vpop.f32.mrb[0].mxu0
        %v694 = vadd.f32 %v575, %v693
        %v695 = vpop.f32.mrb[0].mxu0
        %696 = vmatprep.mubr.f32.mxu0 0.0
        %697 = vmatmul.mubr.f32.gmra.mrb[0].mxu0 %v597
        %v698 = vpop.f32.mrb[0].mxu0
        %v699 = vadd.f32 %v575, %v698
        %v700 = vpop.f32.mrb[0].mxu0
        %701 = vmatprep.mubr.f32.mxu0 0.0
        %702 = vmatmul.mubr.f32.gmra.mrb[0].mxu0 %v600
        %v703 = vpop.f32.mrb[0].mxu0
        %v704 = vadd.f32 %v575, %v703
        %v705 = vpop.f32.mrb[0].mxu0
        %706 = vdwg.mxu0
        %v707 = vld [vmem:[#allocation8] sm:$0x1]
        %v708 = vld [vmem:[#allocation10] sm:$0x1]
        %709 = vadd.xlane.f32.xlu0 %v669
        %v710 = vpop.xlane.xlu0 %709
        %711 = vadd.xlane.f32.xlu0 %v674
        %v712 = vpop.xlane.xlu0 %711
        %713 = vadd.xlane.f32.xlu0 %v679
        %v714 = vpop.xlane.xlu0 %713
        %715 = vadd.xlane.f32.xlu0 %v684
        %v716 = vpop.xlane.xlu0 %715
        %717 = vadd.xlane.f32.xlu0 %v689
        %v718 = vpop.xlane.xlu0 %717
        %719 = vadd.xlane.f32.xlu0 %v694
        %v720 = vpop.xlane.xlu0 %719
        %721 = vadd.xlane.f32.xlu0 %v699
        %v722 = vpop.xlane.xlu0 %721
        %723 = vadd.xlane.f32.xlu0 %v704
        %v724 = vpop.xlane.xlu0 %723
        %v725 = vmul.f32 %v710, 0.03125
        %v726 = vmul.f32 %v712, 0.03125
        %v727 = vmul.f32 %v714, 0.03125
        %v728 = vmul.f32 %v716, 0.03125
        %v729 = vmul.f32 %v718, 0.03125
        %v730 = vmul.f32 %v720, 0.03125
        %v731 = vmul.f32 %v722, 0.03125
        %v732 = vmul.f32 %v724, 0.03125
        %v733 = vmul.f32 %v669, %v669
        %v734 = vmul.f32 %v674, %v674
        %v735 = vmul.f32 %v679, %v679
        %v736 = vmul.f32 %v684, %v684
        %v737 = vmul.f32 %v689, %v689
        %v738 = vmul.f32 %v694, %v694
        %v739 = vmul.f32 %v699, %v699
        %v740 = vmul.f32 %v704, %v704
        %741 = vadd.xlane.f32.xlu0 %v733
        %v742 = vpop.xlane.xlu0 %741
        %743 = vadd.xlane.f32.xlu0 %v734
        %v744 = vpop.xlane.xlu0 %743
        %745 = vadd.xlane.f32.xlu0 %v735
        %v746 = vpop.xlane.xlu0 %745
        %747 = vadd.xlane.f32.xlu0 %v736
        %v748 = vpop.xlane.xlu0 %747
        %749 = vadd.xlane.f32.xlu0 %v737
        %v750 = vpop.xlane.xlu0 %749
        %751 = vadd.xlane.f32.xlu0 %v738
        %v752 = vpop.xlane.xlu0 %751
        %753 = vadd.xlane.f32.xlu0 %v739
        %v754 = vpop.xlane.xlu0 %753
        %755 = vadd.xlane.f32.xlu0 %v740
        %v756 = vpop.xlane.xlu0 %755
        %v757 = vmul.f32 %v742, 0.03125
        %v758 = vmul.f32 %v744, 0.03125
        %v759 = vmul.f32 %v746, 0.03125
        %v760 = vmul.f32 %v748, 0.03125
        %v761 = vmul.f32 %v750, 0.03125
        %v762 = vmul.f32 %v752, 0.03125
        %v763 = vmul.f32 %v754, 0.03125
        %v764 = vmul.f32 %v756, 0.03125
        %v765 = vmul.f32 %v725, %v725
        %v766 = vmul.f32 %v726, %v726
        %v767 = vmul.f32 %v727, %v727
        %v768 = vmul.f32 %v728, %v728
        %v769 = vmul.f32 %v729, %v729
        %v770 = vmul.f32 %v730, %v730
        %v771 = vmul.f32 %v731, %v731
        %v772 = vmul.f32 %v732, %v732
        %v773 = vsub.f32 %v757, %v765
        %v774 = vsub.f32 %v758, %v766
        %v775 = vsub.f32 %v759, %v767
        %v776 = vsub.f32 %v760, %v768
        %v777 = vsub.f32 %v761, %v769
        %v778 = vsub.f32 %v762, %v770
        %v779 = vsub.f32 %v763, %v771
        %v780 = vsub.f32 %v764, %v772
        %v781 = vmax.f32 %v773, 0.0
        %v782 = vmax.f32 %v774, 0.0
        %v783 = vmax.f32 %v775, 0.0
        %v784 = vmax.f32 %v776, 0.0
        %v785 = vmax.f32 %v777, 0.0
        %v786 = vmax.f32 %v778, 0.0
        %v787 = vmax.f32 %v779, 0.0
        %v788 = vmax.f32 %v780, 0.0
        %v789 = vsub.f32 %v669, %v725
        %v790 = vsub.f32 %v674, %v726
        %v791 = vsub.f32 %v679, %v727
        %v792 = vsub.f32 %v684, %v728
        %v793 = vsub.f32 %v689, %v729
        %v794 = vsub.f32 %v694, %v730
        %v795 = vsub.f32 %v699, %v731
        %v796 = vsub.f32 %v704, %v732
        %v797 = vadd.f32 %v781, 1e-05
        %v798 = vadd.f32 %v782, 1e-05
        %v799 = vadd.f32 %v783, 1e-05
        %v800 = vadd.f32 %v784, 1e-05
        %v801 = vadd.f32 %v785, 1e-05
        %v802 = vadd.f32 %v786, 1e-05
        %v803 = vadd.f32 %v787, 1e-05
        %v804 = vadd.f32 %v788, 1e-05
        %v805 = vrsqrt.pop %v797
        %v806 = vrsqrt.pop %v798
        %v807 = vrsqrt.pop %v799
        %v808 = vrsqrt.pop %v800
        %v809 = vrsqrt.pop %v801
        %v810 = vrsqrt.pop %v802
        %v811 = vrsqrt.pop %v803
        %v812 = vrsqrt.pop %v804
        %v813 = vmul.f32 %v789, %v805
        %v814 = vmul.f32 %v790, %v806
        %v815 = vmul.f32 %v791, %v807
        %v816 = vmul.f32 %v792, %v808
        %v817 = vmul.f32 %v793, %v809
        %v818 = vmul.f32 %v794, %v810
        %v819 = vmul.f32 %v795, %v811
        %v820 = vmul.f32 %v796, %v812
        %v822 = vlaneseq
        %v823 = vshrl.u32 %v822, 7
        %v824 = vsub.s32 0, %v823
        %v825 = vrot.slane %v707, %v824
        %v827 = vmul.f32 %v813, %v825
        %v828 = vmul.f32 %v814, %v825
        %v829 = vmul.f32 %v815, %v825
        %v830 = vmul.f32 %v816, %v825
        %v831 = vmul.f32 %v817, %v825
        %v832 = vmul.f32 %v818, %v825
        %v833 = vmul.f32 %v819, %v825
        %v834 = vmul.f32 %v820, %v825
        %v836 = vlaneseq
        %v837 = vshrl.u32 %v836, 7
        %v838 = vsub.s32 0, %v837
        %v839 = vrot.slane %v708, %v838
        %v841 = vadd.f32 %v827, %v839
        %v842 = vadd.f32 %v828, %v839
        %v843 = vadd.f32 %v829, %v839
        %v844 = vadd.f32 %v830, %v839
        %v845 = vadd.f32 %v831, %v839
        %v846 = vadd.f32 %v832, %v839
        %v847 = vadd.f32 %v833, %v839
        %v848 = vadd.f32 %v834, %v839
        %v849 = vld [vmem:[#allocation11] sm:$0xff]
        %v850 = vld [vmem:[#allocation11 + $0x8] sm:$0xff]
        %v851 = vld [vmem:[#allocation11 + $0x10] sm:$0xff]
        %v852 = vld [vmem:[#allocation11 + $0x18] sm:$0xff]
        %v853 = vld [vmem:[#allocation11 + $0x20] sm:$0xff]
        %v854 = vld [vmem:[#allocation11 + $0x28] sm:$0xff]
        %v855 = vld [vmem:[#allocation11 + $0x30] sm:$0xff]
        %v856 = vld [vmem:[#allocation11 + $0x38] sm:$0xff]
        %v857 = vld [vmem:[#allocation11 + $0x40] sm:$0xff]
        %v858 = vld [vmem:[#allocation11 + $0x48] sm:$0xff]
        %v859 = vld [vmem:[#allocation11 + $0x50] sm:$0xff]
        %v860 = vld [vmem:[#allocation11 + $0x58] sm:$0xff]
        %v861 = vld [vmem:[#allocation11 + $0x60] sm:$0xff]
        %v862 = vld [vmem:[#allocation11 + $0x68] sm:$0xff]
        %v863 = vld [vmem:[#allocation11 + $0x70] sm:$0xff]
        %v864 = vld [vmem:[#allocation11 + $0x78] sm:$0xff]
        %v865 = vld [vmem:[#allocation13] sm:$0x1]
        %v867 = vlaneseq
        %v868 = vshrl.u32 %v867, 7
        %v869 = vsub.s32 0, %v868
        %v870 = vrot.slane %v865, %v869
        %872 = vmatprep.subr.mxu0 0.0
        %873 = vmatpush1.msra.mxu0 %v849
        %874 = vmatprep.subr.mxu0 0.0
        %875 = vmatpush1.msra.mxu0 %v850
        %876 = vmatprep.subr.mxu0 0.0
        %877 = vmatpush1.msra.mxu0 %v851
        %878 = vmatprep.subr.mxu0 0.0
        %879 = vmatpush1.msra.mxu0 %v852
        %880 = vmatprep.subr.mxu0 0.0
        %881 = vmatpush1.msra.mxu0 %v853
        %882 = vmatprep.subr.mxu0 0.0
        %883 = vmatpush1.msra.mxu0 %v854
        %884 = vmatprep.subr.mxu0 0.0
        %885 = vmatpush1.msra.mxu0 %v855
        %886 = vmatprep.subr.mxu0 0.0
        %887 = vmatpush1.msra.mxu0 %v856
        %888 = vmatprep.subr.mxu0 0.0
        %889 = vmatpush1.msra.mxu0 %v857
        %890 = vmatprep.subr.mxu0 0.0
        %891 = vmatpush1.msra.mxu0 %v858
        %892 = vmatprep.subr.mxu0 0.0
        %893 = vmatpush1.msra.mxu0 %v859
        %894 = vmatprep.subr.mxu0 0.0
        %895 = vmatpush1.msra.mxu0 %v860
        %896 = vmatprep.subr.mxu0 0.0
        %897 = vmatpush1.msra.mxu0 %v861
        %898 = vmatprep.subr.mxu0 0.0
        %899 = vmatpush1.msra.mxu0 %v862
        %900 = vmatprep.subr.mxu0 0.0
        %901 = vmatpush1.msra.mxu0 %v863
        %902 = vmatprep.subr.mxu0 0.0
        %903 = vmatpush1.msra.mxu0 %v864
        %904 = vmatprep.subr.mxu0 0.0
        %905 = vmatpush1.msra.mxu0 0.0
        %906 = vmatprep.subr.mxu0 0.0
        %907 = vmatpush1.msra.mxu0 0.0
        %908 = vmatprep.subr.mxu0 0.0
        %909 = vmatpush1.msra.mxu0 0.0
        %910 = vmatprep.subr.mxu0 0.0
        %911 = vmatpush1.msra.mxu0 0.0
        %912 = vmatprep.subr.mxu0 0.0
        %913 = vmatpush1.msra.mxu0 0.0
        %914 = vmatprep.subr.mxu0 0.0
        %915 = vmatpush1.msra.mxu0 0.0
        %916 = vmatprep.subr.mxu0 0.0
        %917 = vmatpush1.msra.mxu0 0.0
        %918 = vmatprep.subr.mxu0 0.0
        %919 = vmatpush1.msra.mxu0 0.0
        %920 = vmatprep.subr.mxu0 0.0
        %921 = vmatpush1.msra.mxu0 0.0
        %922 = vmatprep.subr.mxu0 0.0
        %923 = vmatpush1.msra.mxu0 0.0
        %924 = vmatprep.subr.mxu0 0.0
        %925 = vmatpush1.msra.mxu0 0.0
        %926 = vmatprep.subr.mxu0 0.0
        %927 = vmatpush1.msra.mxu0 0.0
        %928 = vmatprep.subr.mxu0 0.0
        %929 = vmatpush1.msra.mxu0 0.0
        %930 = vmatprep.subr.mxu0 0.0
        %931 = vmatpush1.msra.mxu0 0.0
        %932 = vmatprep.subr.mxu0 0.0
        %933 = vmatpush1.msra.mxu0 0.0
        %934 = vmatprep.subr.mxu0 0.0
        %935 = vmatpush1.msra.mxu0 0.0
        %936 = vmatprep.mubr.f32.mxu0 0.0
        %937 = vmatmul.mubr.f32.gmra.mrb[0].mxu0 %v841
        %v938 = vpop.f32.mrb[0].mxu0
        %v939 = vadd.f32 %v870, %v938
        %v940 = vpop.f32.mrb[0].mxu0
        %941 = vmatprep.mubr.f32.mxu0 0.0
        %942 = vmatmul.mubr.f32.gmra.mrb[0].mxu0 %v842
        %v943 = vpop.f32.mrb[0].mxu0
        %v944 = vadd.f32 %v870, %v943
        %v945 = vpop.f32.mrb[0].mxu0
        %946 = vmatprep.mubr.f32.mxu0 0.0
        %947 = vmatmul.mubr.f32.gmra.mrb[0].mxu0 %v843
        %v948 = vpop.f32.mrb[0].mxu0
        %v949 = vadd.f32 %v870, %v948
        %v950 = vpop.f32.mrb[0].mxu0
        %951 = vmatprep.mubr.f32.mxu0 0.0
        %952 = vmatmul.mubr.f32.gmra.mrb[0].mxu0 %v844
        %v953 = vpop.f32.mrb[0].mxu0
        %v954 = vadd.f32 %v870, %v953
        %v955 = vpop.f32.mrb[0].mxu0
        %956 = vmatprep.mubr.f32.mxu0 0.0
        %957 = vmatmul.mubr.f32.gmra.mrb[0].mxu0 %v845
        %v958 = vpop.f32.mrb[0].mxu0
        %v959 = vadd.f32 %v870, %v958
        %v960 = vpop.f32.mrb[0].mxu0
        %961 = vmatprep.mubr.f32.mxu0 0.0
        %962 = vmatmul.mubr.f32.gmra.mrb[0].mxu0 %v846
        %v963 = vpop.f32.mrb[0].mxu0
        %v964 = vadd.f32 %v870, %v963
        %v965 = vpop.f32.mrb[0].mxu0
        %966 = vmatprep.mubr.f32.mxu0 0.0
        %967 = vmatmul.mubr.f32.gmra.mrb[0].mxu0 %v847
        %v968 = vpop.f32.mrb[0].mxu0
        %v969 = vadd.f32 %v870, %v968
        %v970 = vpop.f32.mrb[0].mxu0
        %971 = vmatprep.mubr.f32.mxu0 0.0
        %972 = vmatmul.mubr.f32.gmra.mrb[0].mxu0 %v848
        %v973 = vpop.f32.mrb[0].mxu0
        %v974 = vadd.f32 %v870, %v973
        %v975 = vpop.f32.mrb[0].mxu0
        %976 = vdwg.mxu0
        %v977 = vmax.f32 %v939, 0.0
        %v978 = vmax.f32 %v944, 0.0
        %v979 = vmax.f32 %v949, 0.0
        %v980 = vmax.f32 %v954, 0.0
        %v981 = vmax.f32 %v959, 0.0
        %v982 = vmax.f32 %v964, 0.0
        %v983 = vmax.f32 %v969, 0.0
        %v984 = vmax.f32 %v974, 0.0
        %v985 = vld [vmem:[#allocation14] sm:$0xff]
        %v986 = vld [vmem:[#allocation14 + $0x8] sm:$0xff]
        %v987 = vld [vmem:[#allocation14 + $0x10] sm:$0xff]
        %v988 = vld [vmem:[#allocation14 + $0x18] sm:$0xff]
        %v989 = vld [vmem:[#allocation14 + $0x20] sm:$0xff]
        %v990 = vld [vmem:[#allocation14 + $0x28] sm:$0xff]
        %v991 = vld [vmem:[#allocation14 + $0x30] sm:$0xff]
        %v992 = vld [vmem:[#allocation14 + $0x38] sm:$0xff]
        %v993 = vld [vmem:[#allocation14 + $0x40] sm:$0xff]
        %v994 = vld [vmem:[#allocation14 + $0x48] sm:$0xff]
        %v995 = vld [vmem:[#allocation14 + $0x50] sm:$0xff]
        %v996 = vld [vmem:[#allocation14 + $0x58] sm:$0xff]
        %v997 = vld [vmem:[#allocation14 + $0x60] sm:$0xff]
        %v998 = vld [vmem:[#allocation14 + $0x68] sm:$0xff]
        %v999 = vld [vmem:[#allocation14 + $0x70] sm:$0xff]
        %v1000 = vld [vmem:[#allocation14 + $0x78] sm:$0xff]
        %1001 = vmatprep.subr.mxu0 0.0
        %1002 = vmatpush1.msra.mxu0 %v985
        %1003 = vmatprep.subr.mxu0 0.0
        %1004 = vmatpush1.msra.mxu0 %v986
        %1005 = vmatprep.subr.mxu0 0.0
        %1006 = vmatpush1.msra.mxu0 %v987
        %1007 = vmatprep.subr.mxu0 0.0
        %1008 = vmatpush1.msra.mxu0 %v988
        %1009 = vmatprep.subr.mxu0 0.0
        %1010 = vmatpush1.msra.mxu0 %v989
        %1011 = vmatprep.subr.mxu0 0.0
        %1012 = vmatpush1.msra.mxu0 %v990
        %1013 = vmatprep.subr.mxu0 0.0
        %1014 = vmatpush1.msra.mxu0 %v991
        %1015 = vmatprep.subr.mxu0 0.0
        %1016 = vmatpush1.msra.mxu0 %v992
        %1017 = vmatprep.subr.mxu0 0.0
        %1018 = vmatpush1.msra.mxu0 %v993
        %1019 = vmatprep.subr.mxu0 0.0
        %1020 = vmatpush1.msra.mxu0 %v994
        %1021 = vmatprep.subr.mxu0 0.0
        %1022 = vmatpush1.msra.mxu0 %v995
        %1023 = vmatprep.subr.mxu0 0.0
        %1024 = vmatpush1.msra.mxu0 %v996
        %1025 = vmatprep.subr.mxu0 0.0
        %1026 = vmatpush1.msra.mxu0 %v997
        %1027 = vmatprep.subr.mxu0 0.0
        %1028 = vmatpush1.msra.mxu0 %v998
        %1029 = vmatprep.subr.mxu0 0.0
        %1030 = vmatpush1.msra.mxu0 %v999
        %1031 = vmatprep.subr.mxu0 0.0
        %1032 = vmatpush1.msra.mxu0 %v1000
        %1033 = vmatprep.subr.mxu0 0.0
        %1034 = vmatpush1.msra.mxu0 0.0
        %1035 = vmatprep.subr.mxu0 0.0
        %1036 = vmatpush1.msra.mxu0 0.0
        %1037 = vmatprep.subr.mxu0 0.0
        %1038 = vmatpush1.msra.mxu0 0.0
        %1039 = vmatprep.subr.mxu0 0.0
        %1040 = vmatpush1.msra.mxu0 0.0
        %1041 = vmatprep.subr.mxu0 0.0
        %1042 = vmatpush1.msra.mxu0 0.0
        %1043 = vmatprep.subr.mxu0 0.0
        %1044 = vmatpush1.msra.mxu0 0.0
        %1045 = vmatprep.subr.mxu0 0.0
        %1046 = vmatpush1.msra.mxu0 0.0
        %1047 = vmatprep.subr.mxu0 0.0
        %1048 = vmatpush1.msra.mxu0 0.0
        %1049 = vmatprep.subr.mxu0 0.0
        %1050 = vmatpush1.msra.mxu0 0.0
        %1051 = vmatprep.subr.mxu0 0.0
        %1052 = vmatpush1.msra.mxu0 0.0
        %1053 = vmatprep.subr.mxu0 0.0
        %1054 = vmatpush1.msra.mxu0 0.0
        %1055 = vmatprep.subr.mxu0 0.0
        %1056 = vmatpush1.msra.mxu0 0.0
        %1057 = vmatprep.subr.mxu0 0.0
        %1058 = vmatpush1.msra.mxu0 0.0
        %1059 = vmatprep.subr.mxu0 0.0
        %1060 = vmatpush1.msra.mxu0 0.0
        %1061 = vmatprep.subr.mxu0 0.0
        %1062 = vmatpush1.msra.mxu0 0.0
        %1063 = vmatprep.subr.mxu0 0.0
        %1064 = vmatpush1.msra.mxu0 0.0
        %1065 = vmatprep.mubr.f32.mxu0 0.0
        %1066 = vmatmul.mubr.f32.gmra.mrb[0].mxu0 %v977
        %v1067 = vpop.f32.mrb[0].mxu0
        %v1068 = vadd.f32 0.0, %v1067
        %v1069 = vpop.f32.mrb[0].mxu0
        %1070 = vmatprep.mubr.f32.mxu0 0.0
        %1071 = vmatmul.mubr.f32.gmra.mrb[0].mxu0 %v978
        %v1072 = vpop.f32.mrb[0].mxu0
        %v1073 = vadd.f32 0.0, %v1072
        %v1074 = vpop.f32.mrb[0].mxu0
        %1075 = vmatprep.mubr.f32.mxu0 0.0
        %1076 = vmatmul.mubr.f32.gmra.mrb[0].mxu0 %v979
        %v1077 = vpop.f32.mrb[0].mxu0
        %v1078 = vadd.f32 0.0, %v1077
        %v1079 = vpop.f32.mrb[0].mxu0
        %1080 = vmatprep.mubr.f32.mxu0 0.0
        %1081 = vmatmul.mubr.f32.gmra.mrb[0].mxu0 %v980
        %v1082 = vpop.f32.mrb[0].mxu0
        %v1083 = vadd.f32 0.0, %v1082
        %v1084 = vpop.f32.mrb[0].mxu0
        %1085 = vmatprep.mubr.f32.mxu0 0.0
        %1086 = vmatmul.mubr.f32.gmra.mrb[0].mxu0 %v981
        %v1087 = vpop.f32.mrb[0].mxu0
        %v1088 = vadd.f32 0.0, %v1087
        %v1089 = vpop.f32.mrb[0].mxu0
        %1090 = vmatprep.mubr.f32.mxu0 0.0
        %1091 = vmatmul.mubr.f32.gmra.mrb[0].mxu0 %v982
        %v1092 = vpop.f32.mrb[0].mxu0
        %v1093 = vadd.f32 0.0, %v1092
        %v1094 = vpop.f32.mrb[0].mxu0
        %1095 = vmatprep.mubr.f32.mxu0 0.0
        %1096 = vmatmul.mubr.f32.gmra.mrb[0].mxu0 %v983
        %v1097 = vpop.f32.mrb[0].mxu0
        %v1098 = vadd.f32 0.0, %v1097
        %v1099 = vpop.f32.mrb[0].mxu0
        %1100 = vmatprep.mubr.f32.mxu0 0.0
        %1101 = vmatmul.mubr.f32.gmra.mrb[0].mxu0 %v984
        %v1102 = vpop.f32.mrb[0].mxu0
        %v1103 = vadd.f32 0.0, %v1102
        %v1104 = vpop.f32.mrb[0].mxu0
        %1105 = vdwg.mxu0
        %v1106 = vadd.f32 %v669, %v1068
        %v1107 = vadd.f32 %v674, %v1073
        %v1108 = vadd.f32 %v679, %v1078
        %v1109 = vadd.f32 %v684, %v1083
        %v1110 = vadd.f32 %v689, %v1088
        %v1111 = vadd.f32 %v694, %v1093
        %v1112 = vadd.f32 %v699, %v1098
        %v1113 = vadd.f32 %v704, %v1103
        %v1114 = vld [vmem:[#allocation16] sm:$0x1]
        %v1116 = vlaneseq
        %v1117 = vshrl.u32 %v1116, 7
        %v1118 = vsub.s32 0, %v1117
        %v1119 = vrot.slane %v1114, %v1118
        %v1121 = vadd.f32 %v1106, %v1119
        %v1122 = vadd.f32 %v1107, %v1119
        %v1123 = vadd.f32 %v1108, %v1119
        %v1124 = vadd.f32 %v1109, %v1119
        %v1125 = vadd.f32 %v1110, %v1119
        %v1126 = vadd.f32 %v1111, %v1119
        %v1127 = vadd.f32 %v1112, %v1119
        %v1128 = vadd.f32 %v1113, %v1119
        %s1129 = scalar_lea.vmem [#allocation8], 1
        %v1130 = vld [vmem:[%s1129] sm:$0x1]
        %s1131 = scalar_lea.vmem [#allocation10], 1
        %v1132 = vld [vmem:[%s1131] sm:$0x1]
        %1133 = vadd.xlane.f32.xlu0 %v1121
        %v1134 = vpop.xlane.xlu0 %1133
        %1135 = vadd.xlane.f32.xlu0 %v1122
        %v1136 = vpop.xlane.xlu0 %1135
        %1137 = vadd.xlane.f32.xlu0 %v1123
        %v1138 = vpop.xlane.xlu0 %1137
        %1139 = vadd.xlane.f32.xlu0 %v1124
        %v1140 = vpop.xlane.xlu0 %1139
        %1141 = vadd.xlane.f32.xlu0 %v1125
        %v1142 = vpop.xlane.xlu0 %1141
        %1143 = vadd.xlane.f32.xlu0 %v1126
        %v1144 = vpop.xlane.xlu0 %1143
        %1145 = vadd.xlane.f32.xlu0 %v1127
        %v1146 = vpop.xlane.xlu0 %1145
        %1147 = vadd.xlane.f32.xlu0 %v1128
        %v1148 = vpop.xlane.xlu0 %1147
        %v1149 = vmul.f32 %v1134, 0.03125
        %v1150 = vmul.f32 %v1136, 0.03125
        %v1151 = vmul.f32 %v1138, 0.03125
        %v1152 = vmul.f32 %v1140, 0.03125
        %v1153 = vmul.f32 %v1142, 0.03125
        %v1154 = vmul.f32 %v1144, 0.03125
        %v1155 = vmul.f32 %v1146, 0.03125
        %v1156 = vmul.f32 %v1148, 0.03125
        %v1157 = vmul.f32 %v1121, %v1121
        %v1158 = vmul.f32 %v1122, %v1122
        %v1159 = vmul.f32 %v1123, %v1123
        %v1160 = vmul.f32 %v1124, %v1124
        %v1161 = vmul.f32 %v1125, %v1125
        %v1162 = vmul.f32 %v1126, %v1126
        %v1163 = vmul.f32 %v1127, %v1127
        %v1164 = vmul.f32 %v1128, %v1128
        %1165 = vadd.xlane.f32.xlu0 %v1157
        %v1166 = vpop.xlane.xlu0 %1165
        %1167 = vadd.xlane.f32.xlu0 %v1158
        %v1168 = vpop.xlane.xlu0 %1167
        %1169 = vadd.xlane.f32.xlu0 %v1159
        %v1170 = vpop.xlane.xlu0 %1169
        %1171 = vadd.xlane.f32.xlu0 %v1160
        %v1172 = vpop.xlane.xlu0 %1171
        %1173 = vadd.xlane.f32.xlu0 %v1161
        %v1174 = vpop.xlane.xlu0 %1173
        %1175 = vadd.xlane.f32.xlu0 %v1162
        %v1176 = vpop.xlane.xlu0 %1175
        %1177 = vadd.xlane.f32.xlu0 %v1163
        %v1178 = vpop.xlane.xlu0 %1177
        %1179 = vadd.xlane.f32.xlu0 %v1164
        %v1180 = vpop.xlane.xlu0 %1179
        %v1181 = vmul.f32 %v1166, 0.03125
        %v1182 = vmul.f32 %v1168, 0.03125
        %v1183 = vmul.f32 %v1170, 0.03125
        %v1184 = vmul.f32 %v1172, 0.03125
        %v1185 = vmul.f32 %v1174, 0.03125
        %v1186 = vmul.f32 %v1176, 0.03125
        %v1187 = vmul.f32 %v1178, 0.03125
        %v1188 = vmul.f32 %v1180, 0.03125
        %v1189 = vmul.f32 %v1149, %v1149
        %v1190 = vmul.f32 %v1150, %v1150
        %v1191 = vmul.f32 %v1151, %v1151
        %v1192 = vmul.f32 %v1152, %v1152
        %v1193 = vmul.f32 %v1153, %v1153
        %v1194 = vmul.f32 %v1154, %v1154
        %v1195 = vmul.f32 %v1155, %v1155
        %v1196 = vmul.f32 %v1156, %v1156
        %v1197 = vsub.f32 %v1181, %v1189
        %v1198 = vsub.f32 %v1182, %v1190
        %v1199 = vsub.f32 %v1183, %v1191
        %v1200 = vsub.f32 %v1184, %v1192
        %v1201 = vsub.f32 %v1185, %v1193
        %v1202 = vsub.f32 %v1186, %v1194
        %v1203 = vsub.f32 %v1187, %v1195
        %v1204 = vsub.f32 %v1188, %v1196
        %v1205 = vmax.f32 %v1197, 0.0
        %v1206 = vmax.f32 %v1198, 0.0
        %v1207 = vmax.f32 %v1199, 0.0
        %v1208 = vmax.f32 %v1200, 0.0
        %v1209 = vmax.f32 %v1201, 0.0
        %v1210 = vmax.f32 %v1202, 0.0
        %v1211 = vmax.f32 %v1203, 0.0
        %v1212 = vmax.f32 %v1204, 0.0
        %v1213 = vsub.f32 %v1121, %v1149
        %v1214 = vsub.f32 %v1122, %v1150
        %v1215 = vsub.f32 %v1123, %v1151
        %v1216 = vsub.f32 %v1124, %v1152
        %v1217 = vsub.f32 %v1125, %v1153
        %v1218 = vsub.f32 %v1126, %v1154
        %v1219 = vsub.f32 %v1127, %v1155
        %v1220 = vsub.f32 %v1128, %v1156
        %v1221 = vadd.f32 %v1205, 1e-05
        %v1222 = vadd.f32 %v1206, 1e-05
        %v1223 = vadd.f32 %v1207, 1e-05
        %v1224 = vadd.f32 %v1208, 1e-05
        %v1225 = vadd.f32 %v1209, 1e-05
        %v1226 = vadd.f32 %v1210, 1e-05
        %v1227 = vadd.f32 %v1211, 1e-05
        %v1228 = vadd.f32 %v1212, 1e-05
        %v1229 = vrsqrt.pop %v1221
        %v1230 = vrsqrt.pop %v1222
        %v1231 = vrsqrt.pop %v1223
        %v1232 = vrsqrt.pop %v1224
        %v1233 = vrsqrt.pop %v1225
        %v1234 = vrsqrt.pop %v1226
        %v1235 = vrsqrt.pop %v1227
        %v1236 = vrsqrt.pop %v1228
        %v1237 = vmul.f32 %v1213, %v1229
        %v1238 = vmul.f32 %v1214, %v1230
        %v1239 = vmul.f32 %v1215, %v1231
        %v1240 = vmul.f32 %v1216, %v1232
        %v1241 = vmul.f32 %v1217, %v1233
        %v1242 = vmul.f32 %v1218, %v1234
        %v1243 = vmul.f32 %v1219, %v1235
        %v1244 = vmul.f32 %v1220, %v1236
        %v1246 = vlaneseq
        %v1247 = vshrl.u32 %v1246, 7
        %v1248 = vsub.s32 0, %v1247
        %v1249 = vrot.slane %v1130, %v1248
        %v1251 = vmul.f32 %v1237, %v1249
        %v1252 = vmul.f32 %v1238, %v1249
        %v1253 = vmul.f32 %v1239, %v1249
        %v1254 = vmul.f32 %v1240, %v1249
        %v1255 = vmul.f32 %v1241, %v1249
        %v1256 = vmul.f32 %v1242, %v1249
        %v1257 = vmul.f32 %v1243, %v1249
        %v1258 = vmul.f32 %v1244, %v1249
        %v1260 = vlaneseq
        %v1261 = vshrl.u32 %v1260, 7
        %v1262 = vsub.s32 0, %v1261
        %v1263 = vrot.slane %v1132, %v1262
        %v1265 = vadd.f32 %v1251, %v1263
        %v1266 = vadd.f32 %v1252, %v1263
        %v1267 = vadd.f32 %v1253, %v1263
        %v1268 = vadd.f32 %v1254, %v1263
        %v1269 = vadd.f32 %v1255, %v1263
        %v1270 = vadd.f32 %v1256, %v1263
        %v1271 = vadd.f32 %v1257, %v1263
        %v1272 = vadd.f32 %v1258, %v1263
        %s1273 = scalar_lea.vmem [#allocation11], 128
        %v1274 = vld [vmem:[%s1273] sm:$0xff]
        %v1275 = vld [vmem:[%s1273 + $0x8] sm:$0xff]
        %v1276 = vld [vmem:[%s1273 + $0x10] sm:$0xff]
        %v1277 = vld [vmem:[%s1273 + $0x18] sm:$0xff]
        %v1278 = vld [vmem:[%s1273 + $0x20] sm:$0xff]
        %v1279 = vld [vmem:[%s1273 + $0x28] sm:$0xff]
        %v1280 = vld [vmem:[%s1273 + $0x30] sm:$0xff]
        %v1281 = vld [vmem:[%s1273 + $0x38] sm:$0xff]
        %v1282 = vld [vmem:[%s1273 + $0x40] sm:$0xff]
        %v1283 = vld [vmem:[%s1273 + $0x48] sm:$0xff]
        %v1284 = vld [vmem:[%s1273 + $0x50] sm:$0xff]
        %v1285 = vld [vmem:[%s1273 + $0x58] sm:$0xff]
        %v1286 = vld [vmem:[%s1273 + $0x60] sm:$0xff]
        %v1287 = vld [vmem:[%s1273 + $0x68] sm:$0xff]
        %v1288 = vld [vmem:[%s1273 + $0x70] sm:$0xff]
        %v1289 = vld [vmem:[%s1273 + $0x78] sm:$0xff]
        %s1290 = scalar_lea.vmem [#allocation13], 1
        %v1291 = vld [vmem:[%s1290] sm:$0x1]
        %v1293 = vlaneseq
        %v1294 = vshrl.u32 %v1293, 7
        %v1295 = vsub.s32 0, %v1294
        %v1296 = vrot.slane %v1291, %v1295
        %1298 = vmatprep.subr.mxu0 0.0
        %1299 = vmatpush1.msra.mxu0 %v1274
        %1300 = vmatprep.subr.mxu0 0.0
        %1301 = vmatpush1.msra.mxu0 %v1275
        %1302 = vmatprep.subr.mxu0 0.0
        %1303 = vmatpush1.msra.mxu0 %v1276
        %1304 = vmatprep.subr.mxu0 0.0
        %1305 = vmatpush1.msra.mxu0 %v1277
        %1306 = vmatprep.subr.mxu0 0.0
        %1307 = vmatpush1.msra.mxu0 %v1278
        %1308 = vmatprep.subr.mxu0 0.0
        %1309 = vmatpush1.msra.mxu0 %v1279
        %1310 = vmatprep.subr.mxu0 0.0
        %1311 = vmatpush1.msra.mxu0 %v1280
        %1312 = vmatprep.subr.mxu0 0.0
        %1313 = vmatpush1.msra.mxu0 %v1281
        %1314 = vmatprep.subr.mxu0 0.0
        %1315 = vmatpush1.msra.mxu0 %v1282
        %1316 = vmatprep.subr.mxu0 0.0
        %1317 = vmatpush1.msra.mxu0 %v1283
        %1318 = vmatprep.subr.mxu0 0.0
        %1319 = vmatpush1.msra.mxu0 %v1284
        %1320 = vmatprep.subr.mxu0 0.0
        %1321 = vmatpush1.msra.mxu0 %v1285
        %1322 = vmatprep.subr.mxu0 0.0
        %1323 = vmatpush1.msra.mxu0 %v1286
        %1324 = vmatprep.subr.mxu0 0.0
        %1325 = vmatpush1.msra.mxu0 %v1287
        %1326 = vmatprep.subr.mxu0 0.0
        %1327 = vmatpush1.msra.mxu0 %v1288
        %1328 = vmatprep.subr.mxu0 0.0
        %1329 = vmatpush1.msra.mxu0 %v1289
        %1330 = vmatprep.subr.mxu0 0.0
        %1331 = vmatpush1.msra.mxu0 0.0
        %1332 = vmatprep.subr.mxu0 0.0
        %1333 = vmatpush1.msra.mxu0 0.0
        %1334 = vmatprep.subr.mxu0 0.0
        %1335 = vmatpush1.msra.mxu0 0.0
        %1336 = vmatprep.subr.mxu0 0.0
        %1337 = vmatpush1.msra.mxu0 0.0
        %1338 = vmatprep.subr.mxu0 0.0
        %1339 = vmatpush1.msra.mxu0 0.0
        %1340 = vmatprep.subr.mxu0 0.0
        %1341 = vmatpush1.msra.mxu0 0.0
        %1342 = vmatprep.subr.mxu0 0.0
        %1343 = vmatpush1.msra.mxu0 0.0
        %1344 = vmatprep.subr.mxu0 0.0
        %1345 = vmatpush1.msra.mxu0 0.0
        %1346 = vmatprep.subr.mxu0 0.0
        %1347 = vmatpush1.msra.mxu0 0.0
        %1348 = vmatprep.subr.mxu0 0.0
        %1349 = vmatpush1.msra.mxu0 0.0
        %1350 = vmatprep.subr.mxu0 0.0
        %1351 = vmatpush1.msra.mxu0 0.0
        %1352 = vmatprep.subr.mxu0 0.0
        %1353 = vmatpush1.msra.mxu0 0.0
        %1354 = vmatprep.subr.mxu0 0.0
        %1355 = vmatpush1.msra.mxu0 0.0
        %1356 = vmatprep.subr.mxu0 0.0
        %1357 = vmatpush1.msra.mxu0 0.0
        %1358 = vmatprep.subr.mxu0 0.0
        %1359 = vmatpush1.msra.mxu0 0.0
        %1360 = vmatprep.subr.mxu0 0.0
        %1361 = vmatpush1.msra.mxu0 0.0
        %1362 = vmatprep.mubr.f32.mxu0 0.0
        %1363 = vmatmul.mubr.f32.gmra.mrb[0].mxu0 %v1265
        %v1364 = vpop.f32.mrb[0].mxu0
        %v1365 = vadd.f32 %v1296, %v1364
        %v1366 = vpop.f32.mrb[0].mxu0
        %1367 = vmatprep.mubr.f32.mxu0 0.0
        %1368 = vmatmul.mubr.f32.gmra.mrb[0].mxu0 %v1266
        %v1369 = vpop.f32.mrb[0].mxu0
        %v1370 = vadd.f32 %v1296, %v1369
        %v1371 = vpop.f32.mrb[0].mxu0
        %1372 = vmatprep.mubr.f32.mxu0 0.0
        %1373 = vmatmul.mubr.f32.gmra.mrb[0].mxu0 %v1267
        %v1374 = vpop.f32.mrb[0].mxu0
        %v1375 = vadd.f32 %v1296, %v1374
        %v1376 = vpop.f32.mrb[0].mxu0
        %1377 = vmatprep.mubr.f32.mxu0 0.0
        %1378 = vmatmul.mubr.f32.gmra.mrb[0].mxu0 %v1268
        %v1379 = vpop.f32.mrb[0].mxu0
        %v1380 = vadd.f32 %v1296, %v1379
        %v1381 = vpop.f32.mrb[0].mxu0
        %1382 = vmatprep.mubr.f32.mxu0 0.0
        %1383 = vmatmul.mubr.f32.gmra.mrb[0].mxu0 %v1269
        %v1384 = vpop.f32.mrb[0].mxu0
        %v1385 = vadd.f32 %v1296, %v1384
        %v1386 = vpop.f32.mrb[0].mxu0
        %1387 = vmatprep.mubr.f32.mxu0 0.0
        %1388 = vmatmul.mubr.f32.gmra.mrb[0].mxu0 %v1270
        %v1389 = vpop.f32.mrb[0].mxu0
        %v1390 = vadd.f32 %v1296, %v1389
        %v1391 = vpop.f32.mrb[0].mxu0
        %1392 = vmatprep.mubr.f32.mxu0 0.0
        %1393 = vmatmul.mubr.f32.gmra.mrb[0].mxu0 %v1271
        %v1394 = vpop.f32.mrb[0].mxu0
        %v1395 = vadd.f32 %v1296, %v1394
        %v1396 = vpop.f32.mrb[0].mxu0
        %1397 = vmatprep.mubr.f32.mxu0 0.0
        %1398 = vmatmul.mubr.f32.gmra.mrb[0].mxu0 %v1272
        %v1399 = vpop.f32.mrb[0].mxu0
        %v1400 = vadd.f32 %v1296, %v1399
        %v1401 = vpop.f32.mrb[0].mxu0
        %1402 = vdwg.mxu0
        %v1403 = vmax.f32 %v1365, 0.0
        %v1404 = vmax.f32 %v1370, 0.0
        %v1405 = vmax.f32 %v1375, 0.0
        %v1406 = vmax.f32 %v1380, 0.0
        %v1407 = vmax.f32 %v1385, 0.0
        %v1408 = vmax.f32 %v1390, 0.0
        %v1409 = vmax.f32 %v1395, 0.0
        %v1410 = vmax.f32 %v1400, 0.0
        %s1411 = scalar_lea.vmem [#allocation14], 128
        %v1412 = vld [vmem:[%s1411] sm:$0xff]
        %v1413 = vld [vmem:[%s1411 + $0x8] sm:$0xff]
        %v1414 = vld [vmem:[%s1411 + $0x10] sm:$0xff]
        %v1415 = vld [vmem:[%s1411 + $0x18] sm:$0xff]
        %v1416 = vld [vmem:[%s1411 + $0x20] sm:$0xff]
        %v1417 = vld [vmem:[%s1411 + $0x28] sm:$0xff]
        %v1418 = vld [vmem:[%s1411 + $0x30] sm:$0xff]
        %v1419 = vld [vmem:[%s1411 + $0x38] sm:$0xff]
        %v1420 = vld [vmem:[%s1411 + $0x40] sm:$0xff]
        %v1421 = vld [vmem:[%s1411 + $0x48] sm:$0xff]
        %v1422 = vld [vmem:[%s1411 + $0x50] sm:$0xff]
        %v1423 = vld [vmem:[%s1411 + $0x58] sm:$0xff]
        %v1424 = vld [vmem:[%s1411 + $0x60] sm:$0xff]
        %v1425 = vld [vmem:[%s1411 + $0x68] sm:$0xff]
        %v1426 = vld [vmem:[%s1411 + $0x70] sm:$0xff]
        %v1427 = vld [vmem:[%s1411 + $0x78] sm:$0xff]
        %1428 = vmatprep.subr.mxu0 0.0
        %1429 = vmatpush1.msra.mxu0 %v1412
        %1430 = vmatprep.subr.mxu0 0.0
        %1431 = vmatpush1.msra.mxu0 %v1413
        %1432 = vmatprep.subr.mxu0 0.0
        %1433 = vmatpush1.msra.mxu0 %v1414
        %1434 = vmatprep.subr.mxu0 0.0
        %1435 = vmatpush1.msra.mxu0 %v1415
        %1436 = vmatprep.subr.mxu0 0.0
        %1437 = vmatpush1.msra.mxu0 %v1416
        %1438 = vmatprep.subr.mxu0 0.0
        %1439 = vmatpush1.msra.mxu0 %v1417
        %1440 = vmatprep.subr.mxu0 0.0
        %1441 = vmatpush1.msra.mxu0 %v1418
        %1442 = vmatprep.subr.mxu0 0.0
        %1443 = vmatpush1.msra.mxu0 %v1419
        %1444 = vmatprep.subr.mxu0 0.0
        %1445 = vmatpush1.msra.mxu0 %v1420
        %1446 = vmatprep.subr.mxu0 0.0
        %1447 = vmatpush1.msra.mxu0 %v1421
        %1448 = vmatprep.subr.mxu0 0.0
        %1449 = vmatpush1.msra.mxu0 %v1422
        %1450 = vmatprep.subr.mxu0 0.0
        %1451 = vmatpush1.msra.mxu0 %v1423
        %1452 = vmatprep.subr.mxu0 0.0
        %1453 = vmatpush1.msra.mxu0 %v1424
        %1454 = vmatprep.subr.mxu0 0.0
        %1455 = vmatpush1.msra.mxu0 %v1425
        %1456 = vmatprep.subr.mxu0 0.0
        %1457 = vmatpush1.msra.mxu0 %v1426
        %1458 = vmatprep.subr.mxu0 0.0
        %1459 = vmatpush1.msra.mxu0 %v1427
        %1460 = vmatprep.subr.mxu0 0.0
        %1461 = vmatpush1.msra.mxu0 0.0
        %1462 = vmatprep.subr.mxu0 0.0
        %1463 = vmatpush1.msra.mxu0 0.0
        %1464 = vmatprep.subr.mxu0 0.0
        %1465 = vmatpush1.msra.mxu0 0.0
        %1466 = vmatprep.subr.mxu0 0.0
        %1467 = vmatpush1.msra.mxu0 0.0
        %1468 = vmatprep.subr.mxu0 0.0
        %1469 = vmatpush1.msra.mxu0 0.0
        %1470 = vmatprep.subr.mxu0 0.0
        %1471 = vmatpush1.msra.mxu0 0.0
        %1472 = vmatprep.subr.mxu0 0.0
        %1473 = vmatpush1.msra.mxu0 0.0
        %1474 = vmatprep.subr.mxu0 0.0
        %1475 = vmatpush1.msra.mxu0 0.0
        %1476 = vmatprep.subr.mxu0 0.0
        %1477 = vmatpush1.msra.mxu0 0.0
        %1478 = vmatprep.subr.mxu0 0.0
        %1479 = vmatpush1.msra.mxu0 0.0
        %1480 = vmatprep.subr.mxu0 0.0
        %1481 = vmatpush1.msra.mxu0 0.0
        %1482 = vmatprep.subr.mxu0 0.0
        %1483 = vmatpush1.msra.mxu0 0.0
        %1484 = vmatprep.subr.mxu0 0.0
        %1485 = vmatpush1.msra.mxu0 0.0
        %1486 = vmatprep.subr.mxu0 0.0
        %1487 = vmatpush1.msra.mxu0 0.0
        %1488 = vmatprep.subr.mxu0 0.0
        %1489 = vmatpush1.msra.mxu0 0.0
        %1490 = vmatprep.subr.mxu0 0.0
        %1491 = vmatpush1.msra.mxu0 0.0
        %1492 = vmatprep.mubr.f32.mxu0 0.0
        %1493 = vmatmul.mubr.f32.gmra.mrb[0].mxu0 %v1403
        %v1494 = vpop.f32.mrb[0].mxu0
        %v1495 = vadd.f32 0.0, %v1494
        %v1496 = vpop.f32.mrb[0].mxu0
        %1497 = vmatprep.mubr.f32.mxu0 0.0
        %1498 = vmatmul.mubr.f32.gmra.mrb[0].mxu0 %v1404
        %v1499 = vpop.f32.mrb[0].mxu0
        %v1500 = vadd.f32 0.0, %v1499
        %v1501 = vpop.f32.mrb[0].mxu0
        %1502 = vmatprep.mubr.f32.mxu0 0.0
        %1503 = vmatmul.mubr.f32.gmra.mrb[0].mxu0 %v1405
        %v1504 = vpop.f32.mrb[0].mxu0
        %v1505 = vadd.f32 0.0, %v1504
        %v1506 = vpop.f32.mrb[0].mxu0
        %1507 = vmatprep.mubr.f32.mxu0 0.0
        %1508 = vmatmul.mubr.f32.gmra.mrb[0].mxu0 %v1406
        %v1509 = vpop.f32.mrb[0].mxu0
        %v1510 = vadd.f32 0.0, %v1509
        %v1511 = vpop.f32.mrb[0].mxu0
        %1512 = vmatprep.mubr.f32.mxu0 0.0
        %1513 = vmatmul.mubr.f32.gmra.mrb[0].mxu0 %v1407
        %v1514 = vpop.f32.mrb[0].mxu0
        %v1515 = vadd.f32 0.0, %v1514
        %v1516 = vpop.f32.mrb[0].mxu0
        %1517 = vmatprep.mubr.f32.mxu0 0.0
        %1518 = vmatmul.mubr.f32.gmra.mrb[0].mxu0 %v1408
        %v1519 = vpop.f32.mrb[0].mxu0
        %v1520 = vadd.f32 0.0, %v1519
        %v1521 = vpop.f32.mrb[0].mxu0
        %1522 = vmatprep.mubr.f32.mxu0 0.0
        %1523 = vmatmul.mubr.f32.gmra.mrb[0].mxu0 %v1409
        %v1524 = vpop.f32.mrb[0].mxu0
        %v1525 = vadd.f32 0.0, %v1524
        %v1526 = vpop.f32.mrb[0].mxu0
        %1527 = vmatprep.mubr.f32.mxu0 0.0
        %1528 = vmatmul.mubr.f32.gmra.mrb[0].mxu0 %v1410
        %v1529 = vpop.f32.mrb[0].mxu0
        %v1530 = vadd.f32 0.0, %v1529
        %v1531 = vpop.f32.mrb[0].mxu0
        %1532 = vdwg.mxu0
        %v1533 = vadd.f32 %v1121, %v1495
        %v1534 = vadd.f32 %v1122, %v1500
        %v1535 = vadd.f32 %v1123, %v1505
        %v1536 = vadd.f32 %v1124, %v1510
        %v1537 = vadd.f32 %v1125, %v1515
        %v1538 = vadd.f32 %v1126, %v1520
        %v1539 = vadd.f32 %v1127, %v1525
        %v1540 = vadd.f32 %v1128, %v1530
        %s1541 = scalar_lea.vmem [#allocation16], 1
        %v1542 = vld [vmem:[%s1541] sm:$0x1]
        %v1544 = vlaneseq
        %v1545 = vshrl.u32 %v1544, 7
        %v1546 = vsub.s32 0, %v1545
        %v1547 = vrot.slane %v1542, %v1546
        %v1549 = vadd.f32 %v1533, %v1547
        %v1550 = vadd.f32 %v1534, %v1547
        %v1551 = vadd.f32 %v1535, %v1547
        %v1552 = vadd.f32 %v1536, %v1547
        %v1553 = vadd.f32 %v1537, %v1547
        %v1554 = vadd.f32 %v1538, %v1547
        %v1555 = vadd.f32 %v1539, %v1547
        %v1556 = vadd.f32 %v1540, %v1547
        %v1557 = vld [vmem:[#allocation17] sm:$0x1]
        %v1558 = vld [vmem:[#allocation19] sm:$0x1]
        %1559 = vadd.xlane.f32.xlu0 %v1549
        %v1560 = vpop.xlane.xlu0 %1559
        %1561 = vadd.xlane.f32.xlu0 %v1550
        %v1562 = vpop.xlane.xlu0 %1561
        %1563 = vadd.xlane.f32.xlu0 %v1551
        %v1564 = vpop.xlane.xlu0 %1563
        %1565 = vadd.xlane.f32.xlu0 %v1552
        %v1566 = vpop.xlane.xlu0 %1565
        %1567 = vadd.xlane.f32.xlu0 %v1553
        %v1568 = vpop.xlane.xlu0 %1567
        %1569 = vadd.xlane.f32.xlu0 %v1554
        %v1570 = vpop.xlane.xlu0 %1569
        %1571 = vadd.xlane.f32.xlu0 %v1555
        %v1572 = vpop.xlane.xlu0 %1571
        %1573 = vadd.xlane.f32.xlu0 %v1556
        %v1574 = vpop.xlane.xlu0 %1573
        %v1575 = vmul.f32 %v1560, 0.03125
        %v1576 = vmul.f32 %v1562, 0.03125
        %v1577 = vmul.f32 %v1564, 0.03125
        %v1578 = vmul.f32 %v1566, 0.03125
        %v1579 = vmul.f32 %v1568, 0.03125
        %v1580 = vmul.f32 %v1570, 0.03125
        %v1581 = vmul.f32 %v1572, 0.03125
        %v1582 = vmul.f32 %v1574, 0.03125
        %v1583 = vmul.f32 %v1549, %v1549
        %v1584 = vmul.f32 %v1550, %v1550
        %v1585 = vmul.f32 %v1551, %v1551
        %v1586 = vmul.f32 %v1552, %v1552
        %v1587 = vmul.f32 %v1553, %v1553
        %v1588 = vmul.f32 %v1554, %v1554
        %v1589 = vmul.f32 %v1555, %v1555
        %v1590 = vmul.f32 %v1556, %v1556
        %1591 = vadd.xlane.f32.xlu0 %v1583
        %v1592 = vpop.xlane.xlu0 %1591
        %1593 = vadd.xlane.f32.xlu0 %v1584
        %v1594 = vpop.xlane.xlu0 %1593
        %1595 = vadd.xlane.f32.xlu0 %v1585
        %v1596 = vpop.xlane.xlu0 %1595
        %1597 = vadd.xlane.f32.xlu0 %v1586
        %v1598 = vpop.xlane.xlu0 %1597
        %1599 = vadd.xlane.f32.xlu0 %v1587
        %v1600 = vpop.xlane.xlu0 %1599
        %1601 = vadd.xlane.f32.xlu0 %v1588
        %v1602 = vpop.xlane.xlu0 %1601
        %1603 = vadd.xlane.f32.xlu0 %v1589
        %v1604 = vpop.xlane.xlu0 %1603
        %1605 = vadd.xlane.f32.xlu0 %v1590
        %v1606 = vpop.xlane.xlu0 %1605
        %v1607 = vmul.f32 %v1592, 0.03125
        %v1608 = vmul.f32 %v1594, 0.03125
        %v1609 = vmul.f32 %v1596, 0.03125
        %v1610 = vmul.f32 %v1598, 0.03125
        %v1611 = vmul.f32 %v1600, 0.03125
        %v1612 = vmul.f32 %v1602, 0.03125
        %v1613 = vmul.f32 %v1604, 0.03125
        %v1614 = vmul.f32 %v1606, 0.03125
        %v1615 = vmul.f32 %v1575, %v1575
        %v1616 = vmul.f32 %v1576, %v1576
        %v1617 = vmul.f32 %v1577, %v1577
        %v1618 = vmul.f32 %v1578, %v1578
        %v1619 = vmul.f32 %v1579, %v1579
        %v1620 = vmul.f32 %v1580, %v1580
        %v1621 = vmul.f32 %v1581, %v1581
        %v1622 = vmul.f32 %v1582, %v1582
        %v1623 = vsub.f32 %v1607, %v1615
        %v1624 = vsub.f32 %v1608, %v1616
        %v1625 = vsub.f32 %v1609, %v1617
        %v1626 = vsub.f32 %v1610, %v1618
        %v1627 = vsub.f32 %v1611, %v1619
        %v1628 = vsub.f32 %v1612, %v1620
        %v1629 = vsub.f32 %v1613, %v1621
        %v1630 = vsub.f32 %v1614, %v1622
        %v1631 = vmax.f32 %v1623, 0.0
        %v1632 = vmax.f32 %v1624, 0.0
        %v1633 = vmax.f32 %v1625, 0.0
        %v1634 = vmax.f32 %v1626, 0.0
        %v1635 = vmax.f32 %v1627, 0.0
        %v1636 = vmax.f32 %v1628, 0.0
        %v1637 = vmax.f32 %v1629, 0.0
        %v1638 = vmax.f32 %v1630, 0.0
        %v1639 = vsub.f32 %v1549, %v1575
        %v1640 = vsub.f32 %v1550, %v1576
        %v1641 = vsub.f32 %v1551, %v1577
        %v1642 = vsub.f32 %v1552, %v1578
        %v1643 = vsub.f32 %v1553, %v1579
        %v1644 = vsub.f32 %v1554, %v1580
        %v1645 = vsub.f32 %v1555, %v1581
        %v1646 = vsub.f32 %v1556, %v1582
        %v1647 = vadd.f32 %v1631, 1e-05
        %v1648 = vadd.f32 %v1632, 1e-05
        %v1649 = vadd.f32 %v1633, 1e-05
        %v1650 = vadd.f32 %v1634, 1e-05
        %v1651 = vadd.f32 %v1635, 1e-05
        %v1652 = vadd.f32 %v1636, 1e-05
        %v1653 = vadd.f32 %v1637, 1e-05
        %v1654 = vadd.f32 %v1638, 1e-05
        %v1655 = vrsqrt.pop %v1647
        %v1656 = vrsqrt.pop %v1648
        %v1657 = vrsqrt.pop %v1649
        %v1658 = vrsqrt.pop %v1650
        %v1659 = vrsqrt.pop %v1651
        %v1660 = vrsqrt.pop %v1652
        %v1661 = vrsqrt.pop %v1653
        %v1662 = vrsqrt.pop %v1654
        %v1663 = vmul.f32 %v1639, %v1655
        %v1664 = vmul.f32 %v1640, %v1656
        %v1665 = vmul.f32 %v1641, %v1657
        %v1666 = vmul.f32 %v1642, %v1658
        %v1667 = vmul.f32 %v1643, %v1659
        %v1668 = vmul.f32 %v1644, %v1660
        %v1669 = vmul.f32 %v1645, %v1661
        %v1670 = vmul.f32 %v1646, %v1662
        %v1672 = vlaneseq
        %v1673 = vshrl.u32 %v1672, 7
        %v1674 = vsub.s32 0, %v1673
        %v1675 = vrot.slane %v1557, %v1674
        %v1677 = vmul.f32 %v1663, %v1675
        %v1678 = vmul.f32 %v1664, %v1675
        %v1679 = vmul.f32 %v1665, %v1675
        %v1680 = vmul.f32 %v1666, %v1675
        %v1681 = vmul.f32 %v1667, %v1675
        %v1682 = vmul.f32 %v1668, %v1675
        %v1683 = vmul.f32 %v1669, %v1675
        %v1684 = vmul.f32 %v1670, %v1675
        %v1686 = vlaneseq
        %v1687 = vshrl.u32 %v1686, 7
        %v1688 = vsub.s32 0, %v1687
        %v1689 = vrot.slane %v1558, %v1688
        %v1691 = vadd.f32 %v1677, %v1689
        %v1692 = vadd.f32 %v1678, %v1689
        %v1693 = vadd.f32 %v1679, %v1689
        %v1694 = vadd.f32 %v1680, %v1689
        %v1695 = vadd.f32 %v1681, %v1689
        %v1696 = vadd.f32 %v1682, %v1689
        %v1697 = vadd.f32 %v1683, %v1689
        %v1698 = vadd.f32 %v1684, %v1689
        %1699 = vst [vmem:[%s549] sm:$0xff] %v1691
        %1700 = vst [vmem:[%s549 + $0x8] sm:$0xff] %v1692
        %1701 = vst [vmem:[%s549 + $0x10] sm:$0xff] %v1693
        %1702 = vst [vmem:[%s549 + $0x18] sm:$0xff] %v1694
        %1703 = vst [vmem:[%s549 + $0x20] sm:$0xff] %v1695
        %1704 = vst [vmem:[%s549 + $0x28] sm:$0xff] %v1696
        %1705 = vst [vmem:[%s549 + $0x30] sm:$0xff] %v1697
        %1706 = vst [vmem:[%s549 + $0x38] sm:$0xff] %v1698
        %s1707 = sand.u32 %s277, 1
        %s1708 = scalar_lea.sflag [#allocation4], %s1707
        %s1709 = sand.u32 %s277, 1
        %s1710 = smul.addr %s1709, 64
        %s1711 = scalar_lea.vmem [#allocation20], %s1710
        // Predicated region
        $region109: #{tpu_custom_call.1} parent=63 // pred_check
          %p1712 = pneg %p287
        $region110: #{tpu_custom_call.1} parent=63 // pred_check_branch
          %1714 = sbr.rel (%p1712) target = $region112
        $region111: #{tpu_custom_call.1} parent=63 // pred_region
          %s1715 = smul.u32 8, %s33
          %s1716 = ssub.s32 25, %s1715
          %p1717 = scmp.lt.s32.totalorder %s1716, 8
          %s1718 = scalar_select %p1717, %s1716, 8
          %s1719 = smul.u32 128, %s1718
          %s1721 = ssub.s32 1024, %s1719
          %1722 = vsyncadd %s1708, %s1721
          %p1723 = scmp.ne.s32.totalorder 0, %s1719
          %s1724 = smul.addr %s1715, 128
          %s1725 = scalar_lea.hbm %s11, %s1724
          %s1726 = smul.u32 8, %s1718
          %s1727 = sshll.u32 %s1711, 4
          %s1728 = int_to_ptr.vmem [resolvable:$true] %s1727
          %s1729 = sshll.u32 %s1726, 4
          %1733 = dma.vmem_to_hbm [thread:$0]  (%p1723), %s1728, %s1729, %s1725, %s1708, 128, 128, 8
        $region112: #{tpu_custom_call.1} parent=63 // pred_fallthru
          _
      $region64: #{tpu_custom_call.1} parent=5 // pred_fallthru
        _
      %p1734 = scmp.le.s32.totalorder 2, %s28
      // Predicated region
      $region113: #{tpu_custom_call.1} parent=5 // pred_check
        %p1735 = pneg %p1734
      $region114: #{tpu_custom_call.1} parent=5 // pred_check_branch
        %1737 = sbr.rel (%p1735) target = $region116
      $region115: #{tpu_custom_call.1} parent=5 // pred_region
        %s1738 = ssub.s32 %s28, 2
        // Predicated region
        $region117: #{tpu_custom_call.1} parent=115 // pred_check
          %p1739 = pneg %p293
        $region118: #{tpu_custom_call.1} parent=115 // pred_check_branch
          %1741 = sbr.rel (%p1739) target = $region120
        $region119: #{tpu_custom_call.1} parent=115 // pred_region
          %s1742 = sand.u32 %s278, 1
          %s1743 = scalar_lea.sflag [#allocation4], %s1742
          %s1744 = sand.u32 %s278, 1
          %s1745 = smul.addr %s1744, 64
          %s1746 = scalar_lea.vmem [#allocation20], %s1745
          %1747 = dma.done %s1743, 1024
        $region120: #{tpu_custom_call.1} parent=115 // pred_fallthru
          _
      $region116: #{tpu_custom_call.1} parent=5 // pred_fallthru
        _
    $region6: #{tpu_custom_call.1} parent=1 // loop_footer
      %s32 = sadd.s32 1, %s28
    $region7: #{tpu_custom_call.1} parent=1 // loop_footer_branch
      %27 = sbr.rel target = $region3
    $region8: #{tpu_custom_call.1} parent=1 // loop_exit
      _
    %1748 = vsyncpa [#allocation3], 1
    %s1749 = scalar_lea.sflag [#allocation3], 1
    %1750 = vsyncpa %s1749, 1
    %1751 = vsyncpa [#allocation6], 1
    %1752 = vsyncpa [#allocation9], 1
    %1753 = vsyncpa [#allocation12], 1
    %1754 = vsyncpa [#allocation15], 1
    %1755 = vsyncpa [#allocation18], 1
    %1756 = vsyncpa [#allocation4], 1
    %s1757 = scalar_lea.sflag [#allocation4], 1
    %1758 = vsyncpa %s1757, 1

</llo_original>
